<compile_context>
chip_gen: v7x
topology: tpu7x:2x2x1
jax: 0.10.0
libtpu: 0.0.40
codegen_flags: <defaults>
</compile_context>

<pallas_src>
import functools

import jax
import jax.numpy as jnp
from jax.experimental import pallas as pl
from jax.experimental.pallas import tpu as pltpu

EPS_LN = 1e-6
EPS_RMS = 1e-6
VMEM_LIMIT = 48 * 1024 * 1024          # headroom under v7x's 64 MiB physical VMEM


def _tile(size, preferred):
    """Largest safe tile: `preferred` if it divides `size`, else the full extent."""
    if size % preferred == 0:
        return preferred
    # TODO(synk): pad/mask remainder tiles instead of falling back to the full extent.
    return size


# --------------------------- tiled linear kernels ----------------------------

def _linear_kernel(x_ref, w_ref, b_ref, o_ref, acc_ref, *, silu):
    k = pl.program_id(2)

    @pl.when(k == 0)
    def _():
        acc_ref[...] = jnp.zeros(acc_ref.shape, jnp.float32)

    x = x_ref[...]
    if silu:
        xf = x.astype(jnp.float32)
        x = (xf * jax.nn.sigmoid(xf)).astype(x.dtype)
    acc_ref[...] += jnp.dot(x, w_ref[...], preferred_element_type=jnp.float32)

    @pl.when(k == pl.num_programs(2) - 1)
    def _():
        o_ref[...] = (acc_ref[...] + b_ref[...].astype(jnp.float32)).astype(o_ref.dtype)


def linear2d(x, w, b, *, silu=False, tm=256, tn=512, tk=512):
    """y = (silu(x) if silu else x) @ w + b ;  x:(M,K), w:(K,N), b:(N,)."""
    M, K = x.shape
    N = w.shape[1]
    tm, tn, tk = _tile(M, tm), _tile(N, tn), _tile(K, tk)
    return pl.pallas_call(
        functools.partial(_linear_kernel, silu=silu),
        out_shape=jax.ShapeDtypeStruct((M, N), x.dtype),
        grid=(M // tm, N // tn, K // tk),
        in_specs=[pl.BlockSpec((tm, tk), lambda i, j, k: (i, k)),
                  pl.BlockSpec((tk, tn), lambda i, j, k: (k, j)),
                  pl.BlockSpec((1, tn), lambda i, j, k: (0, j))],
        out_specs=pl.BlockSpec((tm, tn), lambda i, j, k: (i, j)),
        scratch_shapes=[pltpu.VMEM((tm, tn), jnp.float32)],
        compiler_params=pltpu.CompilerParams(
            dimension_semantics=("parallel", "parallel", "arbitrary"),
            vmem_limit_bytes=VMEM_LIMIT),
    )(x, w, b.reshape(1, N))


def linear3d(x, w, b, *, silu=False):
    B, S, D = x.shape
    return linear2d(x.reshape(B * S, D), w, b, silu=silu).reshape(B, S, -1)


def _linear_gr_kernel(x_ref, w_ref, b_ref, res_ref, gate_ref, o_ref, acc_ref):
    k = pl.program_id(3)

    @pl.when(k == 0)
    def _():
        acc_ref[...] = jnp.zeros(acc_ref.shape, jnp.float32)

    acc_ref[...] += jnp.dot(x_ref[...], w_ref[...], preferred_element_type=jnp.float32)

    @pl.when(k == pl.num_programs(3) - 1)
    def _():
        y = acc_ref[...] + b_ref[...].astype(jnp.float32)
        o_ref[...] = (res_ref[...].astype(jnp.float32) +
                      gate_ref[...].astype(jnp.float32) * y).astype(o_ref.dtype)


def linear_gated_residual(x, w, b, res, gate, *, ts=256, tn=512, tk=512):
    """res + gate[:, None, :] * (x @ w + b) ; x:(B,S,K), res:(B,S,N), gate:(B,N)."""
    B, S, K = x.shape
    N = w.shape[1]
    ts, tn, tk = _tile(S, ts), _tile(N, tn), _tile(K, tk)
    return pl.pallas_call(
        _linear_gr_kernel,
        out_shape=jax.ShapeDtypeStruct((B, S, N), res.dtype),
        grid=(B, S // ts, N // tn, K // tk),
        in_specs=[pl.BlockSpec((None, ts, tk), lambda b, s, n, k: (b, s, k)),
                  pl.BlockSpec((tk, tn), lambda b, s, n, k: (k, n)),
                  pl.BlockSpec((1, tn), lambda b, s, n, k: (0, n)),
                  pl.BlockSpec((None, ts, tn), lambda b, s, n, k: (b, s, n)),
                  pl.BlockSpec((None, 1, tn), lambda b, s, n, k: (b, 0, n))],
        out_specs=pl.BlockSpec((None, ts, tn), lambda b, s, n, k: (b, s, n)),
        scratch_shapes=[pltpu.VMEM((ts, tn), jnp.float32)],
        compiler_params=pltpu.CompilerParams(
            dimension_semantics=("parallel", "parallel", "parallel", "arbitrary"),
            vmem_limit_bytes=VMEM_LIMIT),
    )(x, w, b.reshape(1, N), res, gate.reshape(B, 1, N))


# ----------------------- LayerNorm + AdaLN modulation ------------------------

def _ln_mod_kernel(x_ref, sc_ref, sh_ref, o_ref):
    x = x_ref[...].astype(jnp.float32)                       # (ts, D)
    mu = jnp.mean(x, axis=-1, keepdims=True)
    var = jnp.mean(jnp.square(x - mu), axis=-1, keepdims=True)
    xn = (x - mu) * jax.lax.rsqrt(var + EPS_LN)
    o_ref[...] = (xn * (1.0 + sc_ref[...].astype(jnp.float32)) +
                  sh_ref[...].astype(jnp.float32)).astype(o_ref.dtype)


def ln_modulate(x, scale, shift, *, ts=256):
    B, S, D = x.shape
    ts = _tile(S, ts)
    tok = pl.BlockSpec((None, ts, D), lambda b, s: (b, s, 0))
    vec = pl.BlockSpec((None, 1, D), lambda b, s: (b, 0, 0))
    return pl.pallas_call(
        _ln_mod_kernel,
        out_shape=jax.ShapeDtypeStruct((B, S, D), x.dtype),
        grid=(B, S // ts),
        in_specs=[tok, vec, vec],
        out_specs=tok,
        compiler_params=pltpu.CompilerParams(
            dimension_semantics=("parallel", "parallel"),
            vmem_limit_bytes=VMEM_LIMIT),
    )(x, scale.reshape(B, 1, D), shift.reshape(B, 1, D))


def _ln_mod2_kernel(x_ref, sc1_ref, sh1_ref, sc2_ref, sh2_ref, o1_ref, o2_ref):
    x = x_ref[...].astype(jnp.float32)
    mu = jnp.mean(x, axis=-1, keepdims=True)
    var = jnp.mean(jnp.square(x - mu), axis=-1, keepdims=True)
    xn = (x - mu) * jax.lax.rsqrt(var + EPS_LN)
    o1_ref[...] = (xn * (1.0 + sc1_ref[...].astype(jnp.float32)) +
                   sh1_ref[...].astype(jnp.float32)).astype(o1_ref.dtype)
    o2_ref[...] = (xn * (1.0 + sc2_ref[...].astype(jnp.float32)) +
                   sh2_ref[...].astype(jnp.float32)).astype(o2_ref.dtype)


def ln_modulate2(x, scale1, shift1, scale2, shift2, *, ts=256):
    B, S, D = x.shape
    ts = _tile(S, ts)
    tok = pl.BlockSpec((None, ts, D), lambda b, s: (b, s, 0))
    vec = pl.BlockSpec((None, 1, D), lambda b, s: (b, 0, 0))
    return pl.pallas_call(
        _ln_mod2_kernel,
        out_shape=(jax.ShapeDtypeStruct((B, S, D), x.dtype),
                   jax.ShapeDtypeStruct((B, S, D), x.dtype)),
        grid=(B, S // ts),
        in_specs=[tok, vec, vec, vec, vec],
        out_specs=(tok, tok),
        compiler_params=pltpu.CompilerParams(
            dimension_semantics=("parallel", "parallel"),
            vmem_limit_bytes=VMEM_LIMIT),
    )(x,
      scale1.reshape(B, 1, D), shift1.reshape(B, 1, D),
      scale2.reshape(B, 1, D), shift2.reshape(B, 1, D))


# --------------------- flash attention (1 or 2 KV sources) -------------------

def _make_flash_kernel(two_src, n_kv1, scale):
    def kernel(*refs):
        if two_src:
            (q_ref, k1_ref, v1_ref, k2_ref, v2_ref,
             wq_ref, wk1_ref, wk2_ref, o_ref,
             qn_scr, m_scr, l_scr, acc_scr) = refs
        else:
            (q_ref, k1_ref, v1_ref, wq_ref, wk1_ref, o_ref,
             qn_scr, m_scr, l_scr, acc_scr) = refs

        kv = pl.program_id(2)

        @pl.when(kv == 0)
        def _():
            # fused per-head RMSNorm of Q (+ pre-applied 1/sqrt(dh) scale)
            q = q_ref[...].astype(jnp.float32)
            qn = q * jax.lax.rsqrt(jnp.mean(q * q, axis=-1, keepdims=True) + EPS_RMS)
            qn_scr[...] = qn * wq_ref[...].astype(jnp.float32) * scale
            m_scr[...] = jnp.full(m_scr.shape, -jnp.inf, jnp.float32)
            l_scr[...] = jnp.zeros(l_scr.shape, jnp.float32)
            acc_scr[...] = jnp.zeros(acc_scr.shape, jnp.float32)

        def step(k_ref, v_ref, wk_ref):
            # fused per-head RMSNorm of the K tile
            k = k_ref[...].astype(jnp.float32)
            kn = k * jax.lax.rsqrt(jnp.mean(k * k, axis=-1, keepdims=True) + EPS_RMS)
            kn = kn * wk_ref[...].astype(jnp.float32)
            s = jax.lax.dot_general(qn_scr[...], kn, (((1,), (1,)), ((), ())),
                                    preferred_element_type=jnp.float32)
            m_prev = m_scr[...]
            m_new = jnp.maximum(m_prev, jnp.max(s, axis=-1, keepdims=True))
            alpha = jnp.exp(m_prev - m_new)
            p = jnp.exp(s - m_new)
            l_scr[...] = alpha * l_scr[...] + jnp.sum(p, axis=-1, keepdims=True)
            acc_scr[...] = alpha * acc_scr[...] + jnp.dot(
                p.astype(v_ref.dtype), v_ref[...], preferred_element_type=jnp.float32)
            m_scr[...] = m_new

        if two_src:
            @pl.when(kv < n_kv1)
            def _():
                step(k1_ref, v1_ref, wk1_ref)

            @pl.when(kv >= n_kv1)
            def _():
                step(k2_ref, v2_ref, wk2_ref)
        else:
            step(k1_ref, v1_ref, wk1_ref)

        @pl.when(kv == pl.num_programs(2) - 1)
        def _():
            o_ref[...] = (acc_scr[...] *
                          pl.reciprocal(l_scr[...], approx=True)).astype(o_ref.dtype)

    return kernel


def flash_attention(q, k1, v1, wq, wk1, *, scale,
                    k2=None, v2=None, wk2=None, block_k=512):
    """Online-softmax attention of q over [k1;k2] / [v1;v2] without concatenation.

    q,k*,v*: (B, H, S*, Dh);  wq/wk*: (Dh,) per-head RMSNorm weights (fused in-kernel).
    """
    # TODO(synk): add query-block tiling for very long sequences (q held whole per head).
    B, H, Sq, Dh = q.shape
    Sk1 = k1.shape[2]
    two_src = k2 is not None
    bk1 = _tile(Sk1, block_k)
    n_kv1 = Sk1 // bk1
    n_kv = n_kv1
    if two_src:
        Sk2 = k2.shape[2]
        bk2 = _tile(Sk2, block_k)
        n_kv += Sk2 // bk2

    q_spec = pl.BlockSpec((None, None, Sq, Dh), lambda b, h, kv: (b, h, 0, 0))
    k1_spec = pl.BlockSpec((None, None, bk1, Dh),
                           lambda b, h, kv: (b, h, jnp.minimum(kv, n_kv1 - 1), 0))
    w_spec = pl.BlockSpec((1, Dh), lambda b, h, kv: (0, 0))
    o_spec = pl.BlockSpec((None, None, Sq, Dh), lambda b, h, kv: (b, h, 0, 0))

    in_arrays = [q, k1, v1]
    in_specs = [q_spec, k1_spec, k1_spec]
    if two_src:
        k2_spec = pl.BlockSpec((None, None, bk2, Dh),
                               lambda b, h, kv: (b, h, jnp.maximum(kv - n_kv1, 0), 0))
        in_arrays += [k2, v2]
        in_specs += [k2_spec, k2_spec]
    in_arrays += [wq.reshape(1, Dh), wk1.reshape(1, Dh)]
    in_specs += [w_spec, w_spec]
    if two_src:
        in_arrays += [wk2.reshape(1, Dh)]
        in_specs += [w_spec]

    return pl.pallas_call(
        _make_flash_kernel(two_src, n_kv1, scale),
        out_shape=jax.ShapeDtypeStruct((B, H, Sq, Dh), q.dtype),
        grid=(B, H, n_kv),
        in_specs=in_specs,
        out_specs=o_spec,
        scratch_shapes=[pltpu.VMEM((Sq, Dh), jnp.float32),   # normalized/scaled q
                        pltpu.VMEM((Sq, 1), jnp.float32),    # running max
                        pltpu.VMEM((Sq, 1), jnp.float32),    # running denom
                        pltpu.VMEM((Sq, Dh), jnp.float32)],  # running accumulator
        compiler_params=pltpu.CompilerParams(
            dimension_semantics=("parallel", "parallel", "arbitrary"),
            vmem_limit_bytes=VMEM_LIMIT),
    )(*in_arrays)


# ------------------------------ parameter setup -------------------------------

def init_params(key, dim, heads, head_dim):
    inner = heads * head_dim
    assert inner == dim, "SD3 MMDiT assumes heads * head_dim == dim"
    keys = iter(jax.random.split(key, 64))

    def w(shape, scale=0.05):
        return scale * jax.random.normal(next(keys), shape, jnp.float32)

    return {
        # fused AdaLN conditioning: [SD3AdaLNZero (9D) | AdaLNZero context (6D)]
        "adaln_w": w((dim, 15 * dim)), "adaln_b": w((15 * dim,)),
        # joint attention (attn) -- fused QKV weights [Wq | Wk | Wv]
        "qkv_w": w((dim, 3 * inner)), "qkv_b": w((3 * inner,)),
        "added_qkv_w": w((dim, 3 * inner)), "added_qkv_b": w((3 * inner,)),
        "norm_q": 1.0 + w((head_dim,)), "norm_k": 1.0 + w((head_dim,)),
        "norm_added_q": 1.0 + w((head_dim,)), "norm_added_k": 1.0 + w((head_dim,)),
        "to_out_w": w((inner, dim)), "to_out_b": w((dim,)),
        "to_add_out_w": w((inner, dim)), "to_add_out_b": w((dim,)),
        # self attention (attn2)
        "attn2_qkv_w": w((dim, 3 * inner)), "attn2_qkv_b": w((3 * inner,)),
        "attn2_norm_q": 1.0 + w((head_dim,)), "attn2_norm_k": 1.0 + w((head_dim,)),
        "attn2_out_w": w((inner, dim)), "attn2_out_b": w((dim,)),
        # feed-forwards
        # TODO(synk): the reference declares nn.Linear(4*dim, dim) for self.ff, which is
        # shape-incompatible with the (..., dim) tensor it receives; implemented as
        # (dim -> dim) so the forward is runnable.
        "ff_w": w((dim, dim)), "ff_b": w((dim,)),
        "ffc_w": w((dim, dim)), "ffc_b": w((dim,)),
    }


# ------------------------------- MMDiT forward --------------------------------

def _qkv_heads(qkv, heads, head_dim):
    B, S, _ = qkv.shape
    qkv = qkv.reshape(B, S, 3, heads, head_dim).transpose(2, 0, 3, 1, 4)
    return qkv[0], qkv[1], qkv[2]                           # each (B, H, S, Dh)


def _merge_heads(x):
    B, H, S, Dh = x.shape
    return x.transpose(0, 2, 1, 3).reshape(B, S, H * Dh)


def mmdit_forward(params, hidden_states, encoder_hidden_states, y, *, heads, head_dim):
    B, S, D = hidden_states.shape
    scale = head_dim ** -0.5

    # ---- conditioning: SiLU(y) -> one fused (dim -> 15*dim) linear ----
    emb = linear2d(y, params["adaln_w"], params["adaln_b"], silu=True)
    emb9, emb6 = emb[:, :9 * D], emb[:, 9 * D:]
    (shift_msa, scale_msa, gate_msa, shift_mlp, scale_mlp, gate_mlp,
     shift_msa2, scale_msa2, gate_msa2) = [emb9[:, i * D:(i + 1) * D] for i in range(9)]
    (c_shift_msa, c_scale_msa, c_gate_msa, c_shift_mlp, c_scale_mlp,
     c_gate_mlp) = [emb6[:, i * D:(i + 1) * D] for i in range(6)]

    # ---- norm1 / norm1_context (LayerNorm once, AdaLN modulation) ----
    norm_hidden_states, norm_hidden_states2 = ln_modulate2(
        hidden_states, scale_msa, shift_msa, scale_msa2, shift_msa2)
    norm_encoder_hidden_states = ln_modulate(encoder_hidden_states, c_scale_msa, c_shift_msa)

    # ---- joint attention (attn): fused QKV, two-source flash attention ----
    q, k, v = _qkv_heads(
        linear3d(norm_hidden_states, params["qkv_w"], params["qkv_b"]), heads, head_dim)
    eq, ek, ev = _qkv_heads(
        linear3d(norm_encoder_hidden_states, params["added_qkv_w"], params["added_qkv_b"]),
        heads, head_dim)

    attn_sample = flash_attention(q, k, v, params["norm_q"], params["norm_k"], scale=scale,
                                  k2=ek, v2=ev, wk2=params["norm_added_k"])
    attn_ctx = flash_attention(eq, k, v, params["norm_added_q"], params["norm_k"], scale=scale,
                               k2=ek, v2=ev, wk2=params["norm_added_k"])

    # output projections fused with the gated residual adds
    hidden_states = linear_gated_residual(
        _merge_heads(attn_sample), params["to_out_w"], params["to_out_b"],
        hidden_states, gate_msa)
    encoder_hidden_states = linear_gated_residual(
        _merge_heads(attn_ctx), params["to_add_out_w"], params["to_add_out_b"],
        encoder_hidden_states, c_gate_msa)

    # ---- attn2: plain self-attention on the second modulated stream ----
    q2, k2, v2 = _qkv_heads(
        linear3d(norm_hidden_states2, params["attn2_qkv_w"], params["attn2_qkv_b"]),
        heads, head_dim)
    attn2 = flash_attention(q2, k2, v2, params["attn2_norm_q"], params["attn2_norm_k"],
                            scale=scale)
    hidden_states = linear_gated_residual(
        _merge_heads(attn2), params["attn2_out_w"], params["attn2_out_b"],
        hidden_states, gate_msa2)

    # ---- sample MLP branch ----
    norm_h = ln_modulate(hidden_states, scale_mlp, shift_mlp)
    hidden_states = linear_gated_residual(
        norm_h, params["ff_w"], params["ff_b"], hidden_states, gate_mlp)

    # ---- context MLP branch ----
    norm_e = ln_modulate(encoder_hidden_states, c_scale_mlp, c_shift_mlp)
    encoder_hidden_states = linear_gated_residual(
        norm_e, params["ffc_w"], params["ffc_b"], encoder_hidden_states, c_gate_mlp)

    return encoder_hidden_states, hidden_states


# -------------------------- pure-JAX reference check --------------------------

def reference_forward(params, hidden_states, encoder_hidden_states, y, *, heads, head_dim):
    D = hidden_states.shape[-1]
    S = hidden_states.shape[1]
    scale = head_dim ** -0.5

    silu = lambda x: x * jax.nn.sigmoid(x)

    def ln(x):
        mu = jnp.mean(x, -1, keepdims=True)
        var = jnp.mean(jnp.square(x - mu), -1, keepdims=True)
        return (x - mu) * jax.lax.rsqrt(var + EPS_LN)

    def rms(x, w):
        return x * jax.lax.rsqrt(jnp.mean(x * x, -1, keepdims=True) + EPS_RMS) * w

    def split_h(x):
        b, s, _ = x.shape
        return x.reshape(b, s, heads, head_dim).transpose(0, 2, 1, 3)

    def merge_h(x):
        b, h, s, d = x.shape
        return x.transpose(0, 2, 1, 3).reshape(b, s, h * d)

    def attn(q, k, v):
        s_ = jnp.einsum('bhqd,bhkd->bhqk', q, k) * scale
        return jnp.einsum('bhqk,bhkd->bhqd', jax.nn.softmax(s_, axis=-1), v)

    emb = silu(y) @ params["adaln_w"] + params["adaln_b"]
    emb9, emb6 = emb[:, :9 * D], emb[:, 9 * D:]
    (shift_msa, scale_msa, gate_msa, shift_mlp, scale_mlp, gate_mlp,
     shift_msa2, scale_msa2, gate_msa2) = [emb9[:, i * D:(i + 1) * D] for i in range(9)]
    (c_shift_msa, c_scale_msa, c_gate_msa, c_shift_mlp, c_scale_mlp,
     c_gate_mlp) = [emb6[:, i * D:(i + 1) * D] for i in range(6)]

    nh = ln(hidden_states)
    norm_h = nh * (1 + scale_msa[:, None]) + shift_msa[:, None]
    norm_h2 = nh * (1 + scale_msa2[:, None]) + shift_msa2[:, None]
    norm_e = ln(encoder_hidden_states) * (1 + c_scale_msa[:, None]) + c_shift_msa[:, None]

    q, k, v = map(split_h, jnp.split(norm_h @ params["qkv_w"] + params["qkv_b"], 3, -1))
    eq, ek, ev = map(split_h, jnp.split(norm_e @ params["added_qkv_w"] + params["added_qkv_b"], 3, -1))
    q, k = rms(q, params["norm_q"]), rms(k, params["norm_k"])
    eq, ek = rms(eq, params["norm_added_q"]), rms(ek, params["norm_added_k"])
    joint = merge_h(attn(jnp.concatenate([q, eq], 2), jnp.concatenate([k, ek], 2),
                         jnp.concatenate([v, ev], 2)))
    attn_out = joint[:, :S] @ params["to_out_w"] + params["to_out_b"]
    ctx_attn_out = joint[:, S:] @ params["to_add_out_w"] + params["to_add_out_b"]
    h = hidden_states + gate_msa[:, None] * attn_out

    q2, k2, v2 = map(split_h, jnp.split(norm_h2 @ params["attn2_qkv_w"] + params["attn2_qkv_b"], 3, -1))
    q2, k2 = rms(q2, params["attn2_norm_q"]), rms(k2, params["attn2_norm_k"])
    attn2_out = merge_h(attn(q2, k2, v2)) @ params["attn2_out_w"] + params["attn2_out_b"]
    h = h + gate_msa2[:, None] * attn2_out

    nh = ln(h) * (1 + scale_mlp[:, None]) + shift_mlp[:, None]
    h = h + gate_mlp[:, None] * (nh @ params["ff_w"] + params["ff_b"])

    e = encoder_hidden_states + c_gate_msa[:, None] * ctx_attn_out
    ne = ln(e) * (1 + c_scale_mlp[:, None]) + c_shift_mlp[:, None]
    e = e + c_gate_mlp[:, None] * (ne @ params["ffc_w"] + params["ffc_b"])
    return e, h


# ----------------------------------- main --------------------------------------

if __name__ == "__main__":
    dim, heads, head_dim = 32, 2, 16
    B, S, Sc = 2, 8, 8

    root = jax.random.PRNGKey(0)
    k_p, k_h, k_e, k_y = jax.random.split(root, 4)

    params = init_params(k_p, dim, heads, head_dim)
    hidden_states = jax.random.normal(k_h, (B, S, dim), jnp.float32)
    encoder_hidden_states = jax.random.normal(k_e, (B, Sc, dim), jnp.float32)
    y = jax.random.normal(k_y, (B, dim), jnp.float32)

    fwd = jax.jit(functools.partial(mmdit_forward, heads=heads, head_dim=head_dim))
    enc_out, hid_out = fwd(params, hidden_states, encoder_hidden_states, y)
    jax.block_until_ready((enc_out, hid_out))

    assert enc_out.shape == (B, Sc, dim) and hid_out.shape == (B, S, dim)
    assert jnp.all(jnp.isfinite(enc_out)) and jnp.all(jnp.isfinite(hid_out))

    enc_ref, hid_ref = reference_forward(params, hidden_states, encoder_hidden_states, y,
                                         heads=heads, head_dim=head_dim)
    assert jnp.allclose(enc_out, enc_ref, rtol=5e-2, atol=5e-2)
    assert jnp.allclose(hid_out, hid_ref, rtol=5e-2, atol=5e-2)

    print("KERNEL_OK")
</pallas_src>

<mosaic_0001>
module attributes {stable_mosaic.version = 11 : i64} {
  func.func @_linear_kernel(%arg0: i32, %arg1: i32, %arg2: i32, %arg3: memref<2x32xf32, #tpu.memory_space<vmem>>, %arg4: memref<32x480xf32, #tpu.memory_space<vmem>>, %arg5: memref<1x480xf32, #tpu.memory_space<vmem>>, %arg6: memref<2x480xf32, #tpu.memory_space<vmem>>, %arg7: memref<2x480xf32, #tpu.memory_space<vmem>>) attributes {dimension_semantics = [#tpu.dimension_semantics<parallel>, #tpu.dimension_semantics<parallel>, #tpu.dimension_semantics<arbitrary>], iteration_bounds = array<i64: 1, 1, 1>, scalar_prefetch = 0 : i64, scratch_operands = 1 : i64, tpu.core_type = #tpu.core_type<tc>, window_params = [{transform_indices = @transform_0, window_bounds = array<i64: 2, 32>}, {transform_indices = @transform_1, window_bounds = array<i64: 32, 480>}, {transform_indices = @transform_2, window_bounds = array<i64: 1, 480>}, {transform_indices = @transform_3, window_bounds = array<i64: 2, 480>}]} {
    %c0_i32 = arith.constant 0 : i32
    %0 = arith.cmpi eq, %arg2, %c0_i32 : i32
    %1 = arith.extui %0 : i1 to i32
    %c0_i32_0 = arith.constant 0 : i32
    %2 = arith.cmpi ne, %1, %c0_i32_0 : i32
    scf.if %2 {
      %cst_11 = arith.constant 0.000000e+00 : f32
      %18 = vector.broadcast %cst_11 : f32 to vector<2x480xf32>
      %c0_12 = arith.constant 0 : index
      %c0_13 = arith.constant 0 : index
      %19 = vector.load %arg7[%c0_12, %c0_13] : memref<2x480xf32, #tpu.memory_space<vmem>>, vector<2x480xf32>
      tpu.vector_store %arg7[%c0_12, %c0_13], %18 {strides = array<i32>} : memref<2x480xf32, #tpu.memory_space<vmem>>, vector<2x480xf32>,
    } else {
    }
    %c0 = arith.constant 0 : index
    %c0_1 = arith.constant 0 : index
    %3 = vector.load %arg3[%c0, %c0_1] : memref<2x32xf32, #tpu.memory_space<vmem>>, vector<2x32xf32>
    %4 = arith.negf %3 : vector<2x32xf32>
    %5 = math.exp %4 : vector<2x32xf32>
    %cst = arith.constant 1.000000e+00 : f32
    %6 = vector.broadcast %cst : f32 to vector<2x32xf32>
    %7 = arith.addf %6, %5 : vector<2x32xf32>
    %8 = arith.divf %6, %7 : vector<2x32xf32>
    %9 = arith.mulf %3, %8 : vector<2x32xf32>
    %c0_2 = arith.constant 0 : index
    %c0_3 = arith.constant 0 : index
    %10 = vector.load %arg7[%c0_2, %c0_3] : memref<2x480xf32, #tpu.memory_space<vmem>>, vector<2x480xf32>
    %c0_4 = arith.constant 0 : index
    %c0_5 = arith.constant 0 : index
    %11 = vector.load %arg4[%c0_4, %c0_5] : memref<32x480xf32, #tpu.memory_space<vmem>>, vector<32x480xf32>
    %cst_6 = arith.constant dense<0.000000e+00> : vector<2x480xf32>
    %12 = tpu.matmul %9, %11, %cst_6 {dimension_numbers = #tpu.dot_dimension_numbers<[1], [0], [0], [1], [0, 0, 1, 1], [], []>} : vector<2x32xf32>, vector<32x480xf32>, vector<2x480xf32> -> vector<2x480xf32>
    %13 = arith.addf %10, %12 : vector<2x480xf32>
    %c0_7 = arith.constant 0 : index
    %c0_8 = arith.constant 0 : index
    %14 = vector.load %arg7[%c0_7, %c0_8] : memref<2x480xf32, #tpu.memory_space<vmem>>, vector<2x480xf32>
    tpu.vector_store %arg7[%c0_7, %c0_8], %13 {strides = array<i32>} : memref<2x480xf32, #tpu.memory_space<vmem>>, vector<2x480xf32>,
    %c0_i32_9 = arith.constant 0 : i32
    %15 = arith.cmpi eq, %arg2, %c0_i32_9 : i32
    %16 = arith.extui %15 : i1 to i32
    %c0_i32_10 = arith.constant 0 : i32
    %17 = arith.cmpi ne, %16, %c0_i32_10 : i32
    scf.if %17 {
      %c0_11 = arith.constant 0 : index
      %c0_12 = arith.constant 0 : index
      %18 = vector.load %arg7[%c0_11, %c0_12] : memref<2x480xf32, #tpu.memory_space<vmem>>, vector<2x480xf32>
      %c0_13 = arith.constant 0 : index
      %c0_14 = arith.constant 0 : index
      %19 = vector.load %arg5[%c0_13, %c0_14] : memref<1x480xf32, #tpu.memory_space<vmem>>, vector<1x480xf32>
      %20 = vector.broadcast %19 : vector<1x480xf32> to vector<2x480xf32>
      %21 = arith.addf %18, %20 : vector<2x480xf32>
      %c0_15 = arith.constant 0 : index
      %c0_16 = arith.constant 0 : index
      %22 = vector.load %arg6[%c0_15, %c0_16] : memref<2x480xf32, #tpu.memory_space<vmem>>, vector<2x480xf32>
      tpu.vector_store %arg6[%c0_15, %c0_16], %21 {strides = array<i32>} : memref<2x480xf32, #tpu.memory_space<vmem>>, vector<2x480xf32>,
    } else {
    }
    return
  }
  func.func @transform_0(%arg0: i32, %arg1: i32, %arg2: i32) -> (i32, i32) {
    %c0_i32 = arith.constant 0 : i32
    return %arg0, %arg2 : i32, i32
  }
  func.func @transform_1(%arg0: i32, %arg1: i32, %arg2: i32) -> (i32, i32) {
    %c0_i32 = arith.constant 0 : i32
    return %arg2, %arg1 : i32, i32
  }
  func.func @transform_2(%arg0: i32, %arg1: i32, %arg2: i32) -> (i32, i32) {
    %c0_i32 = arith.constant 0 : i32
    %c0_i32_0 = arith.constant 0 : i32
    return %c0_i32, %arg1 : i32, i32
  }
  func.func @transform_3(%arg0: i32, %arg1: i32, %arg2: i32) -> (i32, i32) {
    %c0_i32 = arith.constant 0 : i32
    return %arg0, %arg1 : i32, i32
  }
}

module attributes {stable_mosaic.version = 11 : i64} {
  func.func @_ln_mod_kernel(%arg0: i32, %arg1: i32, %arg2: memref<1x8x32xf32, #tpu.memory_space<vmem>>, %arg3: memref<1x1x32xf32, #tpu.memory_space<vmem>>, %arg4: memref<1x1x32xf32, #tpu.memory_space<vmem>>, %arg5: memref<1x8x32xf32, #tpu.memory_space<vmem>>) attributes {dimension_semantics = [#tpu.dimension_semantics<parallel>, #tpu.dimension_semantics<parallel>], iteration_bounds = array<i64: 2, 1>, scalar_prefetch = 0 : i64, scratch_operands = 0 : i64, tpu.core_type = #tpu.core_type<tc>, window_params = [{transform_indices = @transform_0, window_bounds = array<i64: 1, 8, 32>}, {transform_indices = @transform_1, window_bounds = array<i64: 1, 1, 32>}, {transform_indices = @transform_2, window_bounds = array<i64: 1, 1, 32>}, {transform_indices = @transform_3, window_bounds = array<i64: 1, 8, 32>}]} {
    %c0 = arith.constant 0 : index
    %c0_0 = arith.constant 0 : index
    %c0_1 = arith.constant 0 : index
    %0 = vector.load %arg2[%c0, %c0_0, %c0_1] : memref<1x8x32xf32, #tpu.memory_space<vmem>>, vector<1x8x32xf32>
    %1 = vector.shape_cast %0 : vector<1x8x32xf32> to vector<8x32xf32>
    %cst = arith.constant dense<0.000000e+00> : vector<8xf32>
    %2 = vector.multi_reduction <add>, %1, %cst [1] : vector<8x32xf32> to vector<8xf32>
    %3 = vector.shape_cast %2 : vector<8xf32> to vector<8x1xf32>
    %cst_2 = arith.constant 3.200000e+01 : f32
    %4 = vector.broadcast %cst_2 : f32 to vector<8x1xf32>
    %5 = arith.divf %3, %4 : vector<8x1xf32>
    %6 = vector.broadcast %5 : vector<8x1xf32> to vector<8x32xf32>
    %7 = arith.subf %1, %6 : vector<8x32xf32>
    %8 = arith.mulf %7, %7 : vector<8x32xf32>
    %cst_3 = arith.constant dense<0.000000e+00> : vector<8xf32>
    %9 = vector.multi_reduction <add>, %8, %cst_3 [1] : vector<8x32xf32> to vector<8xf32>
    %10 = vector.shape_cast %9 : vector<8xf32> to vector<8x1xf32>
    %cst_4 = arith.constant 3.200000e+01 : f32
    %11 = vector.broadcast %cst_4 : f32 to vector<8x1xf32>
    %12 = arith.divf %10, %11 : vector<8x1xf32>
    %13 = vector.broadcast %5 : vector<8x1xf32> to vector<8x32xf32>
    %14 = arith.subf %1, %13 : vector<8x32xf32>
    %cst_5 = arith.constant 9.99999997E-7 : f32
    %15 = vector.broadcast %cst_5 : f32 to vector<8x1xf32>
    %16 = arith.addf %12, %15 : vector<8x1xf32>
    %17 = math.rsqrt %16 : vector<8x1xf32>
    %18 = vector.broadcast %17 : vector<8x1xf32> to vector<8x32xf32>
    %19 = arith.mulf %14, %18 : vector<8x32xf32>
    %c0_6 = arith.constant 0 : index
    %c0_7 = arith.constant 0 : index
    %c0_8 = arith.constant 0 : index
    %20 = vector.load %arg3[%c0_6, %c0_7, %c0_8] : memref<1x1x32xf32, #tpu.memory_space<vmem>>, vector<1x1x32xf32>
    %21 = vector.shape_cast %20 : vector<1x1x32xf32> to vector<1x32xf32>
    %cst_9 = arith.constant 1.000000e+00 : f32
    %22 = vector.broadcast %cst_9 : f32 to vector<1x32xf32>
    %23 = arith.addf %22, %21 : vector<1x32xf32>
    %24 = vector.broadcast %23 : vector<1x32xf32> to vector<8x32xf32>
    %25 = arith.mulf %19, %24 : vector<8x32xf32>
    %c0_10 = arith.constant 0 : index
    %c0_11 = arith.constant 0 : index
    %c0_12 = arith.constant 0 : index
    %26 = vector.load %arg4[%c0_10, %c0_11, %c0_12] : memref<1x1x32xf32, #tpu.memory_space<vmem>>, vector<1x1x32xf32>
    %27 = vector.shape_cast %26 : vector<1x1x32xf32> to vector<1x32xf32>
    %28 = vector.broadcast %27 : vector<1x32xf32> to vector<8x32xf32>
    %29 = arith.addf %25, %28 : vector<8x32xf32>
    %c0_13 = arith.constant 0 : index
    %c0_14 = arith.constant 0 : index
    %c0_15 = arith.constant 0 : index
    %30 = vector.load %arg5[%c0_13, %c0_14, %c0_15] : memref<1x8x32xf32, #tpu.memory_space<vmem>>, vector<1x8x32xf32>
    %31 = vector.shape_cast %30 : vector<1x8x32xf32> to vector<8x32xf32>
    %32 = vector.shape_cast %29 : vector<8x32xf32> to vector<1x8x32xf32>
    tpu.vector_store %arg5[%c0_13, %c0_14, %c0_15], %32 {strides = array<i32>} : memref<1x8x32xf32, #tpu.memory_space<vmem>>, vector<1x8x32xf32>,
    return
  }
  func.func @transform_0(%arg0: i32, %arg1: i32) -> (i32, i32, i32) {
    %c0_i32 = arith.constant 0 : i32
    %c0_i32_0 = arith.constant 0 : i32
    return %arg0, %arg1, %c0_i32 : i32, i32, i32
  }
  func.func @transform_1(%arg0: i32, %arg1: i32) -> (i32, i32, i32) {
    %c0_i32 = arith.constant 0 : i32
    %c0_i32_0 = arith.constant 0 : i32
    %c0_i32_1 = arith.constant 0 : i32
    return %arg0, %c0_i32, %c0_i32_0 : i32, i32, i32
  }
  func.func @transform_2(%arg0: i32, %arg1: i32) -> (i32, i32, i32) {
    %c0_i32 = arith.constant 0 : i32
    %c0_i32_0 = arith.constant 0 : i32
    %c0_i32_1 = arith.constant 0 : i32
    return %arg0, %c0_i32, %c0_i32_0 : i32, i32, i32
  }
  func.func @transform_3(%arg0: i32, %arg1: i32) -> (i32, i32, i32) {
    %c0_i32 = arith.constant 0 : i32
    %c0_i32_0 = arith.constant 0 : i32
    return %arg0, %arg1, %c0_i32 : i32, i32, i32
  }
}

module attributes {stable_mosaic.version = 11 : i64} {
  func.func @_linear_kernel(%arg0: i32, %arg1: i32, %arg2: i32, %arg3: memref<16x32xf32, #tpu.memory_space<vmem>>, %arg4: memref<32x96xf32, #tpu.memory_space<vmem>>, %arg5: memref<1x96xf32, #tpu.memory_space<vmem>>, %arg6: memref<16x96xf32, #tpu.memory_space<vmem>>, %arg7: memref<16x96xf32, #tpu.memory_space<vmem>>) attributes {dimension_semantics = [#tpu.dimension_semantics<parallel>, #tpu.dimension_semantics<parallel>, #tpu.dimension_semantics<arbitrary>], iteration_bounds = array<i64: 1, 1, 1>, scalar_prefetch = 0 : i64, scratch_operands = 1 : i64, tpu.core_type = #tpu.core_type<tc>, window_params = [{transform_indices = @transform_0, window_bounds = array<i64: 16, 32>}, {transform_indices = @transform_1, window_bounds = array<i64: 32, 96>}, {transform_indices = @transform_2, window_bounds = array<i64: 1, 96>}, {transform_indices = @transform_3, window_bounds = array<i64: 16, 96>}]} {
    %c0_i32 = arith.constant 0 : i32
    %0 = arith.cmpi eq, %arg2, %c0_i32 : i32
    %1 = arith.extui %0 : i1 to i32
    %c0_i32_0 = arith.constant 0 : i32
    %2 = arith.cmpi ne, %1, %c0_i32_0 : i32
    scf.if %2 {
      %cst_10 = arith.constant 0.000000e+00 : f32
      %12 = vector.broadcast %cst_10 : f32 to vector<16x96xf32>
      %c0_11 = arith.constant 0 : index
      %c0_12 = arith.constant 0 : index
      %13 = vector.load %arg7[%c0_11, %c0_12] : memref<16x96xf32, #tpu.memory_space<vmem>>, vector<16x96xf32>
      tpu.vector_store %arg7[%c0_11, %c0_12], %12 {strides = array<i32>} : memref<16x96xf32, #tpu.memory_space<vmem>>, vector<16x96xf32>,
    } else {
    }
    %c0 = arith.constant 0 : index
    %c0_1 = arith.constant 0 : index
    %3 = vector.load %arg3[%c0, %c0_1] : memref<16x32xf32, #tpu.memory_space<vmem>>, vector<16x32xf32>
    %c0_2 = arith.constant 0 : index
    %c0_3 = arith.constant 0 : index
    %4 = vector.load %arg7[%c0_2, %c0_3] : memref<16x96xf32, #tpu.memory_space<vmem>>, vector<16x96xf32>
    %c0_4 = arith.constant 0 : index
    %c0_5 = arith.constant 0 : index
    %5 = vector.load %arg4[%c0_4, %c0_5] : memref<32x96xf32, #tpu.memory_space<vmem>>, vector<32x96xf32>
    %cst = arith.constant dense<0.000000e+00> : vector<16x96xf32>
    %6 = tpu.matmul %3, %5, %cst {dimension_numbers = #tpu.dot_dimension_numbers<[1], [0], [0], [1], [0, 0, 1, 1], [], []>} : vector<16x32xf32>, vector<32x96xf32>, vector<16x96xf32> -> vector<16x96xf32>
    %7 = arith.addf %4, %6 : vector<16x96xf32>
    %c0_6 = arith.constant 0 : index
    %c0_7 = arith.constant 0 : index
    %8 = vector.load %arg7[%c0_6, %c0_7] : memref<16x96xf32, #tpu.memory_space<vmem>>, vector<16x96xf32>
    tpu.vector_store %arg7[%c0_6, %c0_7], %7 {strides = array<i32>} : memref<16x96xf32, #tpu.memory_space<vmem>>, vector<16x96xf32>,
    %c0_i32_8 = arith.constant 0 : i32
    %9 = arith.cmpi eq, %arg2, %c0_i32_8 : i32
    %10 = arith.extui %9 : i1 to i32
    %c0_i32_9 = arith.constant 0 : i32
    %11 = arith.cmpi ne, %10, %c0_i32_9 : i32
    scf.if %11 {
      %c0_10 = arith.constant 0 : index
      %c0_11 = arith.constant 0 : index
      %12 = vector.load %arg7[%c0_10, %c0_11] : memref<16x96xf32, #tpu.memory_space<vmem>>, vector<16x96xf32>
      %c0_12 = arith.constant 0 : index
      %c0_13 = arith.constant 0 : index
      %13 = vector.load %arg5[%c0_12, %c0_13] : memref<1x96xf32, #tpu.memory_space<vmem>>, vector<1x96xf32>
      %14 = vector.broadcast %13 : vector<1x96xf32> to vector<16x96xf32>
      %15 = arith.addf %12, %14 : vector<16x96xf32>
      %c0_14 = arith.constant 0 : index
      %c0_15 = arith.constant 0 : index
      %16 = vector.load %arg6[%c0_14, %c0_15] : memref<16x96xf32, #tpu.memory_space<vmem>>, vector<16x96xf32>
      tpu.vector_store %arg6[%c0_14, %c0_15], %15 {strides = array<i32>} : memref<16x96xf32, #tpu.memory_space<vmem>>, vector<16x96xf32>,
    } else {
    }
    return
  }
  func.func @transform_0(%arg0: i32, %arg1: i32, %arg2: i32) -> (i32, i32) {
    %c0_i32 = arith.constant 0 : i32
    return %arg0, %arg2 : i32, i32
  }
  func.func @transform_1(%arg0: i32, %arg1: i32, %arg2: i32) -> (i32, i32) {
    %c0_i32 = arith.constant 0 : i32
    return %arg2, %arg1 : i32, i32
  }
  func.func @transform_2(%arg0: i32, %arg1: i32, %arg2: i32) -> (i32, i32) {
    %c0_i32 = arith.constant 0 : i32
    %c0_i32_0 = arith.constant 0 : i32
    return %c0_i32, %arg1 : i32, i32
  }
  func.func @transform_3(%arg0: i32, %arg1: i32, %arg2: i32) -> (i32, i32) {
    %c0_i32 = arith.constant 0 : i32
    return %arg0, %arg1 : i32, i32
  }
}

module attributes {stable_mosaic.version = 11 : i64} {
  func.func @_ln_mod2_kernel(%arg0: i32, %arg1: i32, %arg2: memref<1x8x32xf32, #tpu.memory_space<vmem>>, %arg3: memref<1x1x32xf32, #tpu.memory_space<vmem>>, %arg4: memref<1x1x32xf32, #tpu.memory_space<vmem>>, %arg5: memref<1x1x32xf32, #tpu.memory_space<vmem>>, %arg6: memref<1x1x32xf32, #tpu.memory_space<vmem>>, %arg7: memref<1x8x32xf32, #tpu.memory_space<vmem>>, %arg8: memref<1x8x32xf32, #tpu.memory_space<vmem>>) attributes {dimension_semantics = [#tpu.dimension_semantics<parallel>, #tpu.dimension_semantics<parallel>], iteration_bounds = array<i64: 2, 1>, scalar_prefetch = 0 : i64, scratch_operands = 0 : i64, tpu.core_type = #tpu.core_type<tc>, window_params = [{transform_indices = @transform_0, window_bounds = array<i64: 1, 8, 32>}, {transform_indices = @transform_1, window_bounds = array<i64: 1, 1, 32>}, {transform_indices = @transform_2, window_bounds = array<i64: 1, 1, 32>}, {transform_indices = @transform_3, window_bounds = array<i64: 1, 1, 32>}, {transform_indices = @transform_4, window_bounds = array<i64: 1, 1, 32>}, {transform_indices = @transform_5, window_bounds = array<i64: 1, 8, 32>}, {transform_indices = @transform_6, window_bounds = array<i64: 1, 8, 32>}]} {
    %c0 = arith.constant 0 : index
    %c0_0 = arith.constant 0 : index
    %c0_1 = arith.constant 0 : index
    %0 = vector.load %arg2[%c0, %c0_0, %c0_1] : memref<1x8x32xf32, #tpu.memory_space<vmem>>, vector<1x8x32xf32>
    %1 = vector.shape_cast %0 : vector<1x8x32xf32> to vector<8x32xf32>
    %cst = arith.constant dense<0.000000e+00> : vector<8xf32>
    %2 = vector.multi_reduction <add>, %1, %cst [1] : vector<8x32xf32> to vector<8xf32>
    %3 = vector.shape_cast %2 : vector<8xf32> to vector<8x1xf32>
    %cst_2 = arith.constant 3.200000e+01 : f32
    %4 = vector.broadcast %cst_2 : f32 to vector<8x1xf32>
    %5 = arith.divf %3, %4 : vector<8x1xf32>
    %6 = vector.broadcast %5 : vector<8x1xf32> to vector<8x32xf32>
    %7 = arith.subf %1, %6 : vector<8x32xf32>
    %8 = arith.mulf %7, %7 : vector<8x32xf32>
    %cst_3 = arith.constant dense<0.000000e+00> : vector<8xf32>
    %9 = vector.multi_reduction <add>, %8, %cst_3 [1] : vector<8x32xf32> to vector<8xf32>
    %10 = vector.shape_cast %9 : vector<8xf32> to vector<8x1xf32>
    %cst_4 = arith.constant 3.200000e+01 : f32
    %11 = vector.broadcast %cst_4 : f32 to vector<8x1xf32>
    %12 = arith.divf %10, %11 : vector<8x1xf32>
    %13 = vector.broadcast %5 : vector<8x1xf32> to vector<8x32xf32>
    %14 = arith.subf %1, %13 : vector<8x32xf32>
    %cst_5 = arith.constant 9.99999997E-7 : f32
    %15 = vector.broadcast %cst_5 : f32 to vector<8x1xf32>
    %16 = arith.addf %12, %15 : vector<8x1xf32>
    %17 = math.rsqrt %16 : vector<8x1xf32>
    %18 = vector.broadcast %17 : vector<8x1xf32> to vector<8x32xf32>
    %19 = arith.mulf %14, %18 : vector<8x32xf32>
    %c0_6 = arith.constant 0 : index
    %c0_7 = arith.constant 0 : index
    %c0_8 = arith.constant 0 : index
    %20 = vector.load %arg3[%c0_6, %c0_7, %c0_8] : memref<1x1x32xf32, #tpu.memory_space<vmem>>, vector<1x1x32xf32>
    %21 = vector.shape_cast %20 : vector<1x1x32xf32> to vector<1x32xf32>
    %cst_9 = arith.constant 1.000000e+00 : f32
    %22 = vector.broadcast %cst_9 : f32 to vector<1x32xf32>
    %23 = arith.addf %22, %21 : vector<1x32xf32>
    %24 = vector.broadcast %23 : vector<1x32xf32> to vector<8x32xf32>
    %25 = arith.mulf %19, %24 : vector<8x32xf32>
    %c0_10 = arith.constant 0 : index
    %c0_11 = arith.constant 0 : index
    %c0_12 = arith.constant 0 : index
    %26 = vector.load %arg4[%c0_10, %c0_11, %c0_12] : memref<1x1x32xf32, #tpu.memory_space<vmem>>, vector<1x1x32xf32>
    %27 = vector.shape_cast %26 : vector<1x1x32xf32> to vector<1x32xf32>
    %28 = vector.broadcast %27 : vector<1x32xf32> to vector<8x32xf32>
    %29 = arith.addf %25, %28 : vector<8x32xf32>
    %c0_13 = arith.constant 0 : index
    %c0_14 = arith.constant 0 : index
    %c0_15 = arith.constant 0 : index
    %30 = vector.load %arg7[%c0_13, %c0_14, %c0_15] : memref<1x8x32xf32, #tpu.memory_space<vmem>>, vector<1x8x32xf32>
    %31 = vector.shape_cast %30 : vector<1x8x32xf32> to vector<8x32xf32>
    %32 = vector.shape_cast %29 : vector<8x32xf32> to vector<1x8x32xf32>
    tpu.vector_store %arg7[%c0_13, %c0_14, %c0_15], %32 {strides = array<i32>} : memref<1x8x32xf32, #tpu.memory_space<vmem>>, vector<1x8x32xf32>,
    %c0_16 = arith.constant 0 : index
    %c0_17 = arith.constant 0 : index
    %c0_18 = arith.constant 0 : index
    %33 = vector.load %arg5[%c0_16, %c0_17, %c0_18] : memref<1x1x32xf32, #tpu.memory_space<vmem>>, vector<1x1x32xf32>
    %34 = vector.shape_cast %33 : vector<1x1x32xf32> to vector<1x32xf32>
    %cst_19 = arith.constant 1.000000e+00 : f32
    %35 = vector.broadcast %cst_19 : f32 to vector<1x32xf32>
    %36 = arith.addf %35, %34 : vector<1x32xf32>
    %37 = vector.broadcast %36 : vector<1x32xf32> to vector<8x32xf32>
    %38 = arith.mulf %19, %37 : vector<8x32xf32>
    %c0_20 = arith.constant 0 : index
    %c0_21 = arith.constant 0 : index
    %c0_22 = arith.constant 0 : index
    %39 = vector.load %arg6[%c0_20, %c0_21, %c0_22] : memref<1x1x32xf32, #tpu.memory_space<vmem>>, vector<1x1x32xf32>
    %40 = vector.shape_cast %39 : vector<1x1x32xf32> to vector<1x32xf32>
    %41 = vector.broadcast %40 : vector<1x32xf32> to vector<8x32xf32>
    %42 = arith.addf %38, %41 : vector<8x32xf32>
    %c0_23 = arith.constant 0 : index
    %c0_24 = arith.constant 0 : index
    %c0_25 = arith.constant 0 : index
    %43 = vector.load %arg8[%c0_23, %c0_24, %c0_25] : memref<1x8x32xf32, #tpu.memory_space<vmem>>, vector<1x8x32xf32>
    %44 = vector.shape_cast %43 : vector<1x8x32xf32> to vector<8x32xf32>
    %45 = vector.shape_cast %42 : vector<8x32xf32> to vector<1x8x32xf32>
    tpu.vector_store %arg8[%c0_23, %c0_24, %c0_25], %45 {strides = array<i32>} : memref<1x8x32xf32, #tpu.memory_space<vmem>>, vector<1x8x32xf32>,
    return
  }
  func.func @transform_0(%arg0: i32, %arg1: i32) -> (i32, i32, i32) {
    %c0_i32 = arith.constant 0 : i32
    %c0_i32_0 = arith.constant 0 : i32
    return %arg0, %arg1, %c0_i32 : i32, i32, i32
  }
  func.func @transform_1(%arg0: i32, %arg1: i32) -> (i32, i32, i32) {
    %c0_i32 = arith.constant 0 : i32
    %c0_i32_0 = arith.constant 0 : i32
    %c0_i32_1 = arith.constant 0 : i32
    return %arg0, %c0_i32, %c0_i32_0 : i32, i32, i32
  }
  func.func @transform_2(%arg0: i32, %arg1: i32) -> (i32, i32, i32) {
    %c0_i32 = arith.constant 0 : i32
    %c0_i32_0 = arith.constant 0 : i32
    %c0_i32_1 = arith.constant 0 : i32
    return %arg0, %c0_i32, %c0_i32_0 : i32, i32, i32
  }
  func.func @transform_3(%arg0: i32, %arg1: i32) -> (i32, i32, i32) {
    %c0_i32 = arith.constant 0 : i32
    %c0_i32_0 = arith.constant 0 : i32
    %c0_i32_1 = arith.constant 0 : i32
    return %arg0, %c0_i32, %c0_i32_0 : i32, i32, i32
  }
  func.func @transform_4(%arg0: i32, %arg1: i32) -> (i32, i32, i32) {
    %c0_i32 = arith.constant 0 : i32
    %c0_i32_0 = arith.constant 0 : i32
    %c0_i32_1 = arith.constant 0 : i32
    return %arg0, %c0_i32, %c0_i32_0 : i32, i32, i32
  }
  func.func @transform_5(%arg0: i32, %arg1: i32) -> (i32, i32, i32) {
    %c0_i32 = arith.constant 0 : i32
    %c0_i32_0 = arith.constant 0 : i32
    return %arg0, %arg1, %c0_i32 : i32, i32, i32
  }
  func.func @transform_6(%arg0: i32, %arg1: i32) -> (i32, i32, i32) {
    %c0_i32 = arith.constant 0 : i32
    %c0_i32_0 = arith.constant 0 : i32
    return %arg0, %arg1, %c0_i32 : i32, i32, i32
  }
}

module attributes {stable_mosaic.version = 11 : i64} {
  func.func @kernel(%arg0: i32, %arg1: i32, %arg2: i32, %arg3: memref<1x1x8x16xf32, #tpu.memory_space<vmem>>, %arg4: memref<1x1x8x16xf32, #tpu.memory_space<vmem>>, %arg5: memref<1x1x8x16xf32, #tpu.memory_space<vmem>>, %arg6: memref<1x16xf32, #tpu.memory_space<vmem>>, %arg7: memref<1x16xf32, #tpu.memory_space<vmem>>, %arg8: memref<1x1x8x16xf32, #tpu.memory_space<vmem>>, %arg9: memref<8x16xf32, #tpu.memory_space<vmem>>, %arg10: memref<8x1xf32, #tpu.memory_space<vmem>>, %arg11: memref<8x1xf32, #tpu.memory_space<vmem>>, %arg12: memref<8x16xf32, #tpu.memory_space<vmem>>) attributes {dimension_semantics = [#tpu.dimension_semantics<parallel>, #tpu.dimension_semantics<parallel>, #tpu.dimension_semantics<arbitrary>], iteration_bounds = array<i64: 2, 2, 1>, scalar_prefetch = 0 : i64, scratch_operands = 4 : i64, tpu.core_type = #tpu.core_type<tc>, window_params = [{transform_indices = @transform_0, window_bounds = array<i64: 1, 1, 8, 16>}, {transform_indices = @transform_1, window_bounds = array<i64: 1, 1, 8, 16>}, {transform_indices = @transform_2, window_bounds = array<i64: 1, 1, 8, 16>}, {pipeline_mode = #tpu.pipeline_mode<synchronous>, transform_indices = @transform_3, window_bounds = array<i64: 1, 16>}, {pipeline_mode = #tpu.pipeline_mode<synchronous>, transform_indices = @transform_4, window_bounds = array<i64: 1, 16>}, {transform_indices = @transform_5, window_bounds = array<i64: 1, 1, 8, 16>}]} {
    %c0_i32 = arith.constant 0 : i32
    %0 = arith.cmpi eq, %arg2, %c0_i32 : i32
    %1 = arith.extui %0 : i1 to i32
    %c0_i32_0 = arith.constant 0 : i32
    %2 = arith.cmpi ne, %1, %c0_i32_0 : i32
    scf.if %2 {
      %c0_32 = arith.constant 0 : index
      %c0_33 = arith.constant 0 : index
      %c0_34 = arith.constant 0 : index
      %c0_35 = arith.constant 0 : index
      %47 = vector.load %arg3[%c0_32, %c0_33, %c0_34, %c0_35] : memref<1x1x8x16xf32, #tpu.memory_space<vmem>>, vector<1x1x8x16xf32>
      %48 = vector.shape_cast %47 : vector<1x1x8x16xf32> to vector<8x16xf32>
      %49 = arith.mulf %48, %48 : vector<8x16xf32>
      %cst_36 = arith.constant dense<0.000000e+00> : vector<8xf32>
      %50 = vector.multi_reduction <add>, %49, %cst_36 [1] : vector<8x16xf32> to vector<8xf32>
      %51 = vector.shape_cast %50 : vector<8xf32> to vector<8x1xf32>
      %cst_37 = arith.constant 1.600000e+01 : f32
      %52 = vector.broadcast %cst_37 : f32 to vector<8x1xf32>
      %53 = arith.divf %51, %52 : vector<8x1xf32>
      %cst_38 = arith.constant 9.99999997E-7 : f32
      %54 = vector.broadcast %cst_38 : f32 to vector<8x1xf32>
      %55 = arith.addf %53, %54 : vector<8x1xf32>
      %56 = math.rsqrt %55 : vector<8x1xf32>
      %57 = vector.broadcast %56 : vector<8x1xf32> to vector<8x16xf32>
      %58 = arith.mulf %48, %57 : vector<8x16xf32>
      %c0_39 = arith.constant 0 : index
      %c0_40 = arith.constant 0 : index
      %59 = vector.load %arg6[%c0_39, %c0_40] : memref<1x16xf32, #tpu.memory_space<vmem>>, vector<1x16xf32>
      %60 = vector.broadcast %59 : vector<1x16xf32> to vector<8x16xf32>
      %61 = arith.mulf %58, %60 : vector<8x16xf32>
      %cst_41 = arith.constant 2.500000e-01 : f32
      %62 = vector.broadcast %cst_41 : f32 to vector<8x16xf32>
      %63 = arith.mulf %61, %62 : vector<8x16xf32>
      %c0_42 = arith.constant 0 : index
      %c0_43 = arith.constant 0 : index
      %64 = vector.load %arg9[%c0_42, %c0_43] : memref<8x16xf32, #tpu.memory_space<vmem>>, vector<8x16xf32>
      tpu.vector_store %arg9[%c0_42, %c0_43], %63 {strides = array<i32>} : memref<8x16xf32, #tpu.memory_space<vmem>>, vector<8x16xf32>,
      %cst_44 = arith.constant 0xFF800000 : f32
      %65 = vector.broadcast %cst_44 : f32 to vector<8x1xf32>
      %c0_45 = arith.constant 0 : index
      %c0_46 = arith.constant 0 : index
      %66 = vector.load %arg10[%c0_45, %c0_46] : memref<8x1xf32, #tpu.memory_space<vmem>>, vector<8x1xf32>
      tpu.vector_store %arg10[%c0_45, %c0_46], %65 {strides = array<i32>} : memref<8x1xf32, #tpu.memory_space<vmem>>, vector<8x1xf32>,
      %cst_47 = arith.constant 0.000000e+00 : f32
      %67 = vector.broadcast %cst_47 : f32 to vector<8x1xf32>
      %c0_48 = arith.constant 0 : index
      %c0_49 = arith.constant 0 : index
      %68 = vector.load %arg11[%c0_48, %c0_49] : memref<8x1xf32, #tpu.memory_space<vmem>>, vector<8x1xf32>
      tpu.vector_store %arg11[%c0_48, %c0_49], %67 {strides = array<i32>} : memref<8x1xf32, #tpu.memory_space<vmem>>, vector<8x1xf32>,
      %cst_50 = arith.constant 0.000000e+00 : f32
      %69 = vector.broadcast %cst_50 : f32 to vector<8x16xf32>
      %c0_51 = arith.constant 0 : index
      %c0_52 = arith.constant 0 : index
      %70 = vector.load %arg12[%c0_51, %c0_52] : memref<8x16xf32, #tpu.memory_space<vmem>>, vector<8x16xf32>
      tpu.vector_store %arg12[%c0_51, %c0_52], %69 {strides = array<i32>} : memref<8x16xf32, #tpu.memory_space<vmem>>, vector<8x16xf32>,
    } else {
    }
    %c0 = arith.constant 0 : index
    %c0_1 = arith.constant 0 : index
    %c0_2 = arith.constant 0 : index
    %c0_3 = arith.constant 0 : index
    %3 = vector.load %arg4[%c0, %c0_1, %c0_2, %c0_3] : memref<1x1x8x16xf32, #tpu.memory_space<vmem>>, vector<1x1x8x16xf32>
    %4 = vector.shape_cast %3 : vector<1x1x8x16xf32> to vector<8x16xf32>
    %5 = arith.mulf %4, %4 : vector<8x16xf32>
    %cst = arith.constant dense<0.000000e+00> : vector<8xf32>
    %6 = vector.multi_reduction <add>, %5, %cst [1] : vector<8x16xf32> to vector<8xf32>
    %7 = vector.shape_cast %6 : vector<8xf32> to vector<8x1xf32>
    %cst_4 = arith.constant 1.600000e+01 : f32
    %8 = vector.broadcast %cst_4 : f32 to vector<8x1xf32>
    %9 = arith.divf %7, %8 : vector<8x1xf32>
    %cst_5 = arith.constant 9.99999997E-7 : f32
    %10 = vector.broadcast %cst_5 : f32 to vector<8x1xf32>
    %11 = arith.addf %9, %10 : vector<8x1xf32>
    %12 = math.rsqrt %11 : vector<8x1xf32>
    %13 = vector.broadcast %12 : vector<8x1xf32> to vector<8x16xf32>
    %14 = arith.mulf %4, %13 : vector<8x16xf32>
    %c0_6 = arith.constant 0 : index
    %c0_7 = arith.constant 0 : index
    %15 = vector.load %arg7[%c0_6, %c0_7] : memref<1x16xf32, #tpu.memory_space<vmem>>, vector<1x16xf32>
    %16 = vector.broadcast %15 : vector<1x16xf32> to vector<8x16xf32>
    %17 = arith.mulf %14, %16 : vector<8x16xf32>
    %c0_8 = arith.constant 0 : index
    %c0_9 = arith.constant 0 : index
    %18 = vector.load %arg9[%c0_8, %c0_9] : memref<8x16xf32, #tpu.memory_space<vmem>>, vector<8x16xf32>
    %cst_10 = arith.constant dense<0.000000e+00> : vector<8x8xf32>
    %19 = tpu.matmul %18, %17, %cst_10 {dimension_numbers = #tpu.dot_dimension_numbers<[1], [1], [0], [0], [0, 0, 1, 0], [], []>} : vector<8x16xf32>, vector<8x16xf32>, vector<8x8xf32> -> vector<8x8xf32>
    %c0_11 = arith.constant 0 : index
    %c0_12 = arith.constant 0 : index
    %20 = vector.load %arg10[%c0_11, %c0_12] : memref<8x1xf32, #tpu.memory_space<vmem>>, vector<8x1xf32>
    %cst_13 = arith.constant dense<0xFF800000> : vector<8xf32>
    %21 = vector.multi_reduction <maximumf>, %19, %cst_13 [1] : vector<8x8xf32> to vector<8xf32>
    %22 = vector.shape_cast %21 : vector<8xf32> to vector<8x1xf32>
    %23 = arith.maximumf %20, %22 : vector<8x1xf32>
    %24 = arith.subf %20, %23 : vector<8x1xf32>
    %25 = math.exp %24 : vector<8x1xf32>
    %26 = vector.broadcast %23 : vector<8x1xf32> to vector<8x8xf32>
    %27 = arith.subf %19, %26 : vector<8x8xf32>
    %28 = math.exp %27 : vector<8x8xf32>
    %c0_14 = arith.constant 0 : index
    %c0_15 = arith.constant 0 : index
    %29 = vector.load %arg11[%c0_14, %c0_15] : memref<8x1xf32, #tpu.memory_space<vmem>>, vector<8x1xf32>
    %30 = arith.mulf %25, %29 : vector<8x1xf32>
    %cst_16 = arith.constant dense<0.000000e+00> : vector<8xf32>
    %31 = vector.multi_reduction <add>, %28, %cst_16 [1] : vector<8x8xf32> to vector<8xf32>
    %32 = vector.shape_cast %31 : vector<8xf32> to vector<8x1xf32>
    %33 = arith.addf %30, %32 : vector<8x1xf32>
    %c0_17 = arith.constant 0 : index
    %c0_18 = arith.constant 0 : index
    %34 = vector.load %arg11[%c0_17, %c0_18] : memref<8x1xf32, #tpu.memory_space<vmem>>, vector<8x1xf32>
    tpu.vector_store %arg11[%c0_17, %c0_18], %33 {strides = array<i32>} : memref<8x1xf32, #tpu.memory_space<vmem>>, vector<8x1xf32>,
    %c0_19 = arith.constant 0 : index
    %c0_20 = arith.constant 0 : index
    %35 = vector.load %arg12[%c0_19, %c0_20] : memref<8x16xf32, #tpu.memory_space<vmem>>, vector<8x16xf32>
    %36 = vector.broadcast %25 : vector<8x1xf32> to vector<8x16xf32>
    %37 = arith.mulf %36, %35 : vector<8x16xf32>
    %c0_21 = arith.constant 0 : index
    %c0_22 = arith.constant 0 : index
    %c0_23 = arith.constant 0 : index
    %c0_24 = arith.constant 0 : index
    %38 = vector.load %arg5[%c0_21, %c0_22, %c0_23, %c0_24] : memref<1x1x8x16xf32, #tpu.memory_space<vmem>>, vector<1x1x8x16xf32>
    %39 = vector.shape_cast %38 : vector<1x1x8x16xf32> to vector<8x16xf32>
    %cst_25 = arith.constant dense<0.000000e+00> : vector<8x16xf32>
    %40 = tpu.matmul %28, %39, %cst_25 {dimension_numbers = #tpu.dot_dimension_numbers<[1], [0], [0], [1], [0, 0, 1, 1], [], []>} : vector<8x8xf32>, vector<8x16xf32>, vector<8x16xf32> -> vector<8x16xf32>
    %41 = arith.addf %37, %40 : vector<8x16xf32>
    %c0_26 = arith.constant 0 : index
    %c0_27 = arith.constant 0 : index
    %42 = vector.load %arg12[%c0_26, %c0_27] : memref<8x16xf32, #tpu.memory_space<vmem>>, vector<8x16xf32>
    tpu.vector_store %arg12[%c0_26, %c0_27], %41 {strides = array<i32>} : memref<8x16xf32, #tpu.memory_space<vmem>>, vector<8x16xf32>,
    %c0_28 = arith.constant 0 : index
    %c0_29 = arith.constant 0 : index
    %43 = vector.load %arg10[%c0_28, %c0_29] : memref<8x1xf32, #tpu.memory_space<vmem>>, vector<8x1xf32>
    tpu.vector_store %arg10[%c0_28, %c0_29], %23 {strides = array<i32>} : memref<8x1xf32, #tpu.memory_space<vmem>>, vector<8x1xf32>,
    %c0_i32_30 = arith.constant 0 : i32
    %44 = arith.cmpi eq, %arg2, %c0_i32_30 : i32
    %45 = arith.extui %44 : i1 to i32
    %c0_i32_31 = arith.constant 0 : i32
    %46 = arith.cmpi ne, %45, %c0_i32_31 : i32
    scf.if %46 {
      %c0_32 = arith.constant 0 : index
      %c0_33 = arith.constant 0 : index
      %47 = vector.load %arg12[%c0_32, %c0_33] : memref<8x16xf32, #tpu.memory_space<vmem>>, vector<8x16xf32>
      %c0_34 = arith.constant 0 : index
      %c0_35 = arith.constant 0 : index
      %48 = vector.load %arg11[%c0_34, %c0_35] : memref<8x1xf32, #tpu.memory_space<vmem>>, vector<8x1xf32>
      %49 = tpu.reciprocal %48 {approx = true} : vector<8x1xf32> -> vector<8x1xf32>
      %50 = vector.broadcast %49 : vector<8x1xf32> to vector<8x16xf32>
      %51 = arith.mulf %47, %50 : vector<8x16xf32>
      %c0_36 = arith.constant 0 : index
      %c0_37 = arith.constant 0 : index
      %c0_38 = arith.constant 0 : index
      %c0_39 = arith.constant 0 : index
      %52 = vector.load %arg8[%c0_36, %c0_37, %c0_38, %c0_39] : memref<1x1x8x16xf32, #tpu.memory_space<vmem>>, vector<1x1x8x16xf32>
      %53 = vector.shape_cast %52 : vector<1x1x8x16xf32> to vector<8x16xf32>
      %54 = vector.shape_cast %51 : vector<8x16xf32> to vector<1x1x8x16xf32>
      tpu.vector_store %arg8[%c0_36, %c0_37, %c0_38, %c0_39], %54 {strides = array<i32>} : memref<1x1x8x16xf32, #tpu.memory_space<vmem>>, vector<1x1x8x16xf32>,
    } else {
    }
    return
  }
  func.func @transform_0(%arg0: i32, %arg1: i32, %arg2: i32) -> (i32, i32, i32, i32) {
    %c0_i32 = arith.constant 0 : i32
    %c0_i32_0 = arith.constant 0 : i32
    %c0_i32_1 = arith.constant 0 : i32
    return %arg0, %arg1, %c0_i32, %c0_i32_0 : i32, i32, i32, i32
  }
  func.func @transform_1(%arg0: i32, %arg1: i32, %arg2: i32) -> (i32, i32, i32, i32) {
    %c0_i32 = arith.constant 0 : i32
    %0 = arith.minsi %arg2, %c0_i32 : i32
    %c0_i32_0 = arith.constant 0 : i32
    %c0_i32_1 = arith.constant 0 : i32
    return %arg0, %arg1, %0, %c0_i32_0 : i32, i32, i32, i32
  }
  func.func @transform_2(%arg0: i32, %arg1: i32, %arg2: i32) -> (i32, i32, i32, i32) {
    %c0_i32 = arith.constant 0 : i32
    %0 = arith.minsi %arg2, %c0_i32 : i32
    %c0_i32_0 = arith.constant 0 : i32
    %c0_i32_1 = arith.constant 0 : i32
    return %arg0, %arg1, %0, %c0_i32_0 : i32, i32, i32, i32
  }
  func.func @transform_3(%arg0: i32, %arg1: i32, %arg2: i32) -> (i32, i32) {
    %c0_i32 = arith.constant 0 : i32
    %c0_i32_0 = arith.constant 0 : i32
    %c0_i32_1 = arith.constant 0 : i32
    return %c0_i32, %c0_i32_0 : i32, i32
  }
  func.func @transform_4(%arg0: i32, %arg1: i32, %arg2: i32) -> (i32, i32) {
    %c0_i32 = arith.constant 0 : i32
    %c0_i32_0 = arith.constant 0 : i32
    %c0_i32_1 = arith.constant 0 : i32
    return %c0_i32, %c0_i32_0 : i32, i32
  }
  func.func @transform_5(%arg0: i32, %arg1: i32, %arg2: i32) -> (i32, i32, i32, i32) {
    %c0_i32 = arith.constant 0 : i32
    %c0_i32_0 = arith.constant 0 : i32
    %c0_i32_1 = arith.constant 0 : i32
    return %arg0, %arg1, %c0_i32, %c0_i32_0 : i32, i32, i32, i32
  }
}

module attributes {stable_mosaic.version = 11 : i64} {
  func.func @_linear_gr_kernel(%arg0: i32, %arg1: i32, %arg2: i32, %arg3: i32, %arg4: memref<1x8x32xf32, #tpu.memory_space<vmem>>, %arg5: memref<32x32xf32, #tpu.memory_space<vmem>>, %arg6: memref<1x32xf32, #tpu.memory_space<vmem>>, %arg7: memref<1x8x32xf32, #tpu.memory_space<vmem>>, %arg8: memref<1x1x32xf32, #tpu.memory_space<vmem>>, %arg9: memref<1x8x32xf32, #tpu.memory_space<vmem>>, %arg10: memref<8x32xf32, #tpu.memory_space<vmem>>) attributes {dimension_semantics = [#tpu.dimension_semantics<parallel>, #tpu.dimension_semantics<parallel>, #tpu.dimension_semantics<parallel>, #tpu.dimension_semantics<arbitrary>], iteration_bounds = array<i64: 2, 1, 1, 1>, scalar_prefetch = 0 : i64, scratch_operands = 1 : i64, tpu.core_type = #tpu.core_type<tc>, window_params = [{transform_indices = @transform_0, window_bounds = array<i64: 1, 8, 32>}, {transform_indices = @transform_1, window_bounds = array<i64: 32, 32>}, {transform_indices = @transform_2, window_bounds = array<i64: 1, 32>}, {transform_indices = @transform_3, window_bounds = array<i64: 1, 8, 32>}, {transform_indices = @transform_4, window_bounds = array<i64: 1, 1, 32>}, {transform_indices = @transform_5, window_bounds = array<i64: 1, 8, 32>}]} {
    %c0_i32 = arith.constant 0 : i32
    %0 = arith.cmpi eq, %arg3, %c0_i32 : i32
    %1 = arith.extui %0 : i1 to i32
    %c0_i32_0 = arith.constant 0 : i32
    %2 = arith.cmpi ne, %1, %c0_i32_0 : i32
    scf.if %2 {
      %cst_11 = arith.constant 0.000000e+00 : f32
      %13 = vector.broadcast %cst_11 : f32 to vector<8x32xf32>
      %c0_12 = arith.constant 0 : index
      %c0_13 = arith.constant 0 : index
      %14 = vector.load %arg10[%c0_12, %c0_13] : memref<8x32xf32, #tpu.memory_space<vmem>>, vector<8x32xf32>
      tpu.vector_store %arg10[%c0_12, %c0_13], %13 {strides = array<i32>} : memref<8x32xf32, #tpu.memory_space<vmem>>, vector<8x32xf32>,
    } else {
    }
    %c0 = arith.constant 0 : index
    %c0_1 = arith.constant 0 : index
    %3 = vector.load %arg10[%c0, %c0_1] : memref<8x32xf32, #tpu.memory_space<vmem>>, vector<8x32xf32>
    %c0_2 = arith.constant 0 : index
    %c0_3 = arith.constant 0 : index
    %c0_4 = arith.constant 0 : index
    %4 = vector.load %arg4[%c0_2, %c0_3, %c0_4] : memref<1x8x32xf32, #tpu.memory_space<vmem>>, vector<1x8x32xf32>
    %5 = vector.shape_cast %4 : vector<1x8x32xf32> to vector<8x32xf32>
    %c0_5 = arith.constant 0 : index
    %c0_6 = arith.constant 0 : index
    %6 = vector.load %arg5[%c0_5, %c0_6] : memref<32x32xf32, #tpu.memory_space<vmem>>, vector<32x32xf32>
    %cst = arith.constant dense<0.000000e+00> : vector<8x32xf32>
    %7 = tpu.matmul %5, %6, %cst {dimension_numbers = #tpu.dot_dimension_numbers<[1], [0], [0], [1], [0, 0, 1, 1], [], []>} : vector<8x32xf32>, vector<32x32xf32>, vector<8x32xf32> -> vector<8x32xf32>
    %8 = arith.addf %3, %7 : vector<8x32xf32>
    %c0_7 = arith.constant 0 : index
    %c0_8 = arith.constant 0 : index
    %9 = vector.load %arg10[%c0_7, %c0_8] : memref<8x32xf32, #tpu.memory_space<vmem>>, vector<8x32xf32>
    tpu.vector_store %arg10[%c0_7, %c0_8], %8 {strides = array<i32>} : memref<8x32xf32, #tpu.memory_space<vmem>>, vector<8x32xf32>,
    %c0_i32_9 = arith.constant 0 : i32
    %10 = arith.cmpi eq, %arg3, %c0_i32_9 : i32
    %11 = arith.extui %10 : i1 to i32
    %c0_i32_10 = arith.constant 0 : i32
    %12 = arith.cmpi ne, %11, %c0_i32_10 : i32
    scf.if %12 {
      %c0_11 = arith.constant 0 : index
      %c0_12 = arith.constant 0 : index
      %13 = vector.load %arg10[%c0_11, %c0_12] : memref<8x32xf32, #tpu.memory_space<vmem>>, vector<8x32xf32>
      %c0_13 = arith.constant 0 : index
      %c0_14 = arith.constant 0 : index
      %14 = vector.load %arg6[%c0_13, %c0_14] : memref<1x32xf32, #tpu.memory_space<vmem>>, vector<1x32xf32>
      %15 = vector.broadcast %14 : vector<1x32xf32> to vector<8x32xf32>
      %16 = arith.addf %13, %15 : vector<8x32xf32>
      %c0_15 = arith.constant 0 : index
      %c0_16 = arith.constant 0 : index
      %c0_17 = arith.constant 0 : index
      %17 = vector.load %arg7[%c0_15, %c0_16, %c0_17] : memref<1x8x32xf32, #tpu.memory_space<vmem>>, vector<1x8x32xf32>
      %18 = vector.shape_cast %17 : vector<1x8x32xf32> to vector<8x32xf32>
      %c0_18 = arith.constant 0 : index
      %c0_19 = arith.constant 0 : index
      %c0_20 = arith.constant 0 : index
      %19 = vector.load %arg8[%c0_18, %c0_19, %c0_20] : memref<1x1x32xf32, #tpu.memory_space<vmem>>, vector<1x1x32xf32>
      %20 = vector.shape_cast %19 : vector<1x1x32xf32> to vector<1x32xf32>
      %21 = vector.broadcast %20 : vector<1x32xf32> to vector<8x32xf32>
      %22 = arith.mulf %21, %16 : vector<8x32xf32>
      %23 = arith.addf %18, %22 : vector<8x32xf32>
      %c0_21 = arith.constant 0 : index
      %c0_22 = arith.constant 0 : index
      %c0_23 = arith.constant 0 : index
      %24 = vector.load %arg9[%c0_21, %c0_22, %c0_23] : memref<1x8x32xf32, #tpu.memory_space<vmem>>, vector<1x8x32xf32>
      %25 = vector.shape_cast %24 : vector<1x8x32xf32> to vector<8x32xf32>
      %26 = vector.shape_cast %23 : vector<8x32xf32> to vector<1x8x32xf32>
      tpu.vector_store %arg9[%c0_21, %c0_22, %c0_23], %26 {strides = array<i32>} : memref<1x8x32xf32, #tpu.memory_space<vmem>>, vector<1x8x32xf32>,
    } else {
    }
    return
  }
  func.func @transform_0(%arg0: i32, %arg1: i32, %arg2: i32, %arg3: i32) -> (i32, i32, i32) {
    %c0_i32 = arith.constant 0 : i32
    return %arg0, %arg1, %arg3 : i32, i32, i32
  }
  func.func @transform_1(%arg0: i32, %arg1: i32, %arg2: i32, %arg3: i32) -> (i32, i32) {
    %c0_i32 = arith.constant 0 : i32
    return %arg3, %arg2 : i32, i32
  }
  func.func @transform_2(%arg0: i32, %arg1: i32, %arg2: i32, %arg3: i32) -> (i32, i32) {
    %c0_i32 = arith.constant 0 : i32
    %c0_i32_0 = arith.constant 0 : i32
    return %c0_i32, %arg2 : i32, i32
  }
  func.func @transform_3(%arg0: i32, %arg1: i32, %arg2: i32, %arg3: i32) -> (i32, i32, i32) {
    %c0_i32 = arith.constant 0 : i32
    return %arg0, %arg1, %arg2 : i32, i32, i32
  }
  func.func @transform_4(%arg0: i32, %arg1: i32, %arg2: i32, %arg3: i32) -> (i32, i32, i32) {
    %c0_i32 = arith.constant 0 : i32
    %c0_i32_0 = arith.constant 0 : i32
    return %arg0, %c0_i32, %arg2 : i32, i32, i32
  }
  func.func @transform_5(%arg0: i32, %arg1: i32, %arg2: i32, %arg3: i32) -> (i32, i32, i32) {
    %c0_i32 = arith.constant 0 : i32
    return %arg0, %arg1, %arg2 : i32, i32, i32
  }
}

module attributes {stable_mosaic.version = 11 : i64} {
  func.func @kernel(%arg0: i32, %arg1: i32, %arg2: i32, %arg3: memref<1x1x8x16xf32, #tpu.memory_space<vmem>>, %arg4: memref<1x1x8x16xf32, #tpu.memory_space<vmem>>, %arg5: memref<1x1x8x16xf32, #tpu.memory_space<vmem>>, %arg6: memref<1x1x8x16xf32, #tpu.memory_space<vmem>>, %arg7: memref<1x1x8x16xf32, #tpu.memory_space<vmem>>, %arg8: memref<1x16xf32, #tpu.memory_space<vmem>>, %arg9: memref<1x16xf32, #tpu.memory_space<vmem>>, %arg10: memref<1x16xf32, #tpu.memory_space<vmem>>, %arg11: memref<1x1x8x16xf32, #tpu.memory_space<vmem>>, %arg12: memref<8x16xf32, #tpu.memory_space<vmem>>, %arg13: memref<8x1xf32, #tpu.memory_space<vmem>>, %arg14: memref<8x1xf32, #tpu.memory_space<vmem>>, %arg15: memref<8x16xf32, #tpu.memory_space<vmem>>) attributes {dimension_semantics = [#tpu.dimension_semantics<parallel>, #tpu.dimension_semantics<parallel>, #tpu.dimension_semantics<arbitrary>], iteration_bounds = array<i64: 2, 2, 2>, scalar_prefetch = 0 : i64, scratch_operands = 4 : i64, tpu.core_type = #tpu.core_type<tc>, window_params = [{transform_indices = @transform_0, window_bounds = array<i64: 1, 1, 8, 16>}, {transform_indices = @transform_1, window_bounds = array<i64: 1, 1, 8, 16>}, {transform_indices = @transform_2, window_bounds = array<i64: 1, 1, 8, 16>}, {transform_indices = @transform_3, window_bounds = array<i64: 1, 1, 8, 16>}, {transform_indices = @transform_4, window_bounds = array<i64: 1, 1, 8, 16>}, {pipeline_mode = #tpu.pipeline_mode<synchronous>, transform_indices = @transform_5, window_bounds = array<i64: 1, 16>}, {pipeline_mode = #tpu.pipeline_mode<synchronous>, transform_indices = @transform_6, window_bounds = array<i64: 1, 16>}, {pipeline_mode = #tpu.pipeline_mode<synchronous>, transform_indices = @transform_7, window_bounds = array<i64: 1, 16>}, {transform_indices = @transform_8, window_bounds = array<i64: 1, 1, 8, 16>}]} {
    %c0_i32 = arith.constant 0 : i32
    %0 = arith.cmpi eq, %arg2, %c0_i32 : i32
    %1 = arith.extui %0 : i1 to i32
    %c0_i32_0 = arith.constant 0 : i32
    %2 = arith.cmpi ne, %1, %c0_i32_0 : i32
    scf.if %2 {
      %c0 = arith.constant 0 : index
      %c0_6 = arith.constant 0 : index
      %c0_7 = arith.constant 0 : index
      %c0_8 = arith.constant 0 : index
      %12 = vector.load %arg3[%c0, %c0_6, %c0_7, %c0_8] : memref<1x1x8x16xf32, #tpu.memory_space<vmem>>, vector<1x1x8x16xf32>
      %13 = vector.shape_cast %12 : vector<1x1x8x16xf32> to vector<8x16xf32>
      %14 = arith.mulf %13, %13 : vector<8x16xf32>
      %cst = arith.constant dense<0.000000e+00> : vector<8xf32>
      %15 = vector.multi_reduction <add>, %14, %cst [1] : vector<8x16xf32> to vector<8xf32>
      %16 = vector.shape_cast %15 : vector<8xf32> to vector<8x1xf32>
      %cst_9 = arith.constant 1.600000e+01 : f32
      %17 = vector.broadcast %cst_9 : f32 to vector<8x1xf32>
      %18 = arith.divf %16, %17 : vector<8x1xf32>
      %cst_10 = arith.constant 9.99999997E-7 : f32
      %19 = vector.broadcast %cst_10 : f32 to vector<8x1xf32>
      %20 = arith.addf %18, %19 : vector<8x1xf32>
      %21 = math.rsqrt %20 : vector<8x1xf32>
      %22 = vector.broadcast %21 : vector<8x1xf32> to vector<8x16xf32>
      %23 = arith.mulf %13, %22 : vector<8x16xf32>
      %c0_11 = arith.constant 0 : index
      %c0_12 = arith.constant 0 : index
      %24 = vector.load %arg8[%c0_11, %c0_12] : memref<1x16xf32, #tpu.memory_space<vmem>>, vector<1x16xf32>
      %25 = vector.broadcast %24 : vector<1x16xf32> to vector<8x16xf32>
      %26 = arith.mulf %23, %25 : vector<8x16xf32>
      %cst_13 = arith.constant 2.500000e-01 : f32
      %27 = vector.broadcast %cst_13 : f32 to vector<8x16xf32>
      %28 = arith.mulf %26, %27 : vector<8x16xf32>
      %c0_14 = arith.constant 0 : index
      %c0_15 = arith.constant 0 : index
      %29 = vector.load %arg12[%c0_14, %c0_15] : memref<8x16xf32, #tpu.memory_space<vmem>>, vector<8x16xf32>
      tpu.vector_store %arg12[%c0_14, %c0_15], %28 {strides = array<i32>} : memref<8x16xf32, #tpu.memory_space<vmem>>, vector<8x16xf32>,
      %cst_16 = arith.constant 0xFF800000 : f32
      %30 = vector.broadcast %cst_16 : f32 to vector<8x1xf32>
      %c0_17 = arith.constant 0 : index
      %c0_18 = arith.constant 0 : index
      %31 = vector.load %arg13[%c0_17, %c0_18] : memref<8x1xf32, #tpu.memory_space<vmem>>, vector<8x1xf32>
      tpu.vector_store %arg13[%c0_17, %c0_18], %30 {strides = array<i32>} : memref<8x1xf32, #tpu.memory_space<vmem>>, vector<8x1xf32>,
      %cst_19 = arith.constant 0.000000e+00 : f32
      %32 = vector.broadcast %cst_19 : f32 to vector<8x1xf32>
      %c0_20 = arith.constant 0 : index
      %c0_21 = arith.constant 0 : index
      %33 = vector.load %arg14[%c0_20, %c0_21] : memref<8x1xf32, #tpu.memory_space<vmem>>, vector<8x1xf32>
      tpu.vector_store %arg14[%c0_20, %c0_21], %32 {strides = array<i32>} : memref<8x1xf32, #tpu.memory_space<vmem>>, vector<8x1xf32>,
      %cst_22 = arith.constant 0.000000e+00 : f32
      %34 = vector.broadcast %cst_22 : f32 to vector<8x16xf32>
      %c0_23 = arith.constant 0 : index
      %c0_24 = arith.constant 0 : index
      %35 = vector.load %arg15[%c0_23, %c0_24] : memref<8x16xf32, #tpu.memory_space<vmem>>, vector<8x16xf32>
      tpu.vector_store %arg15[%c0_23, %c0_24], %34 {strides = array<i32>} : memref<8x16xf32, #tpu.memory_space<vmem>>, vector<8x16xf32>,
    } else {
    }
    %c1_i32 = arith.constant 1 : i32
    %3 = arith.cmpi slt, %arg2, %c1_i32 : i32
    %4 = arith.extui %3 : i1 to i32
    %c0_i32_1 = arith.constant 0 : i32
    %5 = arith.cmpi ne, %4, %c0_i32_1 : i32
    scf.if %5 {
      %c0 = arith.constant 0 : index
      %c0_6 = arith.constant 0 : index
      %c0_7 = arith.constant 0 : index
      %c0_8 = arith.constant 0 : index
      %12 = vector.load %arg4[%c0, %c0_6, %c0_7, %c0_8] : memref<1x1x8x16xf32, #tpu.memory_space<vmem>>, vector<1x1x8x16xf32>
      %13 = vector.shape_cast %12 : vector<1x1x8x16xf32> to vector<8x16xf32>
      %14 = arith.mulf %13, %13 : vector<8x16xf32>
      %cst = arith.constant dense<0.000000e+00> : vector<8xf32>
      %15 = vector.multi_reduction <add>, %14, %cst [1] : vector<8x16xf32> to vector<8xf32>
      %16 = vector.shape_cast %15 : vector<8xf32> to vector<8x1xf32>
      %cst_9 = arith.constant 1.600000e+01 : f32
      %17 = vector.broadcast %cst_9 : f32 to vector<8x1xf32>
      %18 = arith.divf %16, %17 : vector<8x1xf32>
      %cst_10 = arith.constant 9.99999997E-7 : f32
      %19 = vector.broadcast %cst_10 : f32 to vector<8x1xf32>
      %20 = arith.addf %18, %19 : vector<8x1xf32>
      %21 = math.rsqrt %20 : vector<8x1xf32>
      %22 = vector.broadcast %21 : vector<8x1xf32> to vector<8x16xf32>
      %23 = arith.mulf %13, %22 : vector<8x16xf32>
      %c0_11 = arith.constant 0 : index
      %c0_12 = arith.constant 0 : index
      %24 = vector.load %arg9[%c0_11, %c0_12] : memref<1x16xf32, #tpu.memory_space<vmem>>, vector<1x16xf32>
      %25 = vector.broadcast %24 : vector<1x16xf32> to vector<8x16xf32>
      %26 = arith.mulf %23, %25 : vector<8x16xf32>
      %c0_13 = arith.constant 0 : index
      %c0_14 = arith.constant 0 : index
      %27 = vector.load %arg12[%c0_13, %c0_14] : memref<8x16xf32, #tpu.memory_space<vmem>>, vector<8x16xf32>
      %cst_15 = arith.constant dense<0.000000e+00> : vector<8x8xf32>
      %28 = tpu.matmul %27, %26, %cst_15 {dimension_numbers = #tpu.dot_dimension_numbers<[1], [1], [0], [0], [0, 0, 1, 0], [], []>} : vector<8x16xf32>, vector<8x16xf32>, vector<8x8xf32> -> vector<8x8xf32>
      %c0_16 = arith.constant 0 : index
      %c0_17 = arith.constant 0 : index
      %29 = vector.load %arg13[%c0_16, %c0_17] : memref<8x1xf32, #tpu.memory_space<vmem>>, vector<8x1xf32>
      %cst_18 = arith.constant dense<0xFF800000> : vector<8xf32>
      %30 = vector.multi_reduction <maximumf>, %28, %cst_18 [1] : vector<8x8xf32> to vector<8xf32>
      %31 = vector.shape_cast %30 : vector<8xf32> to vector<8x1xf32>
      %32 = arith.maximumf %29, %31 : vector<8x1xf32>
      %33 = arith.subf %29, %32 : vector<8x1xf32>
      %34 = math.exp %33 : vector<8x1xf32>
      %35 = vector.broadcast %32 : vector<8x1xf32> to vector<8x8xf32>
      %36 = arith.subf %28, %35 : vector<8x8xf32>
      %37 = math.exp %36 : vector<8x8xf32>
      %c0_19 = arith.constant 0 : index
      %c0_20 = arith.constant 0 : index
      %38 = vector.load %arg14[%c0_19, %c0_20] : memref<8x1xf32, #tpu.memory_space<vmem>>, vector<8x1xf32>
      %39 = arith.mulf %34, %38 : vector<8x1xf32>
      %cst_21 = arith.constant dense<0.000000e+00> : vector<8xf32>
      %40 = vector.multi_reduction <add>, %37, %cst_21 [1] : vector<8x8xf32> to vector<8xf32>
      %41 = vector.shape_cast %40 : vector<8xf32> to vector<8x1xf32>
      %42 = arith.addf %39, %41 : vector<8x1xf32>
      %c0_22 = arith.constant 0 : index
      %c0_23 = arith.constant 0 : index
      %43 = vector.load %arg14[%c0_22, %c0_23] : memref<8x1xf32, #tpu.memory_space<vmem>>, vector<8x1xf32>
      tpu.vector_store %arg14[%c0_22, %c0_23], %42 {strides = array<i32>} : memref<8x1xf32, #tpu.memory_space<vmem>>, vector<8x1xf32>,
      %c0_24 = arith.constant 0 : index
      %c0_25 = arith.constant 0 : index
      %44 = vector.load %arg15[%c0_24, %c0_25] : memref<8x16xf32, #tpu.memory_space<vmem>>, vector<8x16xf32>
      %45 = vector.broadcast %34 : vector<8x1xf32> to vector<8x16xf32>
      %46 = arith.mulf %45, %44 : vector<8x16xf32>
      %c0_26 = arith.constant 0 : index
      %c0_27 = arith.constant 0 : index
      %c0_28 = arith.constant 0 : index
      %c0_29 = arith.constant 0 : index
      %47 = vector.load %arg5[%c0_26, %c0_27, %c0_28, %c0_29] : memref<1x1x8x16xf32, #tpu.memory_space<vmem>>, vector<1x1x8x16xf32>
      %48 = vector.shape_cast %47 : vector<1x1x8x16xf32> to vector<8x16xf32>
      %cst_30 = arith.constant dense<0.000000e+00> : vector<8x16xf32>
      %49 = tpu.matmul %37, %48, %cst_30 {dimension_numbers = #tpu.dot_dimension_numbers<[1], [0], [0], [1], [0, 0, 1, 1], [], []>} : vector<8x8xf32>, vector<8x16xf32>, vector<8x16xf32> -> vector<8x16xf32>
      %50 = arith.addf %46, %49 : vector<8x16xf32>
      %c0_31 = arith.constant 0 : index
      %c0_32 = arith.constant 0 : index
      %51 = vector.load %arg15[%c0_31, %c0_32] : memref<8x16xf32, #tpu.memory_space<vmem>>, vector<8x16xf32>
      tpu.vector_store %arg15[%c0_31, %c0_32], %50 {strides = array<i32>} : memref<8x16xf32, #tpu.memory_space<vmem>>, vector<8x16xf32>,
      %c0_33 = arith.constant 0 : index
      %c0_34 = arith.constant 0 : index
      %52 = vector.load %arg13[%c0_33, %c0_34] : memref<8x1xf32, #tpu.memory_space<vmem>>, vector<8x1xf32>
      tpu.vector_store %arg13[%c0_33, %c0_34], %32 {strides = array<i32>} : memref<8x1xf32, #tpu.memory_space<vmem>>, vector<8x1xf32>,
    } else {
    }
    %c1_i32_2 = arith.constant 1 : i32
    %6 = arith.cmpi sge, %arg2, %c1_i32_2 : i32
    %7 = arith.extui %6 : i1 to i32
    %c0_i32_3 = arith.constant 0 : i32
    %8 = arith.cmpi ne, %7, %c0_i32_3 : i32
    scf.if %8 {
      %c0 = arith.constant 0 : index
      %c0_6 = arith.constant 0 : index
      %c0_7 = arith.constant 0 : index
      %c0_8 = arith.constant 0 : index
      %12 = vector.load %arg6[%c0, %c0_6, %c0_7, %c0_8] : memref<1x1x8x16xf32, #tpu.memory_space<vmem>>, vector<1x1x8x16xf32>
      %13 = vector.shape_cast %12 : vector<1x1x8x16xf32> to vector<8x16xf32>
      %14 = arith.mulf %13, %13 : vector<8x16xf32>
      %cst = arith.constant dense<0.000000e+00> : vector<8xf32>
      %15 = vector.multi_reduction <add>, %14, %cst [1] : vector<8x16xf32> to vector<8xf32>
      %16 = vector.shape_cast %15 : vector<8xf32> to vector<8x1xf32>
      %cst_9 = arith.constant 1.600000e+01 : f32
      %17 = vector.broadcast %cst_9 : f32 to vector<8x1xf32>
      %18 = arith.divf %16, %17 : vector<8x1xf32>
      %cst_10 = arith.constant 9.99999997E-7 : f32
      %19 = vector.broadcast %cst_10 : f32 to vector<8x1xf32>
      %20 = arith.addf %18, %19 : vector<8x1xf32>
      %21 = math.rsqrt %20 : vector<8x1xf32>
      %22 = vector.broadcast %21 : vector<8x1xf32> to vector<8x16xf32>
      %23 = arith.mulf %13, %22 : vector<8x16xf32>
      %c0_11 = arith.constant 0 : index
      %c0_12 = arith.constant 0 : index
      %24 = vector.load %arg10[%c0_11, %c0_12] : memref<1x16xf32, #tpu.memory_space<vmem>>, vector<1x16xf32>
      %25 = vector.broadcast %24 : vector<1x16xf32> to vector<8x16xf32>
      %26 = arith.mulf %23, %25 : vector<8x16xf32>
      %c0_13 = arith.constant 0 : index
      %c0_14 = arith.constant 0 : index
      %27 = vector.load %arg12[%c0_13, %c0_14] : memref<8x16xf32, #tpu.memory_space<vmem>>, vector<8x16xf32>
      %cst_15 = arith.constant dense<0.000000e+00> : vector<8x8xf32>
      %28 = tpu.matmul %27, %26, %cst_15 {dimension_numbers = #tpu.dot_dimension_numbers<[1], [1], [0], [0], [0, 0, 1, 0], [], []>} : vector<8x16xf32>, vector<8x16xf32>, vector<8x8xf32> -> vector<8x8xf32>
      %c0_16 = arith.constant 0 : index
      %c0_17 = arith.constant 0 : index
      %29 = vector.load %arg13[%c0_16, %c0_17] : memref<8x1xf32, #tpu.memory_space<vmem>>, vector<8x1xf32>
      %cst_18 = arith.constant dense<0xFF800000> : vector<8xf32>
      %30 = vector.multi_reduction <maximumf>, %28, %cst_18 [1] : vector<8x8xf32> to vector<8xf32>
      %31 = vector.shape_cast %30 : vector<8xf32> to vector<8x1xf32>
      %32 = arith.maximumf %29, %31 : vector<8x1xf32>
      %33 = arith.subf %29, %32 : vector<8x1xf32>
      %34 = math.exp %33 : vector<8x1xf32>
      %35 = vector.broadcast %32 : vector<8x1xf32> to vector<8x8xf32>
      %36 = arith.subf %28, %35 : vector<8x8xf32>
      %37 = math.exp %36 : vector<8x8xf32>
      %c0_19 = arith.constant 0 : index
      %c0_20 = arith.constant 0 : index
      %38 = vector.load %arg14[%c0_19, %c0_20] : memref<8x1xf32, #tpu.memory_space<vmem>>, vector<8x1xf32>
      %39 = arith.mulf %34, %38 : vector<8x1xf32>
      %cst_21 = arith.constant dense<0.000000e+00> : vector<8xf32>
      %40 = vector.multi_reduction <add>, %37, %cst_21 [1] : vector<8x8xf32> to vector<8xf32>
      %41 = vector.shape_cast %40 : vector<8xf32> to vector<8x1xf32>
      %42 = arith.addf %39, %41 : vector<8x1xf32>
      %c0_22 = arith.constant 0 : index
      %c0_23 = arith.constant 0 : index
      %43 = vector.load %arg14[%c0_22, %c0_23] : memref<8x1xf32, #tpu.memory_space<vmem>>, vector<8x1xf32>
      tpu.vector_store %arg14[%c0_22, %c0_23], %42 {strides = array<i32>} : memref<8x1xf32, #tpu.memory_space<vmem>>, vector<8x1xf32>,
      %c0_24 = arith.constant 0 : index
      %c0_25 = arith.constant 0 : index
      %44 = vector.load %arg15[%c0_24, %c0_25] : memref<8x16xf32, #tpu.memory_space<vmem>>, vector<8x16xf32>
      %45 = vector.broadcast %34 : vector<8x1xf32> to vector<8x16xf32>
      %46 = arith.mulf %45, %44 : vector<8x16xf32>
      %c0_26 = arith.constant 0 : index
      %c0_27 = arith.constant 0 : index
      %c0_28 = arith.constant 0 : index
      %c0_29 = arith.constant 0 : index
      %47 = vector.load %arg7[%c0_26, %c0_27, %c0_28, %c0_29] : memref<1x1x8x16xf32, #tpu.memory_space<vmem>>, vector<1x1x8x16xf32>
      %48 = vector.shape_cast %47 : vector<1x1x8x16xf32> to vector<8x16xf32>
      %cst_30 = arith.constant dense<0.000000e+00> : vector<8x16xf32>
      %49 = tpu.matmul %37, %48, %cst_30 {dimension_numbers = #tpu.dot_dimension_numbers<[1], [0], [0], [1], [0, 0, 1, 1], [], []>} : vector<8x8xf32>, vector<8x16xf32>, vector<8x16xf32> -> vector<8x16xf32>
      %50 = arith.addf %46, %49 : vector<8x16xf32>
      %c0_31 = arith.constant 0 : index
      %c0_32 = arith.constant 0 : index
      %51 = vector.load %arg15[%c0_31, %c0_32] : memref<8x16xf32, #tpu.memory_space<vmem>>, vector<8x16xf32>
      tpu.vector_store %arg15[%c0_31, %c0_32], %50 {strides = array<i32>} : memref<8x16xf32, #tpu.memory_space<vmem>>, vector<8x16xf32>,
      %c0_33 = arith.constant 0 : index
      %c0_34 = arith.constant 0 : index
      %52 = vector.load %arg13[%c0_33, %c0_34] : memref<8x1xf32, #tpu.memory_space<vmem>>, vector<8x1xf32>
      tpu.vector_store %arg13[%c0_33, %c0_34], %32 {strides = array<i32>} : memref<8x1xf32, #tpu.memory_space<vmem>>, vector<8x1xf32>,
    } else {
    }
    %c1_i32_4 = arith.constant 1 : i32
    %9 = arith.cmpi eq, %arg2, %c1_i32_4 : i32
    %10 = arith.extui %9 : i1 to i32
    %c0_i32_5 = arith.constant 0 : i32
    %11 = arith.cmpi ne, %10, %c0_i32_5 : i32
    scf.if %11 {
      %c0 = arith.constant 0 : index
      %c0_6 = arith.constant 0 : index
      %12 = vector.load %arg15[%c0, %c0_6] : memref<8x16xf32, #tpu.memory_space<vmem>>, vector<8x16xf32>
      %c0_7 = arith.constant 0 : index
      %c0_8 = arith.constant 0 : index
      %13 = vector.load %arg14[%c0_7, %c0_8] : memref<8x1xf32, #tpu.memory_space<vmem>>, vector<8x1xf32>
      %14 = tpu.reciprocal %13 {approx = true} : vector<8x1xf32> -> vector<8x1xf32>
      %15 = vector.broadcast %14 : vector<8x1xf32> to vector<8x16xf32>
      %16 = arith.mulf %12, %15 : vector<8x16xf32>
      %c0_9 = arith.constant 0 : index
      %c0_10 = arith.constant 0 : index
      %c0_11 = arith.constant 0 : index
      %c0_12 = arith.constant 0 : index
      %17 = vector.load %arg11[%c0_9, %c0_10, %c0_11, %c0_12] : memref<1x1x8x16xf32, #tpu.memory_space<vmem>>, vector<1x1x8x16xf32>
      %18 = vector.shape_cast %17 : vector<1x1x8x16xf32> to vector<8x16xf32>
      %19 = vector.shape_cast %16 : vector<8x16xf32> to vector<1x1x8x16xf32>
      tpu.vector_store %arg11[%c0_9, %c0_10, %c0_11, %c0_12], %19 {strides = array<i32>} : memref<1x1x8x16xf32, #tpu.memory_space<vmem>>, vector<1x1x8x16xf32>,
    } else {
    }
    return
  }
  func.func @transform_0(%arg0: i32, %arg1: i32, %arg2: i32) -> (i32, i32, i32, i32) {
    %c0_i32 = arith.constant 0 : i32
    %c0_i32_0 = arith.constant 0 : i32
    %c0_i32_1 = arith.constant 0 : i32
    return %arg0, %arg1, %c0_i32, %c0_i32_0 : i32, i32, i32, i32
  }
  func.func @transform_1(%arg0: i32, %arg1: i32, %arg2: i32) -> (i32, i32, i32, i32) {
    %c0_i32 = arith.constant 0 : i32
    %0 = arith.minsi %arg2, %c0_i32 : i32
    %c0_i32_0 = arith.constant 0 : i32
    %c0_i32_1 = arith.constant 0 : i32
    return %arg0, %arg1, %0, %c0_i32_0 : i32, i32, i32, i32
  }
  func.func @transform_2(%arg0: i32, %arg1: i32, %arg2: i32) -> (i32, i32, i32, i32) {
    %c0_i32 = arith.constant 0 : i32
    %0 = arith.minsi %arg2, %c0_i32 : i32
    %c0_i32_0 = arith.constant 0 : i32
    %c0_i32_1 = arith.constant 0 : i32
    return %arg0, %arg1, %0, %c0_i32_0 : i32, i32, i32, i32
  }
  func.func @transform_3(%arg0: i32, %arg1: i32, %arg2: i32) -> (i32, i32, i32, i32) {
    %c1_i32 = arith.constant 1 : i32
    %0 = arith.subi %arg2, %c1_i32 : i32
    %c0_i32 = arith.constant 0 : i32
    %1 = arith.maxsi %0, %c0_i32 : i32
    %c0_i32_0 = arith.constant 0 : i32
    %c0_i32_1 = arith.constant 0 : i32
    return %arg0, %arg1, %1, %c0_i32_0 : i32, i32, i32, i32
  }
  func.func @transform_4(%arg0: i32, %arg1: i32, %arg2: i32) -> (i32, i32, i32, i32) {
    %c1_i32 = arith.constant 1 : i32
    %0 = arith.subi %arg2, %c1_i32 : i32
    %c0_i32 = arith.constant 0 : i32
    %1 = arith.maxsi %0, %c0_i32 : i32
    %c0_i32_0 = arith.constant 0 : i32
    %c0_i32_1 = arith.constant 0 : i32
    return %arg0, %arg1, %1, %c0_i32_0 : i32, i32, i32, i32
  }
  func.func @transform_5(%arg0: i32, %arg1: i32, %arg2: i32) -> (i32, i32) {
    %c0_i32 = arith.constant 0 : i32
    %c0_i32_0 = arith.constant 0 : i32
    %c0_i32_1 = arith.constant 0 : i32
    return %c0_i32, %c0_i32_0 : i32, i32
  }
  func.func @transform_6(%arg0: i32, %arg1: i32, %arg2: i32) -> (i32, i32) {
    %c0_i32 = arith.constant 0 : i32
    %c0_i32_0 = arith.constant 0 : i32
    %c0_i32_1 = arith.constant 0 : i32
    return %c0_i32, %c0_i32_0 : i32, i32
  }
  func.func @transform_7(%arg0: i32, %arg1: i32, %arg2: i32) -> (i32, i32) {
    %c0_i32 = arith.constant 0 : i32
    %c0_i32_0 = arith.constant 0 : i32
    %c0_i32_1 = arith.constant 0 : i32
    return %c0_i32, %c0_i32_0 : i32, i32
  }
  func.func @transform_8(%arg0: i32, %arg1: i32, %arg2: i32) -> (i32, i32, i32, i32) {
    %c0_i32 = arith.constant 0 : i32
    %c0_i32_0 = arith.constant 0 : i32
    %c0_i32_1 = arith.constant 0 : i32
    return %arg0, %arg1, %c0_i32, %c0_i32_0 : i32, i32, i32, i32
  }
}

module attributes {stable_mosaic.version = 11 : i64} {
  func.func @_linear_gr_kernel(%arg0: i32, %arg1: i32, %arg2: i32, %arg3: i32, %arg4: memref<1x8x32xf32, #tpu.memory_space<vmem>>, %arg5: memref<32x32xf32, #tpu.memory_space<vmem>>, %arg6: memref<1x32xf32, #tpu.memory_space<vmem>>, %arg7: memref<1x8x32xf32, #tpu.memory_space<vmem>>, %arg8: memref<1x1x32xf32, #tpu.memory_space<vmem>>, %arg9: memref<1x8x32xf32, #tpu.memory_space<vmem>>, %arg10: memref<8x32xf32, #tpu.memory_space<vmem>>) attributes {dimension_semantics = [#tpu.dimension_semantics<parallel>, #tpu.dimension_semantics<parallel>, #tpu.dimension_semantics<parallel>, #tpu.dimension_semantics<arbitrary>], iteration_bounds = array<i64: 2, 1, 1, 1>, scalar_prefetch = 0 : i64, scratch_operands = 1 : i64, tpu.core_type = #tpu.core_type<tc>, window_params = [{transform_indices = @transform_0, window_bounds = array<i64: 1, 8, 32>}, {transform_indices = @transform_1, window_bounds = array<i64: 32, 32>}, {transform_indices = @transform_2, window_bounds = array<i64: 1, 32>}, {transform_indices = @transform_3, window_bounds = array<i64: 1, 8, 32>}, {transform_indices = @transform_4, window_bounds = array<i64: 1, 1, 32>}, {transform_indices = @transform_5, window_bounds = array<i64: 1, 8, 32>}]} {
    %c0_i32 = arith.constant 0 : i32
    %0 = arith.cmpi eq, %arg3, %c0_i32 : i32
    %1 = arith.extui %0 : i1 to i32
    %c0_i32_0 = arith.constant 0 : i32
    %2 = arith.cmpi ne, %1, %c0_i32_0 : i32
    scf.if %2 {
      %cst_11 = arith.constant 0.000000e+00 : f32
      %13 = vector.broadcast %cst_11 : f32 to vector<8x32xf32>
      %c0_12 = arith.constant 0 : index
      %c0_13 = arith.constant 0 : index
      %14 = vector.load %arg10[%c0_12, %c0_13] : memref<8x32xf32, #tpu.memory_space<vmem>>, vector<8x32xf32>
      tpu.vector_store %arg10[%c0_12, %c0_13], %13 {strides = array<i32>} : memref<8x32xf32, #tpu.memory_space<vmem>>, vector<8x32xf32>,
    } else {
    }
    %c0 = arith.constant 0 : index
    %c0_1 = arith.constant 0 : index
    %3 = vector.load %arg10[%c0, %c0_1] : memref<8x32xf32, #tpu.memory_space<vmem>>, vector<8x32xf32>
    %c0_2 = arith.constant 0 : index
    %c0_3 = arith.constant 0 : index
    %c0_4 = arith.constant 0 : index
    %4 = vector.load %arg4[%c0_2, %c0_3, %c0_4] : memref<1x8x32xf32, #tpu.memory_space<vmem>>, vector<1x8x32xf32>
    %5 = vector.shape_cast %4 : vector<1x8x32xf32> to vector<8x32xf32>
    %c0_5 = arith.constant 0 : index
    %c0_6 = arith.constant 0 : index
    %6 = vector.load %arg5[%c0_5, %c0_6] : memref<32x32xf32, #tpu.memory_space<vmem>>, vector<32x32xf32>
    %cst = arith.constant dense<0.000000e+00> : vector<8x32xf32>
    %7 = tpu.matmul %5, %6, %cst {dimension_numbers = #tpu.dot_dimension_numbers<[1], [0], [0], [1], [0, 0, 1, 1], [], []>} : vector<8x32xf32>, vector<32x32xf32>, vector<8x32xf32> -> vector<8x32xf32>
    %8 = arith.addf %3, %7 : vector<8x32xf32>
    %c0_7 = arith.constant 0 : index
    %c0_8 = arith.constant 0 : index
    %9 = vector.load %arg10[%c0_7, %c0_8] : memref<8x32xf32, #tpu.memory_space<vmem>>, vector<8x32xf32>
    tpu.vector_store %arg10[%c0_7, %c0_8], %8 {strides = array<i32>} : memref<8x32xf32, #tpu.memory_space<vmem>>, vector<8x32xf32>,
    %c0_i32_9 = arith.constant 0 : i32
    %10 = arith.cmpi eq, %arg3, %c0_i32_9 : i32
    %11 = arith.extui %10 : i1 to i32
    %c0_i32_10 = arith.constant 0 : i32
    %12 = arith.cmpi ne, %11, %c0_i32_10 : i32
    scf.if %12 {
      %c0_11 = arith.constant 0 : index
      %c0_12 = arith.constant 0 : index
      %13 = vector.load %arg10[%c0_11, %c0_12] : memref<8x32xf32, #tpu.memory_space<vmem>>, vector<8x32xf32>
      %c0_13 = arith.constant 0 : index
      %c0_14 = arith.constant 0 : index
      %14 = vector.load %arg6[%c0_13, %c0_14] : memref<1x32xf32, #tpu.memory_space<vmem>>, vector<1x32xf32>
      %15 = vector.broadcast %14 : vector<1x32xf32> to vector<8x32xf32>
      %16 = arith.addf %13, %15 : vector<8x32xf32>
      %c0_15 = arith.constant 0 : index
      %c0_16 = arith.constant 0 : index
      %c0_17 = arith.constant 0 : index
      %17 = vector.load %arg7[%c0_15, %c0_16, %c0_17] : memref<1x8x32xf32, #tpu.memory_space<vmem>>, vector<1x8x32xf32>
      %18 = vector.shape_cast %17 : vector<1x8x32xf32> to vector<8x32xf32>
      %c0_18 = arith.constant 0 : index
      %c0_19 = arith.constant 0 : index
      %c0_20 = arith.constant 0 : index
      %19 = vector.load %arg8[%c0_18, %c0_19, %c0_20] : memref<1x1x32xf32, #tpu.memory_space<vmem>>, vector<1x1x32xf32>
      %20 = vector.shape_cast %19 : vector<1x1x32xf32> to vector<1x32xf32>
      %21 = vector.broadcast %20 : vector<1x32xf32> to vector<8x32xf32>
      %22 = arith.mulf %21, %16 : vector<8x32xf32>
      %23 = arith.addf %18, %22 : vector<8x32xf32>
      %c0_21 = arith.constant 0 : index
      %c0_22 = arith.constant 0 : index
      %c0_23 = arith.constant 0 : index
      %24 = vector.load %arg9[%c0_21, %c0_22, %c0_23] : memref<1x8x32xf32, #tpu.memory_space<vmem>>, vector<1x8x32xf32>
      %25 = vector.shape_cast %24 : vector<1x8x32xf32> to vector<8x32xf32>
      %26 = vector.shape_cast %23 : vector<8x32xf32> to vector<1x8x32xf32>
      tpu.vector_store %arg9[%c0_21, %c0_22, %c0_23], %26 {strides = array<i32>} : memref<1x8x32xf32, #tpu.memory_space<vmem>>, vector<1x8x32xf32>,
    } else {
    }
    return
  }
  func.func @transform_0(%arg0: i32, %arg1: i32, %arg2: i32, %arg3: i32) -> (i32, i32, i32) {
    %c0_i32 = arith.constant 0 : i32
    return %arg0, %arg1, %arg3 : i32, i32, i32
  }
  func.func @transform_1(%arg0: i32, %arg1: i32, %arg2: i32, %arg3: i32) -> (i32, i32) {
    %c0_i32 = arith.constant 0 : i32
    return %arg3, %arg2 : i32, i32
  }
  func.func @transform_2(%arg0: i32, %arg1: i32, %arg2: i32, %arg3: i32) -> (i32, i32) {
    %c0_i32 = arith.constant 0 : i32
    %c0_i32_0 = arith.constant 0 : i32
    return %c0_i32, %arg2 : i32, i32
  }
  func.func @transform_3(%arg0: i32, %arg1: i32, %arg2: i32, %arg3: i32) -> (i32, i32, i32) {
    %c0_i32 = arith.constant 0 : i32
    return %arg0, %arg1, %arg2 : i32, i32, i32
  }
  func.func @transform_4(%arg0: i32, %arg1: i32, %arg2: i32, %arg3: i32) -> (i32, i32, i32) {
    %c0_i32 = arith.constant 0 : i32
    %c0_i32_0 = arith.constant 0 : i32
    return %arg0, %c0_i32, %arg2 : i32, i32, i32
  }
  func.func @transform_5(%arg0: i32, %arg1: i32, %arg2: i32, %arg3: i32) -> (i32, i32, i32) {
    %c0_i32 = arith.constant 0 : i32
    return %arg0, %arg1, %arg2 : i32, i32, i32
  }
}

</mosaic_0001>

<llo_original>
// kernel: mmdit_forward.18
$region0: #{mmdit_forward.18}
  #allocation0 [shape = 'u32[]', space=smem, size = 0x4, offset = 0x4, fixed_abs, tag = 'smem constant byte address 0x4 - core index']
  #allocation1 [shape = 'u32[144,128]{1,0:T(1,128)}', space=vmem, size = 0x12000, scoped, tag = 'internal scratch']
  %s0 = inlined_call_operand.vmem [shape: f32[2,8,32], index: 0, kind: input, shape index: {}]
  %s1 = inlined_call_operand.vmem [shape: f32[2,1,32], index: 1, kind: input, shape index: {}]
  %s2 = inlined_call_operand.vmem [shape: f32[2,1,32], index: 2, kind: input, shape index: {}]
  %s3 = inlined_call_operand.vmem [shape: f32[2,8,32], index: 3, kind: output, shape index: {}]
  %s4 = sld [smem:[#allocation0]]
  $region45: #{mmdit_forward.18} parent=0
    _
  %s6 = ssub.s32 1, %s4
  %s7 = scalar_select 0, %s6, %s4
  loop: start=0, step=1, limit=4
  $region2: #{mmdit_forward.18} parent=0 // loop_pre_header
    _
  $region3: #{mmdit_forward.18} parent=0 // loop_header
    %s9 = sphi 0, %s13
    %p10 = scmp.ge.s32.totalorder %s9, 4
    %s16 = sphi 0, %s28
    %s17 = sphi 0, %s24
    %s18 = sphi 0, %s16
    %s19 = sphi 0, %s17
    %s20 = sphi 0, %s18
    %s21 = sphi 0, %s19
    %s33 = sphi 0, %s35
    %s36 = sphi 0, %s33
    %s37 = sphi 0, %s36
    %s53 = sphi 0, %s37
    %s59 = sphi 0, %s61
    %s62 = sphi 0, %s59
    %s63 = sphi 0, %s62
    %s79 = sphi 0, %s63
    %s85 = sphi 0, %s87
    %s88 = sphi 0, %s85
    %s89 = sphi 0, %s88
    %s105 = sphi 0, %s89
    %s113 = sphi 0, %s115
    %s116 = sphi 0, %s113
    %s117 = sphi 0, %s116
    %s133 = sphi 0, %s117
  $region4: #{mmdit_forward.18} parent=0 // loop_header_branch
    %12 = sbr.rel (%p10) target = $region8
  $region5: #{mmdit_forward.18} parent=0 // loop_body
    %s14 = ssub.s32 %s9, 1
    %s15 = ssub.s32 %s9, 2
    %s22 = sadd.s32 1, %s17
    %p23 = scmp.ge.s32.totalorder %s22, 1
    %s24 = scalar_select %p23, 0, %s22
    %s25 = sadd.s32 1, %s16
    %s26 = scalar_select %p23, %s25, %s16
    %p27 = scmp.ge.s32.totalorder %s26, 2
    %s28 = scalar_select %p27, 0, %s26
    %s29 = ssub.s32 %s16, %s28
    %s30 = ssub.s32 %s17, %s24
    %s31 = sor.u32 %s29, %s30
    %p32 = scmp.eq.s32.totalorder %s31, 0
    %s34 = sadd.s32 %s33, 1
    %s35 = scalar_select %p32, %s33, %s34
    %p38 = pneg %p32
    %p39 = scmp.eq.s32.totalorder %s9, 1
    %p40 = por %p38, %p39
    %p41 = scmp.ne.s32.totalorder %s33, %s36
    %p42 = scmp.eq.s32.totalorder %s9, 0
    %p43 = por %p41, %p42
    %p44 = scmp.ne.s32.totalorder %s33, %s36
    %p45 = scmp.eq.s32.totalorder %s14, 1
    %p46 = por %p44, %p45
    %p47 = scmp.ne.s32.totalorder %s36, %s37
    %p48 = scmp.eq.s32.totalorder %s14, 0
    %p49 = por %p47, %p48
    %p50 = scmp.ne.s32.totalorder %s36, %s37
    %p51 = scmp.eq.s32.totalorder %s15, 1
    %p52 = por %p50, %p51
    %p54 = scmp.ne.s32.totalorder %s37, %s53
    %p55 = scmp.eq.s32.totalorder %s15, 0
    %p56 = por %p54, %p55
    %s57 = ssub.s32 %s16, %s28
    %p58 = scmp.eq.s32.totalorder %s57, 0
    %s60 = sadd.s32 %s59, 1
    %s61 = scalar_select %p58, %s59, %s60
    %p64 = pneg %p58
    %p65 = scmp.eq.s32.totalorder %s9, 1
    %p66 = por %p64, %p65
    %p67 = scmp.ne.s32.totalorder %s59, %s62
    %p68 = scmp.eq.s32.totalorder %s9, 0
    %p69 = por %p67, %p68
    %p70 = scmp.ne.s32.totalorder %s59, %s62
    %p71 = scmp.eq.s32.totalorder %s14, 1
    %p72 = por %p70, %p71
    %p73 = scmp.ne.s32.totalorder %s62, %s63
    %p74 = scmp.eq.s32.totalorder %s14, 0
    %p75 = por %p73, %p74
    %p76 = scmp.ne.s32.totalorder %s62, %s63
    %p77 = scmp.eq.s32.totalorder %s15, 1
    %p78 = por %p76, %p77
    %p80 = scmp.ne.s32.totalorder %s63, %s79
    %p81 = scmp.eq.s32.totalorder %s15, 0
    %p82 = por %p80, %p81
    %s83 = ssub.s32 %s16, %s28
    %p84 = scmp.eq.s32.totalorder %s83, 0
    %s86 = sadd.s32 %s85, 1
    %s87 = scalar_select %p84, %s85, %s86
    %p90 = pneg %p84
    %p91 = scmp.eq.s32.totalorder %s9, 1
    %p92 = por %p90, %p91
    %p93 = scmp.ne.s32.totalorder %s85, %s88
    %p94 = scmp.eq.s32.totalorder %s9, 0
    %p95 = por %p93, %p94
    %p96 = scmp.ne.s32.totalorder %s85, %s88
    %p97 = scmp.eq.s32.totalorder %s14, 1
    %p98 = por %p96, %p97
    %p99 = scmp.ne.s32.totalorder %s88, %s89
    %p100 = scmp.eq.s32.totalorder %s14, 0
    %p101 = por %p99, %p100
    %p102 = scmp.ne.s32.totalorder %s88, %s89
    %p103 = scmp.eq.s32.totalorder %s15, 1
    %p104 = por %p102, %p103
    %p106 = scmp.ne.s32.totalorder %s89, %s105
    %p107 = scmp.eq.s32.totalorder %s15, 0
    %p108 = por %p106, %p107
    %s109 = ssub.s32 %s16, %s28
    %s110 = ssub.s32 %s17, %s24
    %s111 = sor.u32 %s109, %s110
    %p112 = scmp.eq.s32.totalorder %s111, 0
    %s114 = sadd.s32 %s113, 1
    %s115 = scalar_select %p112, %s113, %s114
    %p118 = pneg %p112
    %p119 = scmp.eq.s32.totalorder %s9, 1
    %p120 = por %p118, %p119
    %p121 = scmp.ne.s32.totalorder %s113, %s116
    %p122 = scmp.eq.s32.totalorder %s9, 0
    %p123 = por %p121, %p122
    %p124 = scmp.ne.s32.totalorder %s113, %s116
    %p125 = scmp.eq.s32.totalorder %s14, 1
    %p126 = por %p124, %p125
    %p127 = scmp.ne.s32.totalorder %s116, %s117
    %p128 = scmp.eq.s32.totalorder %s14, 0
    %p129 = por %p127, %p128
    %p130 = scmp.ne.s32.totalorder %s116, %s117
    %p131 = scmp.eq.s32.totalorder %s15, 1
    %p132 = por %p130, %p131
    %p134 = scmp.ne.s32.totalorder %s117, %s133
    %p135 = scmp.eq.s32.totalorder %s15, 0
    %p136 = por %p134, %p135
    %p137 = scmp.le.s32.totalorder 1, %s9
    %p138 = scmp.lt.s32.totalorder %s9, 3
    %p139 = pnand %p137, %p138
    %p140 = pneg %p139
    // Predicated region
    $region9: #{mmdit_forward.18} parent=5 // pred_check
      _
    $region10: #{mmdit_forward.18} parent=5 // pred_check_branch
      %142 = sbr.rel (%p139) target = $region12
    $region11: #{mmdit_forward.18} parent=5 // pred_region
      %s143 = ssub.s32 %s9, 1
    $region12: #{mmdit_forward.18} parent=5 // pred_fallthru
      _
    %p144 = scmp.lt.s32.totalorder %s9, 2
    // Predicated region
    $region13: #{mmdit_forward.18} parent=5 // pred_check
      %p145 = pneg %p144
    $region14: #{mmdit_forward.18} parent=5 // pred_check_branch
      %147 = sbr.rel (%p145) target = $region16
    $region15: #{mmdit_forward.18} parent=5 // pred_region
      // Predicated region
      $region17: #{mmdit_forward.18} parent=15 // pred_check
        %p148 = pneg %p43
      $region18: #{mmdit_forward.18} parent=15 // pred_check_branch
        %150 = sbr.rel (%p148) target = $region20
      $region19: #{mmdit_forward.18} parent=15 // pred_region
        %p151 = scmp.lt.s32.totalorder %s16, 1
        %s152 = scalar_select %p151, %s16, 1
        %p153 = scmp.lt.s32.totalorder %s17, 0
        %s154 = scalar_select %p153, %s17, 0
        %s155 = sadd.s32 %s154, %s152
        %s156 = smul.addr %s155, 8
        %s157 = scalar_lea.vmem %s0, %s156
      $region20: #{mmdit_forward.18} parent=15 // pred_fallthru
        _
      // Predicated region
      $region21: #{mmdit_forward.18} parent=15 // pred_check
        %p158 = pneg %p69
      $region22: #{mmdit_forward.18} parent=15 // pred_check_branch
        %160 = sbr.rel (%p158) target = $region24
      $region23: #{mmdit_forward.18} parent=15 // pred_region
        %p161 = scmp.lt.s32.totalorder %s16, 1
        %s162 = scalar_select %p161, %s16, 1
        %s163 = scalar_lea.vmem %s1, %s162
      $region24: #{mmdit_forward.18} parent=15 // pred_fallthru
        _
      // Predicated region
      $region25: #{mmdit_forward.18} parent=15 // pred_check
        %p164 = pneg %p95
      $region26: #{mmdit_forward.18} parent=15 // pred_check_branch
        %166 = sbr.rel (%p164) target = $region28
      $region27: #{mmdit_forward.18} parent=15 // pred_region
        %p167 = scmp.lt.s32.totalorder %s16, 1
        %s168 = scalar_select %p167, %s16, 1
        %s169 = scalar_lea.vmem %s2, %s168
      $region28: #{mmdit_forward.18} parent=15 // pred_fallthru
        _
    $region16: #{mmdit_forward.18} parent=5 // pred_fallthru
      _
    %p170 = scmp.le.s32.totalorder 1, %s9
    %p171 = scmp.lt.s32.totalorder %s9, 3
    %p172 = pnand %p170, %p171
    %p173 = pneg %p172
    // Predicated region
    $region29: #{mmdit_forward.18} parent=5 // pred_check
      _
    $region30: #{mmdit_forward.18} parent=5 // pred_check_branch
      %175 = sbr.rel (%p172) target = $region32
    $region31: #{mmdit_forward.18} parent=5 // pred_region
      %s176 = ssub.s32 %s9, 1
      %p177 = scmp.lt.s32.totalorder %s18, 1
      %s178 = scalar_select %p177, %s18, 1
      %p179 = scmp.lt.s32.totalorder %s19, 0
      %s180 = scalar_select %p179, %s19, 0
      %s181 = sadd.s32 %s180, %s178
      %s182 = smul.addr %s181, 8
      %s183 = scalar_lea.vmem %s0, %s182
      %p184 = pneg %p49
      %p185 = pneg %p46
      %p186 = scmp.lt.s32.totalorder %s18, 1
      %s187 = scalar_select %p186, %s18, 1
      %s188 = scalar_lea.vmem %s1, %s187
      %p189 = pneg %p75
      %p190 = pneg %p72
      %p191 = scmp.lt.s32.totalorder %s18, 1
      %s192 = scalar_select %p191, %s18, 1
      %s193 = scalar_lea.vmem %s2, %s192
      %p194 = pneg %p101
      %p195 = pneg %p98
      %p196 = pneg %p129
      %p197 = pneg %p126
      %p198 = scmp.lt.s32.totalorder %s18, 1
      %s199 = scalar_select %p198, %s18, 1
      %p200 = scmp.lt.s32.totalorder %s19, 0
      %s201 = scalar_select %p200, %s19, 0
      %s202 = sadd.s32 %s201, %s199
      %s203 = smul.addr %s202, 8
      %s204 = scalar_lea.vmem %s3, %s203
      %p205 = scmp.lt.s32.totalorder %s18, 1
      %s206 = scalar_select %p205, %s18, 1
      %p207 = scmp.lt.s32.totalorder %s19, 0
      %s208 = scalar_select %p207, %s19, 0
      %s209 = sadd.s32 %s208, %s206
      %s210 = smul.addr %s209, 8
      %s211 = scalar_lea.vmem %s0, %s210
      %p212 = scmp.lt.s32.totalorder %s18, 1
      %s213 = scalar_select %p212, %s18, 1
      %s214 = scalar_lea.vmem %s1, %s213
      %p215 = scmp.lt.s32.totalorder %s18, 1
      %s216 = scalar_select %p215, %s18, 1
      %s217 = scalar_lea.vmem %s2, %s216
      %p218 = scmp.lt.s32.totalorder %s18, 1
      %s219 = scalar_select %p218, %s18, 1
      %p220 = scmp.lt.s32.totalorder %s19, 0
      %s221 = scalar_select %p220, %s19, 0
      %s222 = sadd.s32 %s221, %s219
      %s223 = smul.addr %s222, 8
      %s224 = scalar_lea.vmem %s3, %s223
      %v225 = vld [vmem:[%s211] sm:$0xff]
      %vm226 = vcmask 261120
      %v227 = vsel %vm226, %v225, 0.0
      %228 = vadd.xlane.f32.xlu0 %v227
      %v229 = vpop.xlane.xlu0 %228
      %v230 = vrcp.pop 32.0
      %v231 = vmul.f32 %v229, %v230
      %v232 = vsub.f32 %v225, %v231
      %v233 = vmul.f32 %v232, %v232
      %v234 = vsel %vm226, %v233, 0.0
      %235 = vadd.xlane.f32.xlu0 %v234
      %v236 = vpop.xlane.xlu0 %235
      %v237 = vmul.f32 %v236, %v230
      %v238 = vadd.f32 %v237, 1e-06
      %v239 = vrsqrt.pop %v238
      %v240 = vmul.f32 %v232, %v239
      %v241 = vld [vmem:[%s214] sm:$0x1]
      %v242 = vadd.f32 %v241, 1.0
      %v244 = vlaneseq
      %v245 = vshrl.u32 %v244, 7
      %v246 = vsub.s32 0, %v245
      %v247 = vrot.slane %v242, %v246
      %v249 = vmul.f32 %v240, %v247
      %v250 = vld [vmem:[%s217] sm:$0x1]
      %v252 = vlaneseq
      %v253 = vshrl.u32 %v252, 7
      %v254 = vsub.s32 0, %v253
      %v255 = vrot.slane %v250, %v254
      %v257 = vadd.f32 %v249, %v255
      %258 = vst.msk [vmem:[%s224] sm:$0xff] %vm226, %v257
      %p259 = scmp.lt.s32.totalorder %s18, 1
      %s260 = scalar_select %p259, %s18, 1
      %p261 = scmp.lt.s32.totalorder %s19, 0
      %s262 = scalar_select %p261, %s19, 0
      %s263 = sadd.s32 %s262, %s260
      %s264 = smul.addr %s263, 8
      %s265 = scalar_lea.vmem %s3, %s264
      // Predicated region
      $region33: #{mmdit_forward.18} parent=31 // pred_check
        %p266 = pneg %p126
      $region34: #{mmdit_forward.18} parent=31 // pred_check_branch
        %268 = sbr.rel (%p266) target = $region36
      $region35: #{mmdit_forward.18} parent=31 // pred_region
        _
      $region36: #{mmdit_forward.18} parent=31 // pred_fallthru
        _
    $region32: #{mmdit_forward.18} parent=5 // pred_fallthru
      _
    %p269 = scmp.le.s32.totalorder 2, %s9
    // Predicated region
    $region37: #{mmdit_forward.18} parent=5 // pred_check
      %p270 = pneg %p269
    $region38: #{mmdit_forward.18} parent=5 // pred_check_branch
      %272 = sbr.rel (%p270) target = $region40
    $region39: #{mmdit_forward.18} parent=5 // pred_region
      %s273 = ssub.s32 %s9, 2
      // Predicated region
      $region41: #{mmdit_forward.18} parent=39 // pred_check
        %p274 = pneg %p132
      $region42: #{mmdit_forward.18} parent=39 // pred_check_branch
        %276 = sbr.rel (%p274) target = $region44
      $region43: #{mmdit_forward.18} parent=39 // pred_region
        %p277 = scmp.lt.s32.totalorder %s20, 1
        %s278 = scalar_select %p277, %s20, 1
        %p279 = scmp.lt.s32.totalorder %s21, 0
        %s280 = scalar_select %p279, %s21, 0
        %s281 = sadd.s32 %s280, %s278
        %s282 = smul.addr %s281, 8
        %s283 = scalar_lea.vmem %s3, %s282
      $region44: #{mmdit_forward.18} parent=39 // pred_fallthru
        _
    $region40: #{mmdit_forward.18} parent=5 // pred_fallthru
      _
  $region6: #{mmdit_forward.18} parent=0 // loop_footer
    %s13 = sadd.s32 1, %s9
  $region7: #{mmdit_forward.18} parent=0 // loop_footer_branch
    %8 = sbr.rel target = $region3
  $region8: #{mmdit_forward.18} parent=0 // loop_exit
    _

// kernel: mmdit_forward.20
$region0: #{mmdit_forward.20}
  #allocation0 [shape = 'u32[]', space=smem, size = 0x4, offset = 0x4, fixed_abs, tag = 'smem constant byte address 0x4 - core index']
  #allocation1 [shape = 'u32[144,128]{1,0:T(1,128)}', space=vmem, size = 0x12000, scoped, tag = 'internal scratch']
  #allocation2 [shape = 'f32[16,96]{1,0:T(8,128)}', space=vmem, size = 0x2000, scoped, tag = 'scratch operand']
  %s0 = inlined_call_operand.vmem [shape: f32[16,32], index: 0, kind: input, shape index: {}]
  %s1 = inlined_call_operand.vmem [shape: f32[32,96], index: 1, kind: input, shape index: {}]
  %s2 = inlined_call_operand.vmem [shape: f32[1,96], index: 2, kind: input, shape index: {}]
  %s3 = inlined_call_operand.vmem [shape: f32[16,96], index: 3, kind: output, shape index: {}]
  %s4 = sld [smem:[#allocation0]]
  $region30: #{mmdit_forward.20} parent=0
    _
  %s6 = ssub.s32 1, %s4
  %s7 = scalar_select 0, %s6, %s4
  // Predicated region
  $region2: #{mmdit_forward.20} parent=0 // pred_check
    _
  $region3: #{mmdit_forward.20} parent=0 // pred_check_branch
    %9 = sbr.rel (0) target = $region5
  $region4: #{mmdit_forward.20} parent=0 // pred_region
    _
  $region5: #{mmdit_forward.20} parent=0 // pred_fallthru
    _
  // Predicated region
  $region6: #{mmdit_forward.20} parent=0 // pred_check
    _
  $region7: #{mmdit_forward.20} parent=0 // pred_check_branch
    %11 = sbr.rel (0) target = $region9
  $region8: #{mmdit_forward.20} parent=0 // pred_region
    _
  $region9: #{mmdit_forward.20} parent=0 // pred_fallthru
    _
  // Predicated region
  $region10: #{mmdit_forward.20} parent=0 // pred_check
    _
  $region11: #{mmdit_forward.20} parent=0 // pred_check_branch
    %13 = sbr.rel (0) target = $region13
  $region12: #{mmdit_forward.20} parent=0 // pred_region
    _
  $region13: #{mmdit_forward.20} parent=0 // pred_fallthru
    _
  %p14 = scmp.eq.s32.totalorder 0, 0
  // Predicated region
  $region14: #{mmdit_forward.20} parent=0 // pred_check
    %p15 = pneg %p14
  $region15: #{mmdit_forward.20} parent=0 // pred_check_branch
    %17 = sbr.rel (%p15) target = $region17
  $region16: #{mmdit_forward.20} parent=0 // pred_region
    %vm18 = vcmask 785408
    %19 = vst.msk [vmem:[#allocation2] sm:$0xff] %vm18, 0.0
    %20 = vst.msk [vmem:[#allocation2 + $0x8] sm:$0xff] %vm18, 0.0
  $region17: #{mmdit_forward.20} parent=0 // pred_fallthru
    _
  %v21 = vld [vmem:[%s0] sm:$0xff]
  %v22 = vld [vmem:[%s0 + $0x8] sm:$0xff]
  %v23 = vld [vmem:[#allocation2] sm:$0xff]
  %v24 = vld [vmem:[#allocation2 + $0x8] sm:$0xff]
  %v25 = vld [vmem:[%s1] sm:$0xff]
  %v26 = vld [vmem:[%s1 + $0x8] sm:$0xff]
  %v27 = vld [vmem:[%s1 + $0x10] sm:$0xff]
  %v28 = vld [vmem:[%s1 + $0x18] sm:$0xff]
  %vm29 = vcmask 261120
  %v31 = vsel %vm29, %v21, 0
  %v34 = vsel %vm29, %v22, 0
  %36 = vmatprep.subr.mxu0 0.0
  %37 = vmatpush1.msra.mxu0 %v25
  %38 = vmatprep.subr.mxu0 0.0
  %39 = vmatpush1.msra.mxu0 %v26
  %40 = vmatprep.subr.mxu0 0.0
  %41 = vmatpush1.msra.mxu0 %v27
  %42 = vmatprep.subr.mxu0 0.0
  %43 = vmatpush1.msra.mxu0 %v28
  %44 = vmatprep.subr.mxu0 0.0
  %45 = vmatpush1.msra.mxu0 0.0
  %46 = vmatprep.subr.mxu0 0.0
  %47 = vmatpush1.msra.mxu0 0.0
  %48 = vmatprep.subr.mxu0 0.0
  %49 = vmatpush1.msra.mxu0 0.0
  %50 = vmatprep.subr.mxu0 0.0
  %51 = vmatpush1.msra.mxu0 0.0
  %52 = vmatprep.subr.mxu0 0.0
  %53 = vmatpush1.msra.mxu0 0.0
  %54 = vmatprep.subr.mxu0 0.0
  %55 = vmatpush1.msra.mxu0 0.0
  %56 = vmatprep.subr.mxu0 0.0
  %57 = vmatpush1.msra.mxu0 0.0
  %58 = vmatprep.subr.mxu0 0.0
  %59 = vmatpush1.msra.mxu0 0.0
  %60 = vmatprep.subr.mxu0 0.0
  %61 = vmatpush1.msra.mxu0 0.0
  %62 = vmatprep.subr.mxu0 0.0
  %63 = vmatpush1.msra.mxu0 0.0
  %64 = vmatprep.subr.mxu0 0.0
  %65 = vmatpush1.msra.mxu0 0.0
  %66 = vmatprep.subr.mxu0 0.0
  %67 = vmatpush1.msra.mxu0 0.0
  %68 = vmatprep.subr.mxu0 0.0
  %69 = vmatpush1.msra.mxu0 0.0
  %70 = vmatprep.subr.mxu0 0.0
  %71 = vmatpush1.msra.mxu0 0.0
  %72 = vmatprep.subr.mxu0 0.0
  %73 = vmatpush1.msra.mxu0 0.0
  %74 = vmatprep.subr.mxu0 0.0
  %75 = vmatpush1.msra.mxu0 0.0
  %76 = vmatprep.subr.mxu0 0.0
  %77 = vmatpush1.msra.mxu0 0.0
  %78 = vmatprep.subr.mxu0 0.0
  %79 = vmatpush1.msra.mxu0 0.0
  %80 = vmatprep.subr.mxu0 0.0
  %81 = vmatpush1.msra.mxu0 0.0
  %82 = vmatprep.subr.mxu0 0.0
  %83 = vmatpush1.msra.mxu0 0.0
  %84 = vmatprep.subr.mxu0 0.0
  %85 = vmatpush1.msra.mxu0 0.0
  %86 = vmatprep.subr.mxu0 0.0
  %87 = vmatpush1.msra.mxu0 0.0
  %88 = vmatprep.subr.mxu0 0.0
  %89 = vmatpush1.msra.mxu0 0.0
  %90 = vmatprep.subr.mxu0 0.0
  %91 = vmatpush1.msra.mxu0 0.0
  %92 = vmatprep.subr.mxu0 0.0
  %93 = vmatpush1.msra.mxu0 0.0
  %94 = vmatprep.subr.mxu0 0.0
  %95 = vmatpush1.msra.mxu0 0.0
  %96 = vmatprep.subr.mxu0 0.0
  %97 = vmatpush1.msra.mxu0 0.0
  %98 = vmatprep.subr.mxu0 0.0
  %99 = vmatpush1.msra.mxu0 0.0
  %100 = vmatprep.mubr.f32.mxu0 0.0
  %101 = vmatmul.mubr.f32.gmra.mrb[0].mxu0 %v31
  %v102 = vpop.f32.mrb[0].mxu0
  %v103 = vadd.f32 0.0, %v102
  %v104 = vpop.f32.mrb[0].mxu0
  %105 = vmatprep.mubr.f32.mxu0 0.0
  %106 = vmatmul.mubr.f32.gmra.mrb[0].mxu0 %v34
  %v107 = vpop.f32.mrb[0].mxu0
  %v108 = vadd.f32 0.0, %v107
  %v109 = vpop.f32.mrb[0].mxu0
  %110 = vdwg.mxu0
  %v111 = vadd.f32 %v23, %v103
  %v112 = vadd.f32 %v24, %v108
  %vm113 = vcmask 785408
  %114 = vst.msk [vmem:[#allocation2] sm:$0xff] %vm113, %v111
  %115 = vst.msk [vmem:[#allocation2 + $0x8] sm:$0xff] %vm113, %v112
  // Predicated region
  $region18: #{mmdit_forward.20} parent=0 // pred_check
    %p116 = pneg %p14
  $region19: #{mmdit_forward.20} parent=0 // pred_check_branch
    %118 = sbr.rel (%p116) target = $region21
  $region20: #{mmdit_forward.20} parent=0 // pred_region
    %v119 = vld [vmem:[#allocation2] sm:$0xff]
    %v120 = vld [vmem:[#allocation2 + $0x8] sm:$0xff]
    %v121 = vld [vmem:[%s2] sm:$0x1]
    %v123 = vlaneseq
    %v124 = vshrl.u32 %v123, 7
    %v125 = vsub.s32 0, %v124
    %v126 = vrot.slane %v121, %v125
    %v128 = vadd.f32 %v119, %v126
    %v129 = vadd.f32 %v120, %v126
    %130 = vst.msk [vmem:[%s3] sm:$0xff] %vm113, %v128
    %131 = vst.msk [vmem:[%s3 + $0x8] sm:$0xff] %vm113, %v129
  $region21: #{mmdit_forward.20} parent=0 // pred_fallthru
    _
  // Predicated region
  $region22: #{mmdit_forward.20} parent=0 // pred_check
    _
  $region23: #{mmdit_forward.20} parent=0 // pred_check_branch
    %133 = sbr.rel (0) target = $region25
  $region24: #{mmdit_forward.20} parent=0 // pred_region
    _
  $region25: #{mmdit_forward.20} parent=0 // pred_fallthru
    _
  // Predicated region
  $region26: #{mmdit_forward.20} parent=0 // pred_check
    _
  $region27: #{mmdit_forward.20} parent=0 // pred_check_branch
    %135 = sbr.rel (0) target = $region29
  $region28: #{mmdit_forward.20} parent=0 // pred_region
    _
  $region29: #{mmdit_forward.20} parent=0 // pred_fallthru
    _

// kernel: mmdit_forward.16
$region0: #{mmdit_forward.16}
  #allocation0 [shape = 'u32[]', space=smem, size = 0x4, offset = 0x4, fixed_abs, tag = 'smem constant byte address 0x4 - core index']
  #allocation1 [shape = 'u32[144,128]{1,0:T(1,128)}', space=vmem, size = 0x12000, scoped, tag = 'internal scratch']
  #allocation2 [shape = 'f32[2,480]{1,0:T(2,128)}', space=vmem, size = 0x1000, scoped, tag = 'scratch operand']
  %s0 = inlined_call_operand.vmem [shape: f32[2,32], index: 0, kind: input, shape index: {}]
  %s1 = inlined_call_operand.hbm [shape: f32[32,480], index: 1, kind: input, shape index: {}]
  %s2 = inlined_call_operand.vmem [shape: f32[1,480], index: 2, kind: input, shape index: {}]
  %s3 = inlined_call_operand.vmem [shape: f32[2,480], index: 3, kind: output, shape index: {}]
  %s4 = sld [smem:[#allocation0]]
  $region34: #{mmdit_forward.16} parent=0
    _
  %s6 = ssub.s32 1, %s4
  %s7 = scalar_select 0, %s6, %s4
  $region1: #{mmdit_forward.16} parent=0
    #allocation3 [shape = 'u8[65536]{0}', space=vmem, size = 0x10000, scoped, tag = 'input window, operand 1, single buffered']
    #allocation4 [shape = 's32[1]{0}', space=sflag, size = 0x4, scoped, tag = 'scoped memory for mmdit_forward.16']
    %8 = vsyncpa [#allocation4], 0
    // Predicated region
    $region2: #{mmdit_forward.16} parent=1 // pred_check
      _
    $region3: #{mmdit_forward.16} parent=1 // pred_check_branch
      %10 = sbr.rel (0) target = $region5
    $region4: #{mmdit_forward.16} parent=1 // pred_region
      _
    $region5: #{mmdit_forward.16} parent=1 // pred_fallthru
      _
    // Predicated region
    $region6: #{mmdit_forward.16} parent=1 // pred_check
      _
    $region7: #{mmdit_forward.16} parent=1 // pred_check_branch
      %12 = sbr.rel (0) target = $region9
    $region8: #{mmdit_forward.16} parent=1 // pred_region
      %s14 = ssub.s32 2048, 2048
      %15 = vsyncadd [#allocation4], %s14
      %s16 = sshll.u32 [#allocation3], 4
      %s17 = int_to_ptr.vmem [resolvable:$true] %s16
      %22 = dma.hbm_to_vmem [thread:$0]  %s1, 2048, %s17, [#allocation4], 512, 512, 32
    $region9: #{mmdit_forward.16} parent=1 // pred_fallthru
      _
    // Predicated region
    $region10: #{mmdit_forward.16} parent=1 // pred_check
      _
    $region11: #{mmdit_forward.16} parent=1 // pred_check_branch
      %24 = sbr.rel (0) target = $region13
    $region12: #{mmdit_forward.16} parent=1 // pred_region
      _
    $region13: #{mmdit_forward.16} parent=1 // pred_fallthru
      _
    // Predicated region
    $region14: #{mmdit_forward.16} parent=1 // pred_check
      _
    $region15: #{mmdit_forward.16} parent=1 // pred_check_branch
      %26 = sbr.rel (0) target = $region17
    $region16: #{mmdit_forward.16} parent=1 // pred_region
      %27 = dma.done [#allocation4], 2048
    $region17: #{mmdit_forward.16} parent=1 // pred_fallthru
      _
    %p28 = scmp.eq.s32.totalorder 0, 0
    // Predicated region
    $region18: #{mmdit_forward.16} parent=1 // pred_check
      %p29 = pneg %p28
    $region19: #{mmdit_forward.16} parent=1 // pred_check_branch
      %31 = sbr.rel (%p29) target = $region21
    $region20: #{mmdit_forward.16} parent=1 // pred_region
      %vm32 = vcmask 1041408
      %vm33 = vcmask 1043458
      %vm34 = vmor %vm33, %vm32
      %vm35 = vcmask 1045508
      %vm36 = vmor %vm35, %vm34
      %vm37 = vcmask 785414
      %vm38 = vmor %vm37, %vm36
      %39 = vst.msk [vmem:[#allocation2] sm:$0xff] %vm38, 0.0
    $region21: #{mmdit_forward.16} parent=1 // pred_fallthru
      _
    %v40 = vld [vmem:[%s0] sm:$0x3]
    %v41 = vxor.u32 %v40, 2147483648
    %v42 = vmul.f32 %v41, 1.442695
    %v43 = vpow.pop %v42
    %v44 = vadd.f32 %v43, 1.0
    %v45 = vrcp.pop %v44
    %v46 = vmul.f32 1.0, %v45
    %v47 = vmul.f32 %v40, %v46
    %v48 = vld [vmem:[#allocation2] sm:$0xff]
    %v49 = vld [vmem:[#allocation3] sm:$0xff]
    %v50 = vld [vmem:[#allocation3 + $0x8] sm:$0xff]
    %v51 = vld [vmem:[#allocation3 + $0x10] sm:$0xff]
    %v52 = vld [vmem:[#allocation3 + $0x18] sm:$0xff]
    %v53 = vld [vmem:[#allocation3 + $0x20] sm:$0xff]
    %v54 = vld [vmem:[#allocation3 + $0x28] sm:$0xff]
    %v55 = vld [vmem:[#allocation3 + $0x30] sm:$0xff]
    %v56 = vld [vmem:[#allocation3 + $0x38] sm:$0xff]
    %v57 = vld [vmem:[#allocation3 + $0x40] sm:$0xff]
    %v58 = vld [vmem:[#allocation3 + $0x48] sm:$0xff]
    %v59 = vld [vmem:[#allocation3 + $0x50] sm:$0xff]
    %v60 = vld [vmem:[#allocation3 + $0x58] sm:$0xff]
    %v61 = vld [vmem:[#allocation3 + $0x60] sm:$0xff]
    %v62 = vld [vmem:[#allocation3 + $0x68] sm:$0xff]
    %v63 = vld [vmem:[#allocation3 + $0x70] sm:$0xff]
    %v64 = vld [vmem:[#allocation3 + $0x78] sm:$0xff]
    %vm65 = vcmask 261120
    %v67 = vsel %vm65, %v47, 0
    %69 = vmatprep.subr.mxu0 %v50
    %70 = vmatpush1.msra.mxu0 %v49
    %71 = vmatprep.subr.mxu0 %v54
    %72 = vmatpush1.msra.mxu0 %v53
    %73 = vmatprep.subr.mxu0 %v58
    %74 = vmatpush1.msra.mxu0 %v57
    %75 = vmatprep.subr.mxu0 %v62
    %76 = vmatpush1.msra.mxu0 %v61
    %77 = vmatprep.subr.mxu0 0.0
    %78 = vmatpush1.msra.mxu0 0.0
    %79 = vmatprep.subr.mxu0 0.0
    %80 = vmatpush1.msra.mxu0 0.0
    %81 = vmatprep.subr.mxu0 0.0
    %82 = vmatpush1.msra.mxu0 0.0
    %83 = vmatprep.subr.mxu0 0.0
    %84 = vmatpush1.msra.mxu0 0.0
    %85 = vmatprep.subr.mxu0 0.0
    %86 = vmatpush1.msra.mxu0 0.0
    %87 = vmatprep.subr.mxu0 0.0
    %88 = vmatpush1.msra.mxu0 0.0
    %89 = vmatprep.subr.mxu0 0.0
    %90 = vmatpush1.msra.mxu0 0.0
    %91 = vmatprep.subr.mxu0 0.0
    %92 = vmatpush1.msra.mxu0 0.0
    %93 = vmatprep.subr.mxu0 0.0
    %94 = vmatpush1.msra.mxu0 0.0
    %95 = vmatprep.subr.mxu0 0.0
    %96 = vmatpush1.msra.mxu0 0.0
    %97 = vmatprep.subr.mxu0 0.0
    %98 = vmatpush1.msra.mxu0 0.0
    %99 = vmatprep.subr.mxu0 0.0
    %100 = vmatpush1.msra.mxu0 0.0
    %101 = vmatprep.subr.mxu0 0.0
    %102 = vmatpush1.msra.mxu0 0.0
    %103 = vmatprep.subr.mxu0 0.0
    %104 = vmatpush1.msra.mxu0 0.0
    %105 = vmatprep.subr.mxu0 0.0
    %106 = vmatpush1.msra.mxu0 0.0
    %107 = vmatprep.subr.mxu0 0.0
    %108 = vmatpush1.msra.mxu0 0.0
    %109 = vmatprep.subr.mxu0 0.0
    %110 = vmatpush1.msra.mxu0 0.0
    %111 = vmatprep.subr.mxu0 0.0
    %112 = vmatpush1.msra.mxu0 0.0
    %113 = vmatprep.subr.mxu0 0.0
    %114 = vmatpush1.msra.mxu0 0.0
    %115 = vmatprep.subr.mxu0 0.0
    %116 = vmatpush1.msra.mxu0 0.0
    %117 = vmatprep.subr.mxu0 0.0
    %118 = vmatpush1.msra.mxu0 0.0
    %119 = vmatprep.subr.mxu0 0.0
    %120 = vmatpush1.msra.mxu0 0.0
    %121 = vmatprep.subr.mxu0 0.0
    %122 = vmatpush1.msra.mxu0 0.0
    %123 = vmatprep.subr.mxu0 0.0
    %124 = vmatpush1.msra.mxu0 0.0
    %125 = vmatprep.subr.mxu0 0.0
    %126 = vmatpush1.msra.mxu0 0.0
    %127 = vmatprep.subr.mxu0 0.0
    %128 = vmatpush1.msra.mxu0 0.0
    %129 = vmatprep.subr.mxu0 0.0
    %130 = vmatpush1.msra.mxu0 0.0
    %131 = vmatprep.subr.mxu0 0.0
    %132 = vmatpush1.msra.mxu0 0.0
    %133 = vmatprep.mubr.f32.mxu0 0.0
    %134 = vmatmul.mubr.f32.gmra.mrb[0].mxu0 %v67
    %v135 = vpop.f32.mrb[0].mxu0
    %v136 = vadd.f32 0.0, %v135
    %v137 = vpop.f32.mrb[0].mxu0
    %v138 = vadd.f32 0.0, %v137
    %139 = vdwg.mxu0
    %140 = vmatprep.subr.mxu0 %v52
    %141 = vmatpush1.msra.mxu0 %v51
    %142 = vmatprep.subr.mxu0 %v56
    %143 = vmatpush1.msra.mxu0 %v55
    %144 = vmatprep.subr.mxu0 %v60
    %145 = vmatpush1.msra.mxu0 %v59
    %146 = vmatprep.subr.mxu0 %v64
    %147 = vmatpush1.msra.mxu0 %v63
    %148 = vmatprep.subr.mxu0 0.0
    %149 = vmatpush1.msra.mxu0 0.0
    %150 = vmatprep.subr.mxu0 0.0
    %151 = vmatpush1.msra.mxu0 0.0
    %152 = vmatprep.subr.mxu0 0.0
    %153 = vmatpush1.msra.mxu0 0.0
    %154 = vmatprep.subr.mxu0 0.0
    %155 = vmatpush1.msra.mxu0 0.0
    %156 = vmatprep.subr.mxu0 0.0
    %157 = vmatpush1.msra.mxu0 0.0
    %158 = vmatprep.subr.mxu0 0.0
    %159 = vmatpush1.msra.mxu0 0.0
    %160 = vmatprep.subr.mxu0 0.0
    %161 = vmatpush1.msra.mxu0 0.0
    %162 = vmatprep.subr.mxu0 0.0
    %163 = vmatpush1.msra.mxu0 0.0
    %164 = vmatprep.subr.mxu0 0.0
    %165 = vmatpush1.msra.mxu0 0.0
    %166 = vmatprep.subr.mxu0 0.0
    %167 = vmatpush1.msra.mxu0 0.0
    %168 = vmatprep.subr.mxu0 0.0
    %169 = vmatpush1.msra.mxu0 0.0
    %170 = vmatprep.subr.mxu0 0.0
    %171 = vmatpush1.msra.mxu0 0.0
    %172 = vmatprep.subr.mxu0 0.0
    %173 = vmatpush1.msra.mxu0 0.0
    %174 = vmatprep.subr.mxu0 0.0
    %175 = vmatpush1.msra.mxu0 0.0
    %176 = vmatprep.subr.mxu0 0.0
    %177 = vmatpush1.msra.mxu0 0.0
    %178 = vmatprep.subr.mxu0 0.0
    %179 = vmatpush1.msra.mxu0 0.0
    %180 = vmatprep.subr.mxu0 0.0
    %181 = vmatpush1.msra.mxu0 0.0
    %182 = vmatprep.subr.mxu0 0.0
    %183 = vmatpush1.msra.mxu0 0.0
    %184 = vmatprep.subr.mxu0 0.0
    %185 = vmatpush1.msra.mxu0 0.0
    %186 = vmatprep.subr.mxu0 0.0
    %187 = vmatpush1.msra.mxu0 0.0
    %188 = vmatprep.subr.mxu0 0.0
    %189 = vmatpush1.msra.mxu0 0.0
    %190 = vmatprep.subr.mxu0 0.0
    %191 = vmatpush1.msra.mxu0 0.0
    %192 = vmatprep.subr.mxu0 0.0
    %193 = vmatpush1.msra.mxu0 0.0
    %194 = vmatprep.subr.mxu0 0.0
    %195 = vmatpush1.msra.mxu0 0.0
    %196 = vmatprep.subr.mxu0 0.0
    %197 = vmatpush1.msra.mxu0 0.0
    %198 = vmatprep.subr.mxu0 0.0
    %199 = vmatpush1.msra.mxu0 0.0
    %200 = vmatprep.subr.mxu0 0.0
    %201 = vmatpush1.msra.mxu0 0.0
    %202 = vmatprep.subr.mxu0 0.0
    %203 = vmatpush1.msra.mxu0 0.0
    %204 = vmatprep.mubr.f32.mxu0 0.0
    %205 = vmatmul.mubr.f32.gmra.mrb[0].mxu0 %v67
    %v206 = vpop.f32.mrb[0].mxu0
    %v207 = vadd.f32 0.0, %v206
    %v208 = vpop.f32.mrb[0].mxu0
    %v209 = vadd.f32 0.0, %v208
    %210 = vdwg.mxu0
    %v215 = vcombine.low %v136, %v138
    %v216 = vcombine.low %v207, %v209
    %v218 = vunpack.c.l.s4 1983009808
    %v219 = vunpack.c.0.s8 %v218
    %v220 = vlaneseq
    %v221 = vshrl.u32 %v220, 7
    %v222 = vsub.s32 %v219, %v221
    %v223 = vrot.slane %v215, %v222
    %v225 = vunpack.c.l.s4 1983009808
    %v226 = vunpack.c.0.s8 %v225
    %v227 = vlaneseq
    %v228 = vshrl.u32 %v227, 7
    %v229 = vsub.s32 %v226, %v228
    %v230 = vrot.slane %v216, %v229
    %v231 = vcombine.low %v223, %v230
    %v233 = vadd.f32 %v48, %v231
    %vm234 = vcmask 1041408
    %vm235 = vcmask 1043458
    %vm236 = vmor %vm235, %vm234
    %vm237 = vcmask 1045508
    %vm238 = vmor %vm237, %vm236
    %vm239 = vcmask 785414
    %vm240 = vmor %vm239, %vm238
    %241 = vst.msk [vmem:[#allocation2] sm:$0xff] %vm240, %v233
    // Predicated region
    $region22: #{mmdit_forward.16} parent=1 // pred_check
      %p242 = pneg %p28
    $region23: #{mmdit_forward.16} parent=1 // pred_check_branch
      %244 = sbr.rel (%p242) target = $region25
    $region24: #{mmdit_forward.16} parent=1 // pred_region
      %v245 = vld [vmem:[#allocation2] sm:$0xff]
      %v246 = vld [vmem:[%s2] sm:$0xf]
      %v248 = vlaneseq
      %v249 = vshrl.u32 %v248, 7
      %v250 = vsub.s32 0, %v249
      %v251 = vrot.slane %v246, %v250
      %v252 = vlaneseq
      %v253 = vshrl.u32 %v252, 7
      %v254 = vsub.s32 1, %v253
      %v255 = vrot.slane %v246, %v254
      %v256 = vlaneseq
      %v257 = vshrl.u32 %v256, 7
      %v258 = vsub.s32 2, %v257
      %v259 = vrot.slane %v246, %v258
      %v260 = vlaneseq
      %v261 = vshrl.u32 %v260, 7
      %v262 = vsub.s32 3, %v261
      %v263 = vrot.slane %v246, %v262
      %v264 = vcombine.low %v251, %v255
      %v265 = vcombine.low %v259, %v263
      %v267 = vunpack.c.l.s4 1983009808
      %v268 = vunpack.c.0.s8 %v267
      %v269 = vlaneseq
      %v270 = vshrl.u32 %v269, 7
      %v271 = vsub.s32 %v268, %v270
      %v272 = vrot.slane %v264, %v271
      %v274 = vunpack.c.l.s4 1983009808
      %v275 = vunpack.c.0.s8 %v274
      %v276 = vlaneseq
      %v277 = vshrl.u32 %v276, 7
      %v278 = vsub.s32 %v275, %v277
      %v279 = vrot.slane %v265, %v278
      %v280 = vcombine.low %v272, %v279
      %v282 = vadd.f32 %v245, %v280
      %283 = vst.msk [vmem:[%s3] sm:$0xff] %vm240, %v282
    $region25: #{mmdit_forward.16} parent=1 // pred_fallthru
      _
    // Predicated region
    $region26: #{mmdit_forward.16} parent=1 // pred_check
      _
    $region27: #{mmdit_forward.16} parent=1 // pred_check_branch
      %285 = sbr.rel (0) target = $region29
    $region28: #{mmdit_forward.16} parent=1 // pred_region
      _
    $region29: #{mmdit_forward.16} parent=1 // pred_fallthru
      _
    // Predicated region
    $region30: #{mmdit_forward.16} parent=1 // pred_check
      _
    $region31: #{mmdit_forward.16} parent=1 // pred_check_branch
      %287 = sbr.rel (0) target = $region33
    $region32: #{mmdit_forward.16} parent=1 // pred_region
      _
    $region33: #{mmdit_forward.16} parent=1 // pred_fallthru
      _
    %288 = vsyncpa [#allocation4], 1

// kernel: mmdit_forward.17
$region0: #{mmdit_forward.17}
  #allocation0 [shape = 'u32[]', space=smem, size = 0x4, offset = 0x4, fixed_abs, tag = 'smem constant byte address 0x4 - core index']
  #allocation1 [shape = 'u32[144,128]{1,0:T(1,128)}', space=vmem, size = 0x12000, scoped, tag = 'internal scratch']
  %s0 = inlined_call_operand.vmem [shape: f32[2,8,32], index: 0, kind: input, shape index: {}]
  %s1 = inlined_call_operand.vmem [shape: f32[2,1,32], index: 1, kind: input, shape index: {}]
  %s2 = inlined_call_operand.vmem [shape: f32[2,1,32], index: 2, kind: input, shape index: {}]
  %s3 = inlined_call_operand.vmem [shape: f32[2,1,32], index: 3, kind: input, shape index: {}]
  %s4 = inlined_call_operand.vmem [shape: f32[2,1,32], index: 4, kind: input, shape index: {}]
  %s5 = inlined_call_operand.vmem [shape: f32[2,8,32], index: 5, kind: output, shape index: {0}]
  %s6 = inlined_call_operand.vmem [shape: f32[2,8,32], index: 6, kind: output, shape index: {1}]
  %7 = xla_tuple %s5, %s6
  %s8 = sld [smem:[#allocation0]]
  $region61: #{mmdit_forward.17} parent=0
    _
  %s10 = ssub.s32 1, %s8
  %s11 = scalar_select 0, %s10, %s8
  loop: start=0, step=1, limit=4
  $region2: #{mmdit_forward.17} parent=0 // loop_pre_header
    _
  $region3: #{mmdit_forward.17} parent=0 // loop_header
    %s13 = sphi 0, %s17
    %p14 = scmp.ge.s32.totalorder %s13, 4
    %s20 = sphi 0, %s32
    %s21 = sphi 0, %s28
    %s22 = sphi 0, %s20
    %s23 = sphi 0, %s21
    %s24 = sphi 0, %s22
    %s25 = sphi 0, %s23
    %s37 = sphi 0, %s39
    %s40 = sphi 0, %s37
    %s41 = sphi 0, %s40
    %s57 = sphi 0, %s41
    %s63 = sphi 0, %s65
    %s66 = sphi 0, %s63
    %s67 = sphi 0, %s66
    %s83 = sphi 0, %s67
    %s89 = sphi 0, %s91
    %s92 = sphi 0, %s89
    %s93 = sphi 0, %s92
    %s109 = sphi 0, %s93
    %s115 = sphi 0, %s117
    %s118 = sphi 0, %s115
    %s119 = sphi 0, %s118
    %s135 = sphi 0, %s119
    %s141 = sphi 0, %s143
    %s144 = sphi 0, %s141
    %s145 = sphi 0, %s144
    %s161 = sphi 0, %s145
    %s169 = sphi 0, %s171
    %s172 = sphi 0, %s169
    %s173 = sphi 0, %s172
    %s189 = sphi 0, %s173
    %s197 = sphi 0, %s199
    %s200 = sphi 0, %s197
    %s201 = sphi 0, %s200
    %s217 = sphi 0, %s201
  $region4: #{mmdit_forward.17} parent=0 // loop_header_branch
    %16 = sbr.rel (%p14) target = $region8
  $region5: #{mmdit_forward.17} parent=0 // loop_body
    %s18 = ssub.s32 %s13, 1
    %s19 = ssub.s32 %s13, 2
    %s26 = sadd.s32 1, %s21
    %p27 = scmp.ge.s32.totalorder %s26, 1
    %s28 = scalar_select %p27, 0, %s26
    %s29 = sadd.s32 1, %s20
    %s30 = scalar_select %p27, %s29, %s20
    %p31 = scmp.ge.s32.totalorder %s30, 2
    %s32 = scalar_select %p31, 0, %s30
    %s33 = ssub.s32 %s20, %s32
    %s34 = ssub.s32 %s21, %s28
    %s35 = sor.u32 %s33, %s34
    %p36 = scmp.eq.s32.totalorder %s35, 0
    %s38 = sadd.s32 %s37, 1
    %s39 = scalar_select %p36, %s37, %s38
    %p42 = pneg %p36
    %p43 = scmp.eq.s32.totalorder %s13, 1
    %p44 = por %p42, %p43
    %p45 = scmp.ne.s32.totalorder %s37, %s40
    %p46 = scmp.eq.s32.totalorder %s13, 0
    %p47 = por %p45, %p46
    %p48 = scmp.ne.s32.totalorder %s37, %s40
    %p49 = scmp.eq.s32.totalorder %s18, 1
    %p50 = por %p48, %p49
    %p51 = scmp.ne.s32.totalorder %s40, %s41
    %p52 = scmp.eq.s32.totalorder %s18, 0
    %p53 = por %p51, %p52
    %p54 = scmp.ne.s32.totalorder %s40, %s41
    %p55 = scmp.eq.s32.totalorder %s19, 1
    %p56 = por %p54, %p55
    %p58 = scmp.ne.s32.totalorder %s41, %s57
    %p59 = scmp.eq.s32.totalorder %s19, 0
    %p60 = por %p58, %p59
    %s61 = ssub.s32 %s20, %s32
    %p62 = scmp.eq.s32.totalorder %s61, 0
    %s64 = sadd.s32 %s63, 1
    %s65 = scalar_select %p62, %s63, %s64
    %p68 = pneg %p62
    %p69 = scmp.eq.s32.totalorder %s13, 1
    %p70 = por %p68, %p69
    %p71 = scmp.ne.s32.totalorder %s63, %s66
    %p72 = scmp.eq.s32.totalorder %s13, 0
    %p73 = por %p71, %p72
    %p74 = scmp.ne.s32.totalorder %s63, %s66
    %p75 = scmp.eq.s32.totalorder %s18, 1
    %p76 = por %p74, %p75
    %p77 = scmp.ne.s32.totalorder %s66, %s67
    %p78 = scmp.eq.s32.totalorder %s18, 0
    %p79 = por %p77, %p78
    %p80 = scmp.ne.s32.totalorder %s66, %s67
    %p81 = scmp.eq.s32.totalorder %s19, 1
    %p82 = por %p80, %p81
    %p84 = scmp.ne.s32.totalorder %s67, %s83
    %p85 = scmp.eq.s32.totalorder %s19, 0
    %p86 = por %p84, %p85
    %s87 = ssub.s32 %s20, %s32
    %p88 = scmp.eq.s32.totalorder %s87, 0
    %s90 = sadd.s32 %s89, 1
    %s91 = scalar_select %p88, %s89, %s90
    %p94 = pneg %p88
    %p95 = scmp.eq.s32.totalorder %s13, 1
    %p96 = por %p94, %p95
    %p97 = scmp.ne.s32.totalorder %s89, %s92
    %p98 = scmp.eq.s32.totalorder %s13, 0
    %p99 = por %p97, %p98
    %p100 = scmp.ne.s32.totalorder %s89, %s92
    %p101 = scmp.eq.s32.totalorder %s18, 1
    %p102 = por %p100, %p101
    %p103 = scmp.ne.s32.totalorder %s92, %s93
    %p104 = scmp.eq.s32.totalorder %s18, 0
    %p105 = por %p103, %p104
    %p106 = scmp.ne.s32.totalorder %s92, %s93
    %p107 = scmp.eq.s32.totalorder %s19, 1
    %p108 = por %p106, %p107
    %p110 = scmp.ne.s32.totalorder %s93, %s109
    %p111 = scmp.eq.s32.totalorder %s19, 0
    %p112 = por %p110, %p111
    %s113 = ssub.s32 %s20, %s32
    %p114 = scmp.eq.s32.totalorder %s113, 0
    %s116 = sadd.s32 %s115, 1
    %s117 = scalar_select %p114, %s115, %s116
    %p120 = pneg %p114
    %p121 = scmp.eq.s32.totalorder %s13, 1
    %p122 = por %p120, %p121
    %p123 = scmp.ne.s32.totalorder %s115, %s118
    %p124 = scmp.eq.s32.totalorder %s13, 0
    %p125 = por %p123, %p124
    %p126 = scmp.ne.s32.totalorder %s115, %s118
    %p127 = scmp.eq.s32.totalorder %s18, 1
    %p128 = por %p126, %p127
    %p129 = scmp.ne.s32.totalorder %s118, %s119
    %p130 = scmp.eq.s32.totalorder %s18, 0
    %p131 = por %p129, %p130
    %p132 = scmp.ne.s32.totalorder %s118, %s119
    %p133 = scmp.eq.s32.totalorder %s19, 1
    %p134 = por %p132, %p133
    %p136 = scmp.ne.s32.totalorder %s119, %s135
    %p137 = scmp.eq.s32.totalorder %s19, 0
    %p138 = por %p136, %p137
    %s139 = ssub.s32 %s20, %s32
    %p140 = scmp.eq.s32.totalorder %s139, 0
    %s142 = sadd.s32 %s141, 1
    %s143 = scalar_select %p140, %s141, %s142
    %p146 = pneg %p140
    %p147 = scmp.eq.s32.totalorder %s13, 1
    %p148 = por %p146, %p147
    %p149 = scmp.ne.s32.totalorder %s141, %s144
    %p150 = scmp.eq.s32.totalorder %s13, 0
    %p151 = por %p149, %p150
    %p152 = scmp.ne.s32.totalorder %s141, %s144
    %p153 = scmp.eq.s32.totalorder %s18, 1
    %p154 = por %p152, %p153
    %p155 = scmp.ne.s32.totalorder %s144, %s145
    %p156 = scmp.eq.s32.totalorder %s18, 0
    %p157 = por %p155, %p156
    %p158 = scmp.ne.s32.totalorder %s144, %s145
    %p159 = scmp.eq.s32.totalorder %s19, 1
    %p160 = por %p158, %p159
    %p162 = scmp.ne.s32.totalorder %s145, %s161
    %p163 = scmp.eq.s32.totalorder %s19, 0
    %p164 = por %p162, %p163
    %s165 = ssub.s32 %s20, %s32
    %s166 = ssub.s32 %s21, %s28
    %s167 = sor.u32 %s165, %s166
    %p168 = scmp.eq.s32.totalorder %s167, 0
    %s170 = sadd.s32 %s169, 1
    %s171 = scalar_select %p168, %s169, %s170
    %p174 = pneg %p168
    %p175 = scmp.eq.s32.totalorder %s13, 1
    %p176 = por %p174, %p175
    %p177 = scmp.ne.s32.totalorder %s169, %s172
    %p178 = scmp.eq.s32.totalorder %s13, 0
    %p179 = por %p177, %p178
    %p180 = scmp.ne.s32.totalorder %s169, %s172
    %p181 = scmp.eq.s32.totalorder %s18, 1
    %p182 = por %p180, %p181
    %p183 = scmp.ne.s32.totalorder %s172, %s173
    %p184 = scmp.eq.s32.totalorder %s18, 0
    %p185 = por %p183, %p184
    %p186 = scmp.ne.s32.totalorder %s172, %s173
    %p187 = scmp.eq.s32.totalorder %s19, 1
    %p188 = por %p186, %p187
    %p190 = scmp.ne.s32.totalorder %s173, %s189
    %p191 = scmp.eq.s32.totalorder %s19, 0
    %p192 = por %p190, %p191
    %s193 = ssub.s32 %s20, %s32
    %s194 = ssub.s32 %s21, %s28
    %s195 = sor.u32 %s193, %s194
    %p196 = scmp.eq.s32.totalorder %s195, 0
    %s198 = sadd.s32 %s197, 1
    %s199 = scalar_select %p196, %s197, %s198
    %p202 = pneg %p196
    %p203 = scmp.eq.s32.totalorder %s13, 1
    %p204 = por %p202, %p203
    %p205 = scmp.ne.s32.totalorder %s197, %s200
    %p206 = scmp.eq.s32.totalorder %s13, 0
    %p207 = por %p205, %p206
    %p208 = scmp.ne.s32.totalorder %s197, %s200
    %p209 = scmp.eq.s32.totalorder %s18, 1
    %p210 = por %p208, %p209
    %p211 = scmp.ne.s32.totalorder %s200, %s201
    %p212 = scmp.eq.s32.totalorder %s18, 0
    %p213 = por %p211, %p212
    %p214 = scmp.ne.s32.totalorder %s200, %s201
    %p215 = scmp.eq.s32.totalorder %s19, 1
    %p216 = por %p214, %p215
    %p218 = scmp.ne.s32.totalorder %s201, %s217
    %p219 = scmp.eq.s32.totalorder %s19, 0
    %p220 = por %p218, %p219
    %p221 = scmp.le.s32.totalorder 1, %s13
    %p222 = scmp.lt.s32.totalorder %s13, 3
    %p223 = pnand %p221, %p222
    %p224 = pneg %p223
    // Predicated region
    $region9: #{mmdit_forward.17} parent=5 // pred_check
      _
    $region10: #{mmdit_forward.17} parent=5 // pred_check_branch
      %226 = sbr.rel (%p223) target = $region12
    $region11: #{mmdit_forward.17} parent=5 // pred_region
      %s227 = ssub.s32 %s13, 1
    $region12: #{mmdit_forward.17} parent=5 // pred_fallthru
      _
    %p228 = scmp.lt.s32.totalorder %s13, 2
    // Predicated region
    $region13: #{mmdit_forward.17} parent=5 // pred_check
      %p229 = pneg %p228
    $region14: #{mmdit_forward.17} parent=5 // pred_check_branch
      %231 = sbr.rel (%p229) target = $region16
    $region15: #{mmdit_forward.17} parent=5 // pred_region
      // Predicated region
      $region17: #{mmdit_forward.17} parent=15 // pred_check
        %p232 = pneg %p47
      $region18: #{mmdit_forward.17} parent=15 // pred_check_branch
        %234 = sbr.rel (%p232) target = $region20
      $region19: #{mmdit_forward.17} parent=15 // pred_region
        %p235 = scmp.lt.s32.totalorder %s20, 1
        %s236 = scalar_select %p235, %s20, 1
        %p237 = scmp.lt.s32.totalorder %s21, 0
        %s238 = scalar_select %p237, %s21, 0
        %s239 = sadd.s32 %s238, %s236
        %s240 = smul.addr %s239, 8
        %s241 = scalar_lea.vmem %s0, %s240
      $region20: #{mmdit_forward.17} parent=15 // pred_fallthru
        _
      // Predicated region
      $region21: #{mmdit_forward.17} parent=15 // pred_check
        %p242 = pneg %p73
      $region22: #{mmdit_forward.17} parent=15 // pred_check_branch
        %244 = sbr.rel (%p242) target = $region24
      $region23: #{mmdit_forward.17} parent=15 // pred_region
        %p245 = scmp.lt.s32.totalorder %s20, 1
        %s246 = scalar_select %p245, %s20, 1
        %s247 = scalar_lea.vmem %s1, %s246
      $region24: #{mmdit_forward.17} parent=15 // pred_fallthru
        _
      // Predicated region
      $region25: #{mmdit_forward.17} parent=15 // pred_check
        %p248 = pneg %p99
      $region26: #{mmdit_forward.17} parent=15 // pred_check_branch
        %250 = sbr.rel (%p248) target = $region28
      $region27: #{mmdit_forward.17} parent=15 // pred_region
        %p251 = scmp.lt.s32.totalorder %s20, 1
        %s252 = scalar_select %p251, %s20, 1
        %s253 = scalar_lea.vmem %s2, %s252
      $region28: #{mmdit_forward.17} parent=15 // pred_fallthru
        _
      // Predicated region
      $region29: #{mmdit_forward.17} parent=15 // pred_check
        %p254 = pneg %p125
      $region30: #{mmdit_forward.17} parent=15 // pred_check_branch
        %256 = sbr.rel (%p254) target = $region32
      $region31: #{mmdit_forward.17} parent=15 // pred_region
        %p257 = scmp.lt.s32.totalorder %s20, 1
        %s258 = scalar_select %p257, %s20, 1
        %s259 = scalar_lea.vmem %s3, %s258
      $region32: #{mmdit_forward.17} parent=15 // pred_fallthru
        _
      // Predicated region
      $region33: #{mmdit_forward.17} parent=15 // pred_check
        %p260 = pneg %p151
      $region34: #{mmdit_forward.17} parent=15 // pred_check_branch
        %262 = sbr.rel (%p260) target = $region36
      $region35: #{mmdit_forward.17} parent=15 // pred_region
        %p263 = scmp.lt.s32.totalorder %s20, 1
        %s264 = scalar_select %p263, %s20, 1
        %s265 = scalar_lea.vmem %s4, %s264
      $region36: #{mmdit_forward.17} parent=15 // pred_fallthru
        _
    $region16: #{mmdit_forward.17} parent=5 // pred_fallthru
      _
    %p266 = scmp.le.s32.totalorder 1, %s13
    %p267 = scmp.lt.s32.totalorder %s13, 3
    %p268 = pnand %p266, %p267
    %p269 = pneg %p268
    // Predicated region
    $region37: #{mmdit_forward.17} parent=5 // pred_check
      _
    $region38: #{mmdit_forward.17} parent=5 // pred_check_branch
      %271 = sbr.rel (%p268) target = $region40
    $region39: #{mmdit_forward.17} parent=5 // pred_region
      %s272 = ssub.s32 %s13, 1
      %p273 = scmp.lt.s32.totalorder %s22, 1
      %s274 = scalar_select %p273, %s22, 1
      %p275 = scmp.lt.s32.totalorder %s23, 0
      %s276 = scalar_select %p275, %s23, 0
      %s277 = sadd.s32 %s276, %s274
      %s278 = smul.addr %s277, 8
      %s279 = scalar_lea.vmem %s0, %s278
      %p280 = pneg %p53
      %p281 = pneg %p50
      %p282 = scmp.lt.s32.totalorder %s22, 1
      %s283 = scalar_select %p282, %s22, 1
      %s284 = scalar_lea.vmem %s1, %s283
      %p285 = pneg %p79
      %p286 = pneg %p76
      %p287 = scmp.lt.s32.totalorder %s22, 1
      %s288 = scalar_select %p287, %s22, 1
      %s289 = scalar_lea.vmem %s2, %s288
      %p290 = pneg %p105
      %p291 = pneg %p102
      %p292 = scmp.lt.s32.totalorder %s22, 1
      %s293 = scalar_select %p292, %s22, 1
      %s294 = scalar_lea.vmem %s3, %s293
      %p295 = pneg %p131
      %p296 = pneg %p128
      %p297 = scmp.lt.s32.totalorder %s22, 1
      %s298 = scalar_select %p297, %s22, 1
      %s299 = scalar_lea.vmem %s4, %s298
      %p300 = pneg %p157
      %p301 = pneg %p154
      %p302 = pneg %p185
      %p303 = pneg %p182
      %p304 = scmp.lt.s32.totalorder %s22, 1
      %s305 = scalar_select %p304, %s22, 1
      %p306 = scmp.lt.s32.totalorder %s23, 0
      %s307 = scalar_select %p306, %s23, 0
      %s308 = sadd.s32 %s307, %s305
      %s309 = smul.addr %s308, 8
      %s310 = scalar_lea.vmem %s5, %s309
      %p311 = pneg %p213
      %p312 = pneg %p210
      %p313 = scmp.lt.s32.totalorder %s22, 1
      %s314 = scalar_select %p313, %s22, 1
      %p315 = scmp.lt.s32.totalorder %s23, 0
      %s316 = scalar_select %p315, %s23, 0
      %s317 = sadd.s32 %s316, %s314
      %s318 = smul.addr %s317, 8
      %s319 = scalar_lea.vmem %s6, %s318
      %p320 = scmp.lt.s32.totalorder %s22, 1
      %s321 = scalar_select %p320, %s22, 1
      %p322 = scmp.lt.s32.totalorder %s23, 0
      %s323 = scalar_select %p322, %s23, 0
      %s324 = sadd.s32 %s323, %s321
      %s325 = smul.addr %s324, 8
      %s326 = scalar_lea.vmem %s0, %s325
      %p327 = scmp.lt.s32.totalorder %s22, 1
      %s328 = scalar_select %p327, %s22, 1
      %s329 = scalar_lea.vmem %s1, %s328
      %p330 = scmp.lt.s32.totalorder %s22, 1
      %s331 = scalar_select %p330, %s22, 1
      %s332 = scalar_lea.vmem %s2, %s331
      %p333 = scmp.lt.s32.totalorder %s22, 1
      %s334 = scalar_select %p333, %s22, 1
      %s335 = scalar_lea.vmem %s3, %s334
      %p336 = scmp.lt.s32.totalorder %s22, 1
      %s337 = scalar_select %p336, %s22, 1
      %s338 = scalar_lea.vmem %s4, %s337
      %p339 = scmp.lt.s32.totalorder %s22, 1
      %s340 = scalar_select %p339, %s22, 1
      %p341 = scmp.lt.s32.totalorder %s23, 0
      %s342 = scalar_select %p341, %s23, 0
      %s343 = sadd.s32 %s342, %s340
      %s344 = smul.addr %s343, 8
      %s345 = scalar_lea.vmem %s5, %s344
      %p346 = scmp.lt.s32.totalorder %s22, 1
      %s347 = scalar_select %p346, %s22, 1
      %p348 = scmp.lt.s32.totalorder %s23, 0
      %s349 = scalar_select %p348, %s23, 0
      %s350 = sadd.s32 %s349, %s347
      %s351 = smul.addr %s350, 8
      %s352 = scalar_lea.vmem %s6, %s351
      %v353 = vld [vmem:[%s326] sm:$0xff]
      %vm354 = vcmask 261120
      %v355 = vsel %vm354, %v353, 0.0
      %356 = vadd.xlane.f32.xlu0 %v355
      %v357 = vpop.xlane.xlu0 %356
      %v358 = vrcp.pop 32.0
      %v359 = vmul.f32 %v357, %v358
      %v360 = vsub.f32 %v353, %v359
      %v361 = vmul.f32 %v360, %v360
      %v362 = vsel %vm354, %v361, 0.0
      %363 = vadd.xlane.f32.xlu0 %v362
      %v364 = vpop.xlane.xlu0 %363
      %v365 = vmul.f32 %v364, %v358
      %v366 = vadd.f32 %v365, 1e-06
      %v367 = vrsqrt.pop %v366
      %v368 = vmul.f32 %v360, %v367
      %v369 = vld [vmem:[%s329] sm:$0x1]
      %v370 = vadd.f32 %v369, 1.0
      %v372 = vlaneseq
      %v373 = vshrl.u32 %v372, 7
      %v374 = vsub.s32 0, %v373
      %v375 = vrot.slane %v370, %v374
      %v377 = vmul.f32 %v368, %v375
      %v378 = vld [vmem:[%s332] sm:$0x1]
      %v380 = vlaneseq
      %v381 = vshrl.u32 %v380, 7
      %v382 = vsub.s32 0, %v381
      %v383 = vrot.slane %v378, %v382
      %v385 = vadd.f32 %v377, %v383
      %386 = vst.msk [vmem:[%s345] sm:$0xff] %vm354, %v385
      %v387 = vld [vmem:[%s335] sm:$0x1]
      %v388 = vadd.f32 %v387, 1.0
      %v390 = vlaneseq
      %v391 = vshrl.u32 %v390, 7
      %v392 = vsub.s32 0, %v391
      %v393 = vrot.slane %v388, %v392
      %v395 = vmul.f32 %v368, %v393
      %v396 = vld [vmem:[%s338] sm:$0x1]
      %v398 = vlaneseq
      %v399 = vshrl.u32 %v398, 7
      %v400 = vsub.s32 0, %v399
      %v401 = vrot.slane %v396, %v400
      %v403 = vadd.f32 %v395, %v401
      %404 = vst.msk [vmem:[%s352] sm:$0xff] %vm354, %v403
      %p405 = scmp.lt.s32.totalorder %s22, 1
      %s406 = scalar_select %p405, %s22, 1
      %p407 = scmp.lt.s32.totalorder %s23, 0
      %s408 = scalar_select %p407, %s23, 0
      %s409 = sadd.s32 %s408, %s406
      %s410 = smul.addr %s409, 8
      %s411 = scalar_lea.vmem %s5, %s410
      %p412 = scmp.lt.s32.totalorder %s22, 1
      %s413 = scalar_select %p412, %s22, 1
      %p414 = scmp.lt.s32.totalorder %s23, 0
      %s415 = scalar_select %p414, %s23, 0
      %s416 = sadd.s32 %s415, %s413
      %s417 = smul.addr %s416, 8
      %s418 = scalar_lea.vmem %s6, %s417
      // Predicated region
      $region41: #{mmdit_forward.17} parent=39 // pred_check
        %p419 = pneg %p182
      $region42: #{mmdit_forward.17} parent=39 // pred_check_branch
        %421 = sbr.rel (%p419) target = $region44
      $region43: #{mmdit_forward.17} parent=39 // pred_region
        _
      $region44: #{mmdit_forward.17} parent=39 // pred_fallthru
        _
      // Predicated region
      $region45: #{mmdit_forward.17} parent=39 // pred_check
        %p422 = pneg %p210
      $region46: #{mmdit_forward.17} parent=39 // pred_check_branch
        %424 = sbr.rel (%p422) target = $region48
      $region47: #{mmdit_forward.17} parent=39 // pred_region
        _
      $region48: #{mmdit_forward.17} parent=39 // pred_fallthru
        _
    $region40: #{mmdit_forward.17} parent=5 // pred_fallthru
      _
    %p425 = scmp.le.s32.totalorder 2, %s13
    // Predicated region
    $region49: #{mmdit_forward.17} parent=5 // pred_check
      %p426 = pneg %p425
    $region50: #{mmdit_forward.17} parent=5 // pred_check_branch
      %428 = sbr.rel (%p426) target = $region52
    $region51: #{mmdit_forward.17} parent=5 // pred_region
      %s429 = ssub.s32 %s13, 2
      // Predicated region
      $region53: #{mmdit_forward.17} parent=51 // pred_check
        %p430 = pneg %p188
      $region54: #{mmdit_forward.17} parent=51 // pred_check_branch
        %432 = sbr.rel (%p430) target = $region56
      $region55: #{mmdit_forward.17} parent=51 // pred_region
        %p433 = scmp.lt.s32.totalorder %s24, 1
        %s434 = scalar_select %p433, %s24, 1
        %p435 = scmp.lt.s32.totalorder %s25, 0
        %s436 = scalar_select %p435, %s25, 0
        %s437 = sadd.s32 %s436, %s434
        %s438 = smul.addr %s437, 8
        %s439 = scalar_lea.vmem %s5, %s438
      $region56: #{mmdit_forward.17} parent=51 // pred_fallthru
        _
      // Predicated region
      $region57: #{mmdit_forward.17} parent=51 // pred_check
        %p440 = pneg %p216
      $region58: #{mmdit_forward.17} parent=51 // pred_check_branch
        %442 = sbr.rel (%p440) target = $region60
      $region59: #{mmdit_forward.17} parent=51 // pred_region
        %p443 = scmp.lt.s32.totalorder %s24, 1
        %s444 = scalar_select %p443, %s24, 1
        %p445 = scmp.lt.s32.totalorder %s25, 0
        %s446 = scalar_select %p445, %s25, 0
        %s447 = sadd.s32 %s446, %s444
        %s448 = smul.addr %s447, 8
        %s449 = scalar_lea.vmem %s6, %s448
      $region60: #{mmdit_forward.17} parent=51 // pred_fallthru
        _
    $region52: #{mmdit_forward.17} parent=5 // pred_fallthru
      _
  $region6: #{mmdit_forward.17} parent=0 // loop_footer
    %s17 = sadd.s32 1, %s13
  $region7: #{mmdit_forward.17} parent=0 // loop_footer_branch
    %12 = sbr.rel target = $region3
  $region8: #{mmdit_forward.17} parent=0 // loop_exit
    _

// kernel: mmdit_forward.24
$region0: #{mmdit_forward.24}
  #allocation0 [shape = 'u32[]', space=smem, size = 0x4, offset = 0x4, fixed_abs, tag = 'smem constant byte address 0x4 - core index']
  #allocation1 [shape = 'u32[144,128]{1,0:T(1,128)}', space=vmem, size = 0x12000, scoped, tag = 'internal scratch']
  #allocation2 [shape = 'f32[8,32]{1,0:T(8,128)}', space=vmem, size = 0x1000, scoped, tag = 'scratch operand']
  %s0 = inlined_call_operand.vmem [shape: f32[2,8,32], index: 0, kind: input, shape index: {}]
  %s1 = inlined_call_operand.vmem [shape: f32[32,32], index: 1, kind: input, shape index: {}]
  %s2 = inlined_call_operand.vmem [shape: f32[1,32], index: 2, kind: input, shape index: {}]
  %s3 = inlined_call_operand.vmem [shape: f32[2,8,32], index: 3, kind: input, shape index: {}]
  %s4 = inlined_call_operand.vmem [shape: f32[2,1,32], index: 4, kind: input, shape index: {}]
  %s5 = inlined_call_operand.vmem [shape: f32[2,8,32], index: 5, kind: output, shape index: {}]
  %s6 = sld [smem:[#allocation0]]
  $region61: #{mmdit_forward.24} parent=0
    _
  %s8 = ssub.s32 1, %s6
  %s9 = scalar_select 0, %s8, %s6
  loop: start=0, step=1, limit=4
  $region2: #{mmdit_forward.24} parent=0 // loop_pre_header
    _
  $region3: #{mmdit_forward.24} parent=0 // loop_header
    %s11 = sphi 0, %s15
    %p12 = scmp.ge.s32.totalorder %s11, 4
    %s18 = sphi 0, %s44
    %s19 = sphi 0, %s40
    %s20 = sphi 0, %s36
    %s21 = sphi 0, %s32
    %s22 = sphi 0, %s18
    %s23 = sphi 0, %s19
    %s24 = sphi 0, %s20
    %s25 = sphi 0, %s21
    %s26 = sphi 0, %s22
    %s27 = sphi 0, %s23
    %s28 = sphi 0, %s24
    %s29 = sphi 0, %s25
    %s51 = sphi 0, %s53
    %s54 = sphi 0, %s51
    %s55 = sphi 0, %s54
    %s71 = sphi 0, %s55
    %s79 = sphi 0, %s81
    %s82 = sphi 0, %s79
    %s83 = sphi 0, %s82
    %s99 = sphi 0, %s83
    %s105 = sphi 0, %s107
    %s108 = sphi 0, %s105
    %s109 = sphi 0, %s108
    %s125 = sphi 0, %s109
    %s135 = sphi 0, %s137
    %s138 = sphi 0, %s135
    %s139 = sphi 0, %s138
    %s155 = sphi 0, %s139
    %s163 = sphi 0, %s165
    %s166 = sphi 0, %s163
    %s167 = sphi 0, %s166
    %s183 = sphi 0, %s167
    %s193 = sphi 0, %s195
    %s196 = sphi 0, %s193
    %s197 = sphi 0, %s196
    %s213 = sphi 0, %s197
  $region4: #{mmdit_forward.24} parent=0 // loop_header_branch
    %14 = sbr.rel (%p12) target = $region8
  $region5: #{mmdit_forward.24} parent=0 // loop_body
    %s16 = ssub.s32 %s11, 1
    %s17 = ssub.s32 %s11, 2
    %s30 = sadd.s32 1, %s21
    %p31 = scmp.ge.s32.totalorder %s30, 1
    %s32 = scalar_select %p31, 0, %s30
    %s33 = sadd.s32 1, %s20
    %s34 = scalar_select %p31, %s33, %s20
    %p35 = scmp.ge.s32.totalorder %s34, 1
    %s36 = scalar_select %p35, 0, %s34
    %s37 = sadd.s32 1, %s19
    %s38 = scalar_select %p35, %s37, %s19
    %p39 = scmp.ge.s32.totalorder %s38, 1
    %s40 = scalar_select %p39, 0, %s38
    %s41 = sadd.s32 1, %s18
    %s42 = scalar_select %p39, %s41, %s18
    %p43 = scmp.ge.s32.totalorder %s42, 2
    %s44 = scalar_select %p43, 0, %s42
    %s45 = ssub.s32 %s18, %s44
    %s46 = ssub.s32 %s19, %s40
    %s47 = sor.u32 %s45, %s46
    %s48 = ssub.s32 %s21, %s32
    %s49 = sor.u32 %s47, %s48
    %p50 = scmp.eq.s32.totalorder %s49, 0
    %s52 = sadd.s32 %s51, 1
    %s53 = scalar_select %p50, %s51, %s52
    %p56 = pneg %p50
    %p57 = scmp.eq.s32.totalorder %s11, 1
    %p58 = por %p56, %p57
    %p59 = scmp.ne.s32.totalorder %s51, %s54
    %p60 = scmp.eq.s32.totalorder %s11, 0
    %p61 = por %p59, %p60
    %p62 = scmp.ne.s32.totalorder %s51, %s54
    %p63 = scmp.eq.s32.totalorder %s16, 1
    %p64 = por %p62, %p63
    %p65 = scmp.ne.s32.totalorder %s54, %s55
    %p66 = scmp.eq.s32.totalorder %s16, 0
    %p67 = por %p65, %p66
    %p68 = scmp.ne.s32.totalorder %s54, %s55
    %p69 = scmp.eq.s32.totalorder %s17, 1
    %p70 = por %p68, %p69
    %p72 = scmp.ne.s32.totalorder %s55, %s71
    %p73 = scmp.eq.s32.totalorder %s17, 0
    %p74 = por %p72, %p73
    %s75 = ssub.s32 %s21, %s32
    %s76 = ssub.s32 %s20, %s36
    %s77 = sor.u32 %s75, %s76
    %p78 = scmp.eq.s32.totalorder %s77, 0
    %s80 = sadd.s32 %s79, 1
    %s81 = scalar_select %p78, %s79, %s80
    %p84 = pneg %p78
    %p85 = scmp.eq.s32.totalorder %s11, 1
    %p86 = por %p84, %p85
    %p87 = scmp.ne.s32.totalorder %s79, %s82
    %p88 = scmp.eq.s32.totalorder %s11, 0
    %p89 = por %p87, %p88
    %p90 = scmp.ne.s32.totalorder %s79, %s82
    %p91 = scmp.eq.s32.totalorder %s16, 1
    %p92 = por %p90, %p91
    %p93 = scmp.ne.s32.totalorder %s82, %s83
    %p94 = scmp.eq.s32.totalorder %s16, 0
    %p95 = por %p93, %p94
    %p96 = scmp.ne.s32.totalorder %s82, %s83
    %p97 = scmp.eq.s32.totalorder %s17, 1
    %p98 = por %p96, %p97
    %p100 = scmp.ne.s32.totalorder %s83, %s99
    %p101 = scmp.eq.s32.totalorder %s17, 0
    %p102 = por %p100, %p101
    %s103 = ssub.s32 %s20, %s36
    %p104 = scmp.eq.s32.totalorder %s103, 0
    %s106 = sadd.s32 %s105, 1
    %s107 = scalar_select %p104, %s105, %s106
    %p110 = pneg %p104
    %p111 = scmp.eq.s32.totalorder %s11, 1
    %p112 = por %p110, %p111
    %p113 = scmp.ne.s32.totalorder %s105, %s108
    %p114 = scmp.eq.s32.totalorder %s11, 0
    %p115 = por %p113, %p114
    %p116 = scmp.ne.s32.totalorder %s105, %s108
    %p117 = scmp.eq.s32.totalorder %s16, 1
    %p118 = por %p116, %p117
    %p119 = scmp.ne.s32.totalorder %s108, %s109
    %p120 = scmp.eq.s32.totalorder %s16, 0
    %p121 = por %p119, %p120
    %p122 = scmp.ne.s32.totalorder %s108, %s109
    %p123 = scmp.eq.s32.totalorder %s17, 1
    %p124 = por %p122, %p123
    %p126 = scmp.ne.s32.totalorder %s109, %s125
    %p127 = scmp.eq.s32.totalorder %s17, 0
    %p128 = por %p126, %p127
    %s129 = ssub.s32 %s18, %s44
    %s130 = ssub.s32 %s19, %s40
    %s131 = sor.u32 %s129, %s130
    %s132 = ssub.s32 %s20, %s36
    %s133 = sor.u32 %s131, %s132
    %p134 = scmp.eq.s32.totalorder %s133, 0
    %s136 = sadd.s32 %s135, 1
    %s137 = scalar_select %p134, %s135, %s136
    %p140 = pneg %p134
    %p141 = scmp.eq.s32.totalorder %s11, 1
    %p142 = por %p140, %p141
    %p143 = scmp.ne.s32.totalorder %s135, %s138
    %p144 = scmp.eq.s32.totalorder %s11, 0
    %p145 = por %p143, %p144
    %p146 = scmp.ne.s32.totalorder %s135, %s138
    %p147 = scmp.eq.s32.totalorder %s16, 1
    %p148 = por %p146, %p147
    %p149 = scmp.ne.s32.totalorder %s138, %s139
    %p150 = scmp.eq.s32.totalorder %s16, 0
    %p151 = por %p149, %p150
    %p152 = scmp.ne.s32.totalorder %s138, %s139
    %p153 = scmp.eq.s32.totalorder %s17, 1
    %p154 = por %p152, %p153
    %p156 = scmp.ne.s32.totalorder %s139, %s155
    %p157 = scmp.eq.s32.totalorder %s17, 0
    %p158 = por %p156, %p157
    %s159 = ssub.s32 %s18, %s44
    %s160 = ssub.s32 %s20, %s36
    %s161 = sor.u32 %s159, %s160
    %p162 = scmp.eq.s32.totalorder %s161, 0
    %s164 = sadd.s32 %s163, 1
    %s165 = scalar_select %p162, %s163, %s164
    %p168 = pneg %p162
    %p169 = scmp.eq.s32.totalorder %s11, 1
    %p170 = por %p168, %p169
    %p171 = scmp.ne.s32.totalorder %s163, %s166
    %p172 = scmp.eq.s32.totalorder %s11, 0
    %p173 = por %p171, %p172
    %p174 = scmp.ne.s32.totalorder %s163, %s166
    %p175 = scmp.eq.s32.totalorder %s16, 1
    %p176 = por %p174, %p175
    %p177 = scmp.ne.s32.totalorder %s166, %s167
    %p178 = scmp.eq.s32.totalorder %s16, 0
    %p179 = por %p177, %p178
    %p180 = scmp.ne.s32.totalorder %s166, %s167
    %p181 = scmp.eq.s32.totalorder %s17, 1
    %p182 = por %p180, %p181
    %p184 = scmp.ne.s32.totalorder %s167, %s183
    %p185 = scmp.eq.s32.totalorder %s17, 0
    %p186 = por %p184, %p185
    %s187 = ssub.s32 %s18, %s44
    %s188 = ssub.s32 %s19, %s40
    %s189 = sor.u32 %s187, %s188
    %s190 = ssub.s32 %s20, %s36
    %s191 = sor.u32 %s189, %s190
    %p192 = scmp.eq.s32.totalorder %s191, 0
    %s194 = sadd.s32 %s193, 1
    %s195 = scalar_select %p192, %s193, %s194
    %p198 = pneg %p192
    %p199 = scmp.eq.s32.totalorder %s11, 1
    %p200 = por %p198, %p199
    %p201 = scmp.ne.s32.totalorder %s193, %s196
    %p202 = scmp.eq.s32.totalorder %s11, 0
    %p203 = por %p201, %p202
    %p204 = scmp.ne.s32.totalorder %s193, %s196
    %p205 = scmp.eq.s32.totalorder %s16, 1
    %p206 = por %p204, %p205
    %p207 = scmp.ne.s32.totalorder %s196, %s197
    %p208 = scmp.eq.s32.totalorder %s16, 0
    %p209 = por %p207, %p208
    %p210 = scmp.ne.s32.totalorder %s196, %s197
    %p211 = scmp.eq.s32.totalorder %s17, 1
    %p212 = por %p210, %p211
    %p214 = scmp.ne.s32.totalorder %s197, %s213
    %p215 = scmp.eq.s32.totalorder %s17, 0
    %p216 = por %p214, %p215
    %p217 = scmp.le.s32.totalorder 1, %s11
    %p218 = scmp.lt.s32.totalorder %s11, 3
    %p219 = pnand %p217, %p218
    %p220 = pneg %p219
    // Predicated region
    $region9: #{mmdit_forward.24} parent=5 // pred_check
      _
    $region10: #{mmdit_forward.24} parent=5 // pred_check_branch
      %222 = sbr.rel (%p219) target = $region12
    $region11: #{mmdit_forward.24} parent=5 // pred_region
      %s223 = ssub.s32 %s11, 1
      // Predicated region
      $region13: #{mmdit_forward.24} parent=11 // pred_check
        %p224 = pneg %p95
      $region14: #{mmdit_forward.24} parent=11 // pred_check_branch
        %226 = sbr.rel (%p224) target = $region16
      $region15: #{mmdit_forward.24} parent=11 // pred_region
        %s227 = smul.u32 4, %s25
        %p228 = scmp.lt.s32.totalorder %s227, 3
        %s229 = scalar_select %p228, %s227, 3
        %p230 = scmp.lt.s32.totalorder %s24, 0
        %s231 = scalar_select %p230, %s24, 0
        %s232 = sadd.s32 %s231, %s229
        %s233 = smul.addr %s232, 8
        %s234 = scalar_lea.vmem %s1, %s233
        %s235 = smul.u32 4, %s25
      $region16: #{mmdit_forward.24} parent=11 // pred_fallthru
        _
      // Predicated region
      $region17: #{mmdit_forward.24} parent=11 // pred_check
        %p236 = pneg %p121
      $region18: #{mmdit_forward.24} parent=11 // pred_check_branch
        %238 = sbr.rel (%p236) target = $region20
      $region19: #{mmdit_forward.24} parent=11 // pred_region
        %p239 = scmp.lt.s32.totalorder %s24, 0
        %s240 = scalar_select %p239, %s24, 0
        %s241 = scalar_lea.vmem %s2, %s240
      $region20: #{mmdit_forward.24} parent=11 // pred_fallthru
        _
    $region12: #{mmdit_forward.24} parent=5 // pred_fallthru
      _
    %p242 = scmp.lt.s32.totalorder %s11, 2
    // Predicated region
    $region21: #{mmdit_forward.24} parent=5 // pred_check
      %p243 = pneg %p242
    $region22: #{mmdit_forward.24} parent=5 // pred_check_branch
      %245 = sbr.rel (%p243) target = $region24
    $region23: #{mmdit_forward.24} parent=5 // pred_region
      // Predicated region
      $region25: #{mmdit_forward.24} parent=23 // pred_check
        %p246 = pneg %p61
      $region26: #{mmdit_forward.24} parent=23 // pred_check_branch
        %248 = sbr.rel (%p246) target = $region28
      $region27: #{mmdit_forward.24} parent=23 // pred_region
        %p249 = scmp.lt.s32.totalorder %s18, 1
        %s250 = scalar_select %p249, %s18, 1
        %p251 = scmp.lt.s32.totalorder %s19, 0
        %s252 = scalar_select %p251, %s19, 0
        %p253 = scmp.lt.s32.totalorder %s21, 0
        %s254 = scalar_select %p253, %s21, 0
        %s255 = sadd.s32 %s254, %s252
        %s256 = sadd.s32 %s255, %s250
        %s257 = smul.addr %s256, 8
        %s258 = scalar_lea.vmem %s0, %s257
      $region28: #{mmdit_forward.24} parent=23 // pred_fallthru
        _
      // Predicated region
      $region29: #{mmdit_forward.24} parent=23 // pred_check
        %p259 = pneg %p145
      $region30: #{mmdit_forward.24} parent=23 // pred_check_branch
        %261 = sbr.rel (%p259) target = $region32
      $region31: #{mmdit_forward.24} parent=23 // pred_region
        %p262 = scmp.lt.s32.totalorder %s18, 1
        %s263 = scalar_select %p262, %s18, 1
        %p264 = scmp.lt.s32.totalorder %s19, 0
        %s265 = scalar_select %p264, %s19, 0
        %p266 = scmp.lt.s32.totalorder %s20, 0
        %s267 = scalar_select %p266, %s20, 0
        %s268 = sadd.s32 %s267, %s265
        %s269 = sadd.s32 %s268, %s263
        %s270 = smul.addr %s269, 8
        %s271 = scalar_lea.vmem %s3, %s270
      $region32: #{mmdit_forward.24} parent=23 // pred_fallthru
        _
      // Predicated region
      $region33: #{mmdit_forward.24} parent=23 // pred_check
        %p272 = pneg %p173
      $region34: #{mmdit_forward.24} parent=23 // pred_check_branch
        %274 = sbr.rel (%p272) target = $region36
      $region35: #{mmdit_forward.24} parent=23 // pred_region
        %p275 = scmp.lt.s32.totalorder %s18, 1
        %s276 = scalar_select %p275, %s18, 1
        %p277 = scmp.lt.s32.totalorder %s20, 0
        %s278 = scalar_select %p277, %s20, 0
        %s279 = sadd.s32 %s278, %s276
        %s280 = scalar_lea.vmem %s4, %s279
      $region36: #{mmdit_forward.24} parent=23 // pred_fallthru
        _
    $region24: #{mmdit_forward.24} parent=5 // pred_fallthru
      _
    %p281 = scmp.le.s32.totalorder 1, %s11
    %p282 = scmp.lt.s32.totalorder %s11, 3
    %p283 = pnand %p281, %p282
    %p284 = pneg %p283
    // Predicated region
    $region37: #{mmdit_forward.24} parent=5 // pred_check
      _
    $region38: #{mmdit_forward.24} parent=5 // pred_check_branch
      %286 = sbr.rel (%p283) target = $region40
    $region39: #{mmdit_forward.24} parent=5 // pred_region
      %s287 = ssub.s32 %s11, 1
      %p288 = scmp.lt.s32.totalorder %s22, 1
      %s289 = scalar_select %p288, %s22, 1
      %p290 = scmp.lt.s32.totalorder %s23, 0
      %s291 = scalar_select %p290, %s23, 0
      %p292 = scmp.lt.s32.totalorder %s25, 0
      %s293 = scalar_select %p292, %s25, 0
      %s294 = sadd.s32 %s293, %s291
      %s295 = sadd.s32 %s294, %s289
      %s296 = smul.addr %s295, 8
      %s297 = scalar_lea.vmem %s0, %s296
      %p298 = pneg %p67
      %p299 = pneg %p64
      %s300 = smul.u32 4, %s25
      %p301 = scmp.lt.s32.totalorder %s300, 3
      %s302 = scalar_select %p301, %s300, 3
      %p303 = scmp.lt.s32.totalorder %s24, 0
      %s304 = scalar_select %p303, %s24, 0
      %s305 = sadd.s32 %s304, %s302
      %s306 = smul.addr %s305, 8
      %s307 = scalar_lea.vmem %s1, %s306
      %p308 = pneg %p95
      %p309 = pneg %p92
      %p310 = scmp.lt.s32.totalorder %s24, 0
      %s311 = scalar_select %p310, %s24, 0
      %s312 = scalar_lea.vmem %s2, %s311
      %p313 = pneg %p121
      %p314 = pneg %p118
      %p315 = scmp.lt.s32.totalorder %s22, 1
      %s316 = scalar_select %p315, %s22, 1
      %p317 = scmp.lt.s32.totalorder %s23, 0
      %s318 = scalar_select %p317, %s23, 0
      %p319 = scmp.lt.s32.totalorder %s24, 0
      %s320 = scalar_select %p319, %s24, 0
      %s321 = sadd.s32 %s320, %s318
      %s322 = sadd.s32 %s321, %s316
      %s323 = smul.addr %s322, 8
      %s324 = scalar_lea.vmem %s3, %s323
      %p325 = pneg %p151
      %p326 = pneg %p148
      %p327 = scmp.lt.s32.totalorder %s22, 1
      %s328 = scalar_select %p327, %s22, 1
      %p329 = scmp.lt.s32.totalorder %s24, 0
      %s330 = scalar_select %p329, %s24, 0
      %s331 = sadd.s32 %s330, %s328
      %s332 = scalar_lea.vmem %s4, %s331
      %p333 = pneg %p179
      %p334 = pneg %p176
      %p335 = pneg %p209
      %p336 = pneg %p206
      %p337 = scmp.lt.s32.totalorder %s22, 1
      %s338 = scalar_select %p337, %s22, 1
      %p339 = scmp.lt.s32.totalorder %s23, 0
      %s340 = scalar_select %p339, %s23, 0
      %p341 = scmp.lt.s32.totalorder %s24, 0
      %s342 = scalar_select %p341, %s24, 0
      %s343 = sadd.s32 %s342, %s340
      %s344 = sadd.s32 %s343, %s338
      %s345 = smul.addr %s344, 8
      %s346 = scalar_lea.vmem %s5, %s345
      %p347 = scmp.lt.s32.totalorder %s22, 1
      %s348 = scalar_select %p347, %s22, 1
      %p349 = scmp.lt.s32.totalorder %s23, 0
      %s350 = scalar_select %p349, %s23, 0
      %p351 = scmp.lt.s32.totalorder %s25, 0
      %s352 = scalar_select %p351, %s25, 0
      %s353 = sadd.s32 %s352, %s350
      %s354 = sadd.s32 %s353, %s348
      %s355 = smul.addr %s354, 8
      %s356 = scalar_lea.vmem %s0, %s355
      %s357 = smul.u32 4, %s25
      %p358 = scmp.lt.s32.totalorder %s357, 3
      %s359 = scalar_select %p358, %s357, 3
      %p360 = scmp.lt.s32.totalorder %s24, 0
      %s361 = scalar_select %p360, %s24, 0
      %s362 = sadd.s32 %s361, %s359
      %s363 = smul.addr %s362, 8
      %s364 = scalar_lea.vmem %s1, %s363
      %s365 = smul.u32 4, %s25
      %p366 = scmp.lt.s32.totalorder %s24, 0
      %s367 = scalar_select %p366, %s24, 0
      %s368 = scalar_lea.vmem %s2, %s367
      %p369 = scmp.lt.s32.totalorder %s22, 1
      %s370 = scalar_select %p369, %s22, 1
      %p371 = scmp.lt.s32.totalorder %s23, 0
      %s372 = scalar_select %p371, %s23, 0
      %p373 = scmp.lt.s32.totalorder %s24, 0
      %s374 = scalar_select %p373, %s24, 0
      %s375 = sadd.s32 %s374, %s372
      %s376 = sadd.s32 %s375, %s370
      %s377 = smul.addr %s376, 8
      %s378 = scalar_lea.vmem %s3, %s377
      %p379 = scmp.lt.s32.totalorder %s22, 1
      %s380 = scalar_select %p379, %s22, 1
      %p381 = scmp.lt.s32.totalorder %s24, 0
      %s382 = scalar_select %p381, %s24, 0
      %s383 = sadd.s32 %s382, %s380
      %s384 = scalar_lea.vmem %s4, %s383
      %p385 = scmp.lt.s32.totalorder %s22, 1
      %s386 = scalar_select %p385, %s22, 1
      %p387 = scmp.lt.s32.totalorder %s23, 0
      %s388 = scalar_select %p387, %s23, 0
      %p389 = scmp.lt.s32.totalorder %s24, 0
      %s390 = scalar_select %p389, %s24, 0
      %s391 = sadd.s32 %s390, %s388
      %s392 = sadd.s32 %s391, %s386
      %s393 = smul.addr %s392, 8
      %s394 = scalar_lea.vmem %s5, %s393
      %p395 = scmp.eq.s32.totalorder %s25, 0
      // Predicated region
      $region41: #{mmdit_forward.24} parent=39 // pred_check
        %p396 = pneg %p395
      $region42: #{mmdit_forward.24} parent=39 // pred_check_branch
        %398 = sbr.rel (%p396) target = $region44
      $region43: #{mmdit_forward.24} parent=39 // pred_region
        %vm399 = vcmask 261120
        %400 = vst.msk [vmem:[#allocation2] sm:$0xff] %vm399, 0.0
      $region44: #{mmdit_forward.24} parent=39 // pred_fallthru
        _
      %v401 = vld [vmem:[#allocation2] sm:$0xff]
      %v402 = vld [vmem:[%s356] sm:$0xff]
      %v403 = vld [vmem:[%s364] sm:$0xff]
      %v404 = vld [vmem:[%s364 + $0x8] sm:$0xff]
      %v405 = vld [vmem:[%s364 + $0x10] sm:$0xff]
      %v406 = vld [vmem:[%s364 + $0x18] sm:$0xff]
      %vm407 = vcmask 261120
      %v409 = vsel %vm407, %v402, 0
      %411 = vmatprep.subr.mxu0 0.0
      %412 = vmatpush1.msra.mxu0 %v403
      %413 = vmatprep.subr.mxu0 0.0
      %414 = vmatpush1.msra.mxu0 %v404
      %415 = vmatprep.subr.mxu0 0.0
      %416 = vmatpush1.msra.mxu0 %v405
      %417 = vmatprep.subr.mxu0 0.0
      %418 = vmatpush1.msra.mxu0 %v406
      %419 = vmatprep.subr.mxu0 0.0
      %420 = vmatpush1.msra.mxu0 0.0
      %421 = vmatprep.subr.mxu0 0.0
      %422 = vmatpush1.msra.mxu0 0.0
      %423 = vmatprep.subr.mxu0 0.0
      %424 = vmatpush1.msra.mxu0 0.0
      %425 = vmatprep.subr.mxu0 0.0
      %426 = vmatpush1.msra.mxu0 0.0
      %427 = vmatprep.subr.mxu0 0.0
      %428 = vmatpush1.msra.mxu0 0.0
      %429 = vmatprep.subr.mxu0 0.0
      %430 = vmatpush1.msra.mxu0 0.0
      %431 = vmatprep.subr.mxu0 0.0
      %432 = vmatpush1.msra.mxu0 0.0
      %433 = vmatprep.subr.mxu0 0.0
      %434 = vmatpush1.msra.mxu0 0.0
      %435 = vmatprep.subr.mxu0 0.0
      %436 = vmatpush1.msra.mxu0 0.0
      %437 = vmatprep.subr.mxu0 0.0
      %438 = vmatpush1.msra.mxu0 0.0
      %439 = vmatprep.subr.mxu0 0.0
      %440 = vmatpush1.msra.mxu0 0.0
      %441 = vmatprep.subr.mxu0 0.0
      %442 = vmatpush1.msra.mxu0 0.0
      %443 = vmatprep.subr.mxu0 0.0
      %444 = vmatpush1.msra.mxu0 0.0
      %445 = vmatprep.subr.mxu0 0.0
      %446 = vmatpush1.msra.mxu0 0.0
      %447 = vmatprep.subr.mxu0 0.0
      %448 = vmatpush1.msra.mxu0 0.0
      %449 = vmatprep.subr.mxu0 0.0
      %450 = vmatpush1.msra.mxu0 0.0
      %451 = vmatprep.subr.mxu0 0.0
      %452 = vmatpush1.msra.mxu0 0.0
      %453 = vmatprep.subr.mxu0 0.0
      %454 = vmatpush1.msra.mxu0 0.0
      %455 = vmatprep.subr.mxu0 0.0
      %456 = vmatpush1.msra.mxu0 0.0
      %457 = vmatprep.subr.mxu0 0.0
      %458 = vmatpush1.msra.mxu0 0.0
      %459 = vmatprep.subr.mxu0 0.0
      %460 = vmatpush1.msra.mxu0 0.0
      %461 = vmatprep.subr.mxu0 0.0
      %462 = vmatpush1.msra.mxu0 0.0
      %463 = vmatprep.subr.mxu0 0.0
      %464 = vmatpush1.msra.mxu0 0.0
      %465 = vmatprep.subr.mxu0 0.0
      %466 = vmatpush1.msra.mxu0 0.0
      %467 = vmatprep.subr.mxu0 0.0
      %468 = vmatpush1.msra.mxu0 0.0
      %469 = vmatprep.subr.mxu0 0.0
      %470 = vmatpush1.msra.mxu0 0.0
      %471 = vmatprep.subr.mxu0 0.0
      %472 = vmatpush1.msra.mxu0 0.0
      %473 = vmatprep.subr.mxu0 0.0
      %474 = vmatpush1.msra.mxu0 0.0
      %475 = vmatprep.mubr.f32.mxu0 0.0
      %476 = vmatmul.mubr.f32.gmra.mrb[0].mxu0 %v409
      %v477 = vpop.f32.mrb[0].mxu0
      %v478 = vadd.f32 0.0, %v477
      %v479 = vpop.f32.mrb[0].mxu0
      %480 = vdwg.mxu0
      %v481 = vadd.f32 %v401, %v478
      %482 = vst.msk [vmem:[#allocation2] sm:$0xff] %vm407, %v481
      // Predicated region
      $region45: #{mmdit_forward.24} parent=39 // pred_check
        %p483 = pneg %p395
      $region46: #{mmdit_forward.24} parent=39 // pred_check_branch
        %485 = sbr.rel (%p483) target = $region48
      $region47: #{mmdit_forward.24} parent=39 // pred_region
        %v486 = vld [vmem:[#allocation2] sm:$0xff]
        %v487 = vld [vmem:[%s368] sm:$0x1]
        %v489 = vlaneseq
        %v490 = vshrl.u32 %v489, 7
        %v491 = vsub.s32 0, %v490
        %v492 = vrot.slane %v487, %v491
        %v494 = vadd.f32 %v486, %v492
        %v495 = vld [vmem:[%s378] sm:$0xff]
        %v496 = vld [vmem:[%s384] sm:$0x1]
        %v498 = vlaneseq
        %v499 = vshrl.u32 %v498, 7
        %v500 = vsub.s32 0, %v499
        %v501 = vrot.slane %v496, %v500
        %v503 = vmul.f32 %v501, %v494
        %v504 = vadd.f32 %v495, %v503
        %505 = vst.msk [vmem:[%s394] sm:$0xff] %vm407, %v504
      $region48: #{mmdit_forward.24} parent=39 // pred_fallthru
        _
      %p506 = scmp.lt.s32.totalorder %s22, 1
      %s507 = scalar_select %p506, %s22, 1
      %p508 = scmp.lt.s32.totalorder %s23, 0
      %s509 = scalar_select %p508, %s23, 0
      %p510 = scmp.lt.s32.totalorder %s24, 0
      %s511 = scalar_select %p510, %s24, 0
      %s512 = sadd.s32 %s511, %s509
      %s513 = sadd.s32 %s512, %s507
      %s514 = smul.addr %s513, 8
      %s515 = scalar_lea.vmem %s5, %s514
      // Predicated region
      $region49: #{mmdit_forward.24} parent=39 // pred_check
        %p516 = pneg %p206
      $region50: #{mmdit_forward.24} parent=39 // pred_check_branch
        %518 = sbr.rel (%p516) target = $region52
      $region51: #{mmdit_forward.24} parent=39 // pred_region
        _
      $region52: #{mmdit_forward.24} parent=39 // pred_fallthru
        _
    $region40: #{mmdit_forward.24} parent=5 // pred_fallthru
      _
    %p519 = scmp.le.s32.totalorder 2, %s11
    // Predicated region
    $region53: #{mmdit_forward.24} parent=5 // pred_check
      %p520 = pneg %p519
    $region54: #{mmdit_forward.24} parent=5 // pred_check_branch
      %522 = sbr.rel (%p520) target = $region56
    $region55: #{mmdit_forward.24} parent=5 // pred_region
      %s523 = ssub.s32 %s11, 2
      // Predicated region
      $region57: #{mmdit_forward.24} parent=55 // pred_check
        %p524 = pneg %p212
      $region58: #{mmdit_forward.24} parent=55 // pred_check_branch
        %526 = sbr.rel (%p524) target = $region60
      $region59: #{mmdit_forward.24} parent=55 // pred_region
        %p527 = scmp.lt.s32.totalorder %s26, 1
        %s528 = scalar_select %p527, %s26, 1
        %p529 = scmp.lt.s32.totalorder %s27, 0
        %s530 = scalar_select %p529, %s27, 0
        %p531 = scmp.lt.s32.totalorder %s28, 0
        %s532 = scalar_select %p531, %s28, 0
        %s533 = sadd.s32 %s532, %s530
        %s534 = sadd.s32 %s533, %s528
        %s535 = smul.addr %s534, 8
        %s536 = scalar_lea.vmem %s5, %s535
      $region60: #{mmdit_forward.24} parent=55 // pred_fallthru
        _
    $region56: #{mmdit_forward.24} parent=5 // pred_fallthru
      _
  $region6: #{mmdit_forward.24} parent=0 // loop_footer
    %s15 = sadd.s32 1, %s11
  $region7: #{mmdit_forward.24} parent=0 // loop_footer_branch
    %10 = sbr.rel target = $region3
  $region8: #{mmdit_forward.24} parent=0 // loop_exit
    _

// kernel: mmdit_forward.26
$region0: #{mmdit_forward.26}
  #allocation0 [shape = 'u32[]', space=smem, size = 0x4, offset = 0x4, fixed_abs, tag = 'smem constant byte address 0x4 - core index']
  #allocation1 [shape = 'u32[144,128]{1,0:T(1,128)}', space=vmem, size = 0x12000, scoped, tag = 'internal scratch']
  #allocation2 [shape = 'f32[8,16]{1,0:T(8,128)}', space=vmem, size = 0x1000, scoped, tag = 'scratch operand']
  #allocation3 [shape = 'f32[8,1]{1,0:T(8,128)}', space=vmem, size = 0x1000, scoped, tag = 'scratch operand']
  #allocation4 [shape = 'f32[8,1]{1,0:T(8,128)}', space=vmem, size = 0x1000, scoped, tag = 'scratch operand']
  #allocation5 [shape = 'f32[8,16]{1,0:T(8,128)}', space=vmem, size = 0x1000, scoped, tag = 'scratch operand']
  %s0 = inlined_call_operand.vmem [shape: f32[2,2,8,16], index: 0, kind: input, shape index: {}]
  %s1 = inlined_call_operand.vmem [shape: f32[2,2,8,16], index: 1, kind: input, shape index: {}]
  %s2 = inlined_call_operand.vmem [shape: f32[2,2,8,16], index: 2, kind: input, shape index: {}]
  %s3 = inlined_call_operand.vmem [shape: f32[1,16], index: 3, kind: input, shape index: {}]
  %s4 = inlined_call_operand.vmem [shape: f32[1,16], index: 4, kind: input, shape index: {}]
  %s5 = inlined_call_operand.vmem [shape: f32[2,2,8,16], index: 5, kind: output, shape index: {}]
  %s6 = sld [smem:[#allocation0]]
  $region61: #{mmdit_forward.26} parent=0
    _
  %s8 = ssub.s32 1, %s6
  %s9 = scalar_select 0, %s8, %s6
  loop: start=0, step=1, limit=6
  $region2: #{mmdit_forward.26} parent=0 // loop_pre_header
    _
  $region3: #{mmdit_forward.26} parent=0 // loop_header
    %s11 = sphi 0, %s15
    %p12 = scmp.ge.s32.totalorder %s11, 6
    %s18 = sphi 0, %s37
    %s19 = sphi 0, %s33
    %s20 = sphi 0, %s29
    %s21 = sphi 0, %s18
    %s22 = sphi 0, %s19
    %s23 = sphi 0, %s20
    %s24 = sphi 0, %s21
    %s25 = sphi 0, %s22
    %s26 = sphi 0, %s23
    %s42 = sphi 0, %s44
    %s45 = sphi 0, %s42
    %s46 = sphi 0, %s45
    %s62 = sphi 0, %s46
    %s76 = sphi 0, %s78
    %s79 = sphi 0, %s76
    %s80 = sphi 0, %s79
    %s96 = sphi 0, %s80
    %s110 = sphi 0, %s112
    %s113 = sphi 0, %s110
    %s114 = sphi 0, %s113
    %s130 = sphi 0, %s114
    %s134 = sphi 0, %s134
    %s136 = sphi 0, %s134
    %s137 = sphi 0, %s136
    %s151 = sphi 0, %s137
    %s155 = sphi 0, %s155
    %s157 = sphi 0, %s155
    %s158 = sphi 0, %s157
    %s172 = sphi 0, %s158
    %s180 = sphi 0, %s182
    %s183 = sphi 0, %s180
    %s184 = sphi 0, %s183
    %s200 = sphi 0, %s184
  $region4: #{mmdit_forward.26} parent=0 // loop_header_branch
    %14 = sbr.rel (%p12) target = $region8
  $region5: #{mmdit_forward.26} parent=0 // loop_body
    %s16 = ssub.s32 %s11, 1
    %s17 = ssub.s32 %s11, 2
    %s27 = sadd.s32 1, %s20
    %p28 = scmp.ge.s32.totalorder %s27, 1
    %s29 = scalar_select %p28, 0, %s27
    %s30 = sadd.s32 1, %s19
    %s31 = scalar_select %p28, %s30, %s19
    %p32 = scmp.ge.s32.totalorder %s31, 2
    %s33 = scalar_select %p32, 0, %s31
    %s34 = sadd.s32 1, %s18
    %s35 = scalar_select %p32, %s34, %s18
    %p36 = scmp.ge.s32.totalorder %s35, 2
    %s37 = scalar_select %p36, 0, %s35
    %s38 = ssub.s32 %s18, %s37
    %s39 = ssub.s32 %s19, %s33
    %s40 = sor.u32 %s38, %s39
    %p41 = scmp.eq.s32.totalorder %s40, 0
    %s43 = sadd.s32 %s42, 1
    %s44 = scalar_select %p41, %s42, %s43
    %p47 = pneg %p41
    %p48 = scmp.eq.s32.totalorder %s11, 3
    %p49 = por %p47, %p48
    %p50 = scmp.ne.s32.totalorder %s42, %s45
    %p51 = scmp.eq.s32.totalorder %s11, 0
    %p52 = por %p50, %p51
    %p53 = scmp.ne.s32.totalorder %s42, %s45
    %p54 = scmp.eq.s32.totalorder %s16, 3
    %p55 = por %p53, %p54
    %p56 = scmp.ne.s32.totalorder %s45, %s46
    %p57 = scmp.eq.s32.totalorder %s16, 0
    %p58 = por %p56, %p57
    %p59 = scmp.ne.s32.totalorder %s45, %s46
    %p60 = scmp.eq.s32.totalorder %s17, 3
    %p61 = por %p59, %p60
    %p63 = scmp.ne.s32.totalorder %s46, %s62
    %p64 = scmp.eq.s32.totalorder %s17, 0
    %p65 = por %p63, %p64
    %p66 = scmp.lt.s32.totalorder %s20, 0
    %s67 = scalar_select %p66, %s20, 0
    %p68 = scmp.lt.s32.totalorder %s29, 0
    %s69 = scalar_select %p68, %s29, 0
    %s70 = ssub.s32 %s18, %s37
    %s71 = ssub.s32 %s19, %s33
    %s72 = sor.u32 %s70, %s71
    %s73 = ssub.s32 %s67, %s69
    %s74 = sor.u32 %s72, %s73
    %p75 = scmp.eq.s32.totalorder %s74, 0
    %s77 = sadd.s32 %s76, 1
    %s78 = scalar_select %p75, %s76, %s77
    %p81 = pneg %p75
    %p82 = scmp.eq.s32.totalorder %s11, 3
    %p83 = por %p81, %p82
    %p84 = scmp.ne.s32.totalorder %s76, %s79
    %p85 = scmp.eq.s32.totalorder %s11, 0
    %p86 = por %p84, %p85
    %p87 = scmp.ne.s32.totalorder %s76, %s79
    %p88 = scmp.eq.s32.totalorder %s16, 3
    %p89 = por %p87, %p88
    %p90 = scmp.ne.s32.totalorder %s79, %s80
    %p91 = scmp.eq.s32.totalorder %s16, 0
    %p92 = por %p90, %p91
    %p93 = scmp.ne.s32.totalorder %s79, %s80
    %p94 = scmp.eq.s32.totalorder %s17, 3
    %p95 = por %p93, %p94
    %p97 = scmp.ne.s32.totalorder %s80, %s96
    %p98 = scmp.eq.s32.totalorder %s17, 0
    %p99 = por %p97, %p98
    %p100 = scmp.lt.s32.totalorder %s20, 0
    %s101 = scalar_select %p100, %s20, 0
    %p102 = scmp.lt.s32.totalorder %s29, 0
    %s103 = scalar_select %p102, %s29, 0
    %s104 = ssub.s32 %s18, %s37
    %s105 = ssub.s32 %s19, %s33
    %s106 = sor.u32 %s104, %s105
    %s107 = ssub.s32 %s101, %s103
    %s108 = sor.u32 %s106, %s107
    %p109 = scmp.eq.s32.totalorder %s108, 0
    %s111 = sadd.s32 %s110, 1
    %s112 = scalar_select %p109, %s110, %s111
    %p115 = pneg %p109
    %p116 = scmp.eq.s32.totalorder %s11, 3
    %p117 = por %p115, %p116
    %p118 = scmp.ne.s32.totalorder %s110, %s113
    %p119 = scmp.eq.s32.totalorder %s11, 0
    %p120 = por %p118, %p119
    %p121 = scmp.ne.s32.totalorder %s110, %s113
    %p122 = scmp.eq.s32.totalorder %s16, 3
    %p123 = por %p121, %p122
    %p124 = scmp.ne.s32.totalorder %s113, %s114
    %p125 = scmp.eq.s32.totalorder %s16, 0
    %p126 = por %p124, %p125
    %p127 = scmp.ne.s32.totalorder %s113, %s114
    %p128 = scmp.eq.s32.totalorder %s17, 3
    %p129 = por %p127, %p128
    %p131 = scmp.ne.s32.totalorder %s114, %s130
    %p132 = scmp.eq.s32.totalorder %s17, 0
    %p133 = por %p131, %p132
    %s135 = sadd.s32 %s134, 1
    %p138 = scmp.eq.s32.totalorder %s11, 3
    %p139 = scmp.ne.s32.totalorder %s134, %s136
    %p140 = scmp.eq.s32.totalorder %s11, 0
    %p141 = por %p139, %p140
    %p142 = scmp.ne.s32.totalorder %s134, %s136
    %p143 = scmp.eq.s32.totalorder %s16, 3
    %p144 = por %p142, %p143
    %p145 = scmp.ne.s32.totalorder %s136, %s137
    %p146 = scmp.eq.s32.totalorder %s16, 0
    %p147 = por %p145, %p146
    %p148 = scmp.ne.s32.totalorder %s136, %s137
    %p149 = scmp.eq.s32.totalorder %s17, 3
    %p150 = por %p148, %p149
    %p152 = scmp.ne.s32.totalorder %s137, %s151
    %p153 = scmp.eq.s32.totalorder %s17, 0
    %p154 = por %p152, %p153
    %s156 = sadd.s32 %s155, 1
    %p159 = scmp.eq.s32.totalorder %s11, 3
    %p160 = scmp.ne.s32.totalorder %s155, %s157
    %p161 = scmp.eq.s32.totalorder %s11, 0
    %p162 = por %p160, %p161
    %p163 = scmp.ne.s32.totalorder %s155, %s157
    %p164 = scmp.eq.s32.totalorder %s16, 3
    %p165 = por %p163, %p164
    %p166 = scmp.ne.s32.totalorder %s157, %s158
    %p167 = scmp.eq.s32.totalorder %s16, 0
    %p168 = por %p166, %p167
    %p169 = scmp.ne.s32.totalorder %s157, %s158
    %p170 = scmp.eq.s32.totalorder %s17, 3
    %p171 = por %p169, %p170
    %p173 = scmp.ne.s32.totalorder %s158, %s172
    %p174 = scmp.eq.s32.totalorder %s17, 0
    %p175 = por %p173, %p174
    %s176 = ssub.s32 %s18, %s37
    %s177 = ssub.s32 %s19, %s33
    %s178 = sor.u32 %s176, %s177
    %p179 = scmp.eq.s32.totalorder %s178, 0
    %s181 = sadd.s32 %s180, 1
    %s182 = scalar_select %p179, %s180, %s181
    %p185 = pneg %p179
    %p186 = scmp.eq.s32.totalorder %s11, 3
    %p187 = por %p185, %p186
    %p188 = scmp.ne.s32.totalorder %s180, %s183
    %p189 = scmp.eq.s32.totalorder %s11, 0
    %p190 = por %p188, %p189
    %p191 = scmp.ne.s32.totalorder %s180, %s183
    %p192 = scmp.eq.s32.totalorder %s16, 3
    %p193 = por %p191, %p192
    %p194 = scmp.ne.s32.totalorder %s183, %s184
    %p195 = scmp.eq.s32.totalorder %s16, 0
    %p196 = por %p194, %p195
    %p197 = scmp.ne.s32.totalorder %s183, %s184
    %p198 = scmp.eq.s32.totalorder %s17, 3
    %p199 = por %p197, %p198
    %p201 = scmp.ne.s32.totalorder %s184, %s200
    %p202 = scmp.eq.s32.totalorder %s17, 0
    %p203 = por %p201, %p202
    %p204 = scmp.le.s32.totalorder 1, %s11
    %p205 = scmp.lt.s32.totalorder %s11, 5
    %p206 = pnand %p204, %p205
    %p207 = pneg %p206
    // Predicated region
    $region9: #{mmdit_forward.26} parent=5 // pred_check
      _
    $region10: #{mmdit_forward.26} parent=5 // pred_check_branch
      %209 = sbr.rel (%p206) target = $region12
    $region11: #{mmdit_forward.26} parent=5 // pred_region
      %s210 = ssub.s32 %s11, 1
      // Predicated region
      $region13: #{mmdit_forward.26} parent=11 // pred_check
        %p211 = pneg %p147
      $region14: #{mmdit_forward.26} parent=11 // pred_check_branch
        %213 = sbr.rel (%p211) target = $region16
      $region15: #{mmdit_forward.26} parent=11 // pred_region
        _
      $region16: #{mmdit_forward.26} parent=11 // pred_fallthru
        _
      // Predicated region
      $region17: #{mmdit_forward.26} parent=11 // pred_check
        %p214 = pneg %p168
      $region18: #{mmdit_forward.26} parent=11 // pred_check_branch
        %216 = sbr.rel (%p214) target = $region20
      $region19: #{mmdit_forward.26} parent=11 // pred_region
        _
      $region20: #{mmdit_forward.26} parent=11 // pred_fallthru
        _
    $region12: #{mmdit_forward.26} parent=5 // pred_fallthru
      _
    %p217 = scmp.lt.s32.totalorder %s11, 4
    // Predicated region
    $region21: #{mmdit_forward.26} parent=5 // pred_check
      %p218 = pneg %p217
    $region22: #{mmdit_forward.26} parent=5 // pred_check_branch
      %220 = sbr.rel (%p218) target = $region24
    $region23: #{mmdit_forward.26} parent=5 // pred_region
      // Predicated region
      $region25: #{mmdit_forward.26} parent=23 // pred_check
        %p221 = pneg %p52
      $region26: #{mmdit_forward.26} parent=23 // pred_check_branch
        %223 = sbr.rel (%p221) target = $region28
      $region27: #{mmdit_forward.26} parent=23 // pred_region
        %p224 = scmp.lt.s32.totalorder %s18, 1
        %s225 = scalar_select %p224, %s18, 1
        %p226 = scmp.lt.s32.totalorder %s19, 1
        %s227 = scalar_select %p226, %s19, 1
        %s228 = smul.addr %s225, 2
        %s229 = sadd.s32 %s227, %s228
        %s230 = smul.addr %s229, 8
        %s231 = scalar_lea.vmem %s0, %s230
      $region28: #{mmdit_forward.26} parent=23 // pred_fallthru
        _
      // Predicated region
      $region29: #{mmdit_forward.26} parent=23 // pred_check
        %p232 = pneg %p86
      $region30: #{mmdit_forward.26} parent=23 // pred_check_branch
        %234 = sbr.rel (%p232) target = $region32
      $region31: #{mmdit_forward.26} parent=23 // pred_region
        %p235 = scmp.lt.s32.totalorder %s20, 0
        %s236 = scalar_select %p235, %s20, 0
        %p237 = scmp.lt.s32.totalorder %s18, 1
        %s238 = scalar_select %p237, %s18, 1
        %p239 = scmp.lt.s32.totalorder %s19, 1
        %s240 = scalar_select %p239, %s19, 1
        %p241 = scmp.lt.s32.totalorder %s236, 0
        %s242 = scalar_select %p241, %s236, 0
        %s243 = sadd.s32 %s242, %s240
        %s244 = smul.addr %s238, 2
        %s245 = sadd.s32 %s243, %s244
        %s246 = smul.addr %s245, 8
        %s247 = scalar_lea.vmem %s1, %s246
        %p248 = scmp.lt.s32.totalorder %s20, 0
        %s249 = scalar_select %p248, %s20, 0
      $region32: #{mmdit_forward.26} parent=23 // pred_fallthru
        _
      // Predicated region
      $region33: #{mmdit_forward.26} parent=23 // pred_check
        %p250 = pneg %p120
      $region34: #{mmdit_forward.26} parent=23 // pred_check_branch
        %252 = sbr.rel (%p250) target = $region36
      $region35: #{mmdit_forward.26} parent=23 // pred_region
        %p253 = scmp.lt.s32.totalorder %s20, 0
        %s254 = scalar_select %p253, %s20, 0
        %p255 = scmp.lt.s32.totalorder %s18, 1
        %s256 = scalar_select %p255, %s18, 1
        %p257 = scmp.lt.s32.totalorder %s19, 1
        %s258 = scalar_select %p257, %s19, 1
        %p259 = scmp.lt.s32.totalorder %s254, 0
        %s260 = scalar_select %p259, %s254, 0
        %s261 = sadd.s32 %s260, %s258
        %s262 = smul.addr %s256, 2
        %s263 = sadd.s32 %s261, %s262
        %s264 = smul.addr %s263, 8
        %s265 = scalar_lea.vmem %s2, %s264
        %p266 = scmp.lt.s32.totalorder %s20, 0
        %s267 = scalar_select %p266, %s20, 0
      $region36: #{mmdit_forward.26} parent=23 // pred_fallthru
        _
    $region24: #{mmdit_forward.26} parent=5 // pred_fallthru
      _
    %p268 = scmp.le.s32.totalorder 1, %s11
    %p269 = scmp.lt.s32.totalorder %s11, 5
    %p270 = pnand %p268, %p269
    %p271 = pneg %p270
    // Predicated region
    $region37: #{mmdit_forward.26} parent=5 // pred_check
      _
    $region38: #{mmdit_forward.26} parent=5 // pred_check_branch
      %273 = sbr.rel (%p270) target = $region40
    $region39: #{mmdit_forward.26} parent=5 // pred_region
      %s274 = ssub.s32 %s11, 1
      %p275 = scmp.lt.s32.totalorder %s21, 1
      %s276 = scalar_select %p275, %s21, 1
      %p277 = scmp.lt.s32.totalorder %s22, 1
      %s278 = scalar_select %p277, %s22, 1
      %s279 = smul.addr %s276, 2
      %s280 = sadd.s32 %s278, %s279
      %s281 = smul.addr %s280, 8
      %s282 = scalar_lea.vmem %s0, %s281
      %p283 = pneg %p58
      %p284 = pneg %p55
      %p285 = scmp.lt.s32.totalorder %s23, 0
      %s286 = scalar_select %p285, %s23, 0
      %p287 = scmp.lt.s32.totalorder %s21, 1
      %s288 = scalar_select %p287, %s21, 1
      %p289 = scmp.lt.s32.totalorder %s22, 1
      %s290 = scalar_select %p289, %s22, 1
      %p291 = scmp.lt.s32.totalorder %s286, 0
      %s292 = scalar_select %p291, %s286, 0
      %s293 = sadd.s32 %s292, %s290
      %s294 = smul.addr %s288, 2
      %s295 = sadd.s32 %s293, %s294
      %s296 = smul.addr %s295, 8
      %s297 = scalar_lea.vmem %s1, %s296
      %p298 = pneg %p92
      %p299 = pneg %p89
      %p300 = scmp.lt.s32.totalorder %s23, 0
      %s301 = scalar_select %p300, %s23, 0
      %p302 = scmp.lt.s32.totalorder %s21, 1
      %s303 = scalar_select %p302, %s21, 1
      %p304 = scmp.lt.s32.totalorder %s22, 1
      %s305 = scalar_select %p304, %s22, 1
      %p306 = scmp.lt.s32.totalorder %s301, 0
      %s307 = scalar_select %p306, %s301, 0
      %s308 = sadd.s32 %s307, %s305
      %s309 = smul.addr %s303, 2
      %s310 = sadd.s32 %s308, %s309
      %s311 = smul.addr %s310, 8
      %s312 = scalar_lea.vmem %s2, %s311
      %p313 = pneg %p126
      %p314 = pneg %p123
      %p315 = pneg %p147
      %p316 = pneg %p144
      %p317 = pneg %p168
      %p318 = pneg %p165
      %p319 = pneg %p196
      %p320 = pneg %p193
      %p321 = scmp.lt.s32.totalorder %s21, 1
      %s322 = scalar_select %p321, %s21, 1
      %p323 = scmp.lt.s32.totalorder %s22, 1
      %s324 = scalar_select %p323, %s22, 1
      %s325 = smul.addr %s322, 2
      %s326 = sadd.s32 %s324, %s325
      %s327 = smul.addr %s326, 8
      %s328 = scalar_lea.vmem %s5, %s327
      %p329 = scmp.lt.s32.totalorder %s21, 1
      %s330 = scalar_select %p329, %s21, 1
      %p331 = scmp.lt.s32.totalorder %s22, 1
      %s332 = scalar_select %p331, %s22, 1
      %s333 = smul.addr %s330, 2
      %s334 = sadd.s32 %s332, %s333
      %s335 = smul.addr %s334, 8
      %s336 = scalar_lea.vmem %s0, %s335
      %p337 = scmp.lt.s32.totalorder %s23, 0
      %s338 = scalar_select %p337, %s23, 0
      %p339 = scmp.lt.s32.totalorder %s21, 1
      %s340 = scalar_select %p339, %s21, 1
      %p341 = scmp.lt.s32.totalorder %s22, 1
      %s342 = scalar_select %p341, %s22, 1
      %p343 = scmp.lt.s32.totalorder %s338, 0
      %s344 = scalar_select %p343, %s338, 0
      %s345 = sadd.s32 %s344, %s342
      %s346 = smul.addr %s340, 2
      %s347 = sadd.s32 %s345, %s346
      %s348 = smul.addr %s347, 8
      %s349 = scalar_lea.vmem %s1, %s348
      %p350 = scmp.lt.s32.totalorder %s23, 0
      %s351 = scalar_select %p350, %s23, 0
      %p352 = scmp.lt.s32.totalorder %s23, 0
      %s353 = scalar_select %p352, %s23, 0
      %p354 = scmp.lt.s32.totalorder %s21, 1
      %s355 = scalar_select %p354, %s21, 1
      %p356 = scmp.lt.s32.totalorder %s22, 1
      %s357 = scalar_select %p356, %s22, 1
      %p358 = scmp.lt.s32.totalorder %s353, 0
      %s359 = scalar_select %p358, %s353, 0
      %s360 = sadd.s32 %s359, %s357
      %s361 = smul.addr %s355, 2
      %s362 = sadd.s32 %s360, %s361
      %s363 = smul.addr %s362, 8
      %s364 = scalar_lea.vmem %s2, %s363
      %p365 = scmp.lt.s32.totalorder %s23, 0
      %s366 = scalar_select %p365, %s23, 0
      %p367 = scmp.lt.s32.totalorder %s21, 1
      %s368 = scalar_select %p367, %s21, 1
      %p369 = scmp.lt.s32.totalorder %s22, 1
      %s370 = scalar_select %p369, %s22, 1
      %s371 = smul.addr %s368, 2
      %s372 = sadd.s32 %s370, %s371
      %s373 = smul.addr %s372, 8
      %s374 = scalar_lea.vmem %s5, %s373
      %p375 = scmp.eq.s32.totalorder %s23, 0
      // Predicated region
      $region41: #{mmdit_forward.26} parent=39 // pred_check
        %p376 = pneg %p375
      $region42: #{mmdit_forward.26} parent=39 // pred_check_branch
        %378 = sbr.rel (%p376) target = $region44
      $region43: #{mmdit_forward.26} parent=39 // pred_region
        %v379 = vld [vmem:[%s336] sm:$0xff]
        %v380 = vmul.f32 %v379, %v379
        %vm381 = vcmask 130048
        %v382 = vsel %vm381, %v380, 0.0
        %383 = vadd.xlane.f32.xlu0 %v382
        %v384 = vpop.xlane.xlu0 %383
        %v385 = vrcp.pop 16.0
        %v386 = vmul.f32 %v384, %v385
        %v387 = vadd.f32 %v386, 1e-06
        %v388 = vrsqrt.pop %v387
        %v389 = vmul.f32 %v379, %v388
        %v390 = vld [vmem:[%s3] sm:$0x1]
        %v392 = vlaneseq
        %v393 = vshrl.u32 %v392, 7
        %v394 = vsub.s32 0, %v393
        %v395 = vrot.slane %v390, %v394
        %v397 = vmul.f32 %v389, %v395
        %v398 = vmul.f32 %v397, 0.25
        %399 = vst.msk [vmem:[#allocation2] sm:$0xff] %vm381, %v398
        %vm400 = vcmask 7168
        %401 = vst.msk [vmem:[#allocation3] sm:$0xff] %vm400, -inf
        %402 = vst.msk [vmem:[#allocation4] sm:$0xff] %vm400, 0.0
        %403 = vst.msk [vmem:[#allocation5] sm:$0xff] %vm381, 0.0
      $region44: #{mmdit_forward.26} parent=39 // pred_fallthru
        _
      %v404 = vld [vmem:[%s349] sm:$0xff]
      %v405 = vmul.f32 %v404, %v404
      %vm406 = vcmask 130048
      %v407 = vsel %vm406, %v405, 0.0
      %408 = vadd.xlane.f32.xlu0 %v407
      %v409 = vpop.xlane.xlu0 %408
      %v410 = vrcp.pop 16.0
      %v411 = vmul.f32 %v409, %v410
      %v412 = vadd.f32 %v411, 1e-06
      %v413 = vrsqrt.pop %v412
      %v414 = vmul.f32 %v404, %v413
      %v415 = vld [vmem:[%s4] sm:$0x1]
      %v417 = vlaneseq
      %v418 = vshrl.u32 %v417, 7
      %v419 = vsub.s32 0, %v418
      %v420 = vrot.slane %v415, %v419
      %v422 = vmul.f32 %v414, %v420
      %v423 = vld [vmem:[#allocation2] sm:$0xff]
      %v425 = vsel %vm406, %v423, 0
      %v428 = vsel %vm406, %v422, 0
      %430 = vmatprep.subr.mxu0 0.0
      %431 = vmatpush1.xpose.msra.mxu0 %v428
      %432 = vmatprep.subr.mxu0 0.0
      %433 = vmatpush1.xpose.msra.mxu0 0.0
      %434 = vmatprep.subr.mxu0 0.0
      %435 = vmatpush1.xpose.msra.mxu0 0.0
      %436 = vmatprep.subr.mxu0 0.0
      %437 = vmatpush1.xpose.msra.mxu0 0.0
      %438 = vmatprep.subr.mxu0 0.0
      %439 = vmatpush1.xpose.msra.mxu0 0.0
      %440 = vmatprep.subr.mxu0 0.0
      %441 = vmatpush1.xpose.msra.mxu0 0.0
      %442 = vmatprep.subr.mxu0 0.0
      %443 = vmatpush1.xpose.msra.mxu0 0.0
      %444 = vmatprep.subr.mxu0 0.0
      %445 = vmatpush1.xpose.msra.mxu0 0.0
      %446 = vmatprep.subr.mxu0 0.0
      %447 = vmatpush1.xpose.msra.mxu0 0.0
      %448 = vmatprep.subr.mxu0 0.0
      %449 = vmatpush1.xpose.msra.mxu0 0.0
      %450 = vmatprep.subr.mxu0 0.0
      %451 = vmatpush1.xpose.msra.mxu0 0.0
      %452 = vmatprep.subr.mxu0 0.0
      %453 = vmatpush1.xpose.msra.mxu0 0.0
      %454 = vmatprep.subr.mxu0 0.0
      %455 = vmatpush1.xpose.msra.mxu0 0.0
      %456 = vmatprep.subr.mxu0 0.0
      %457 = vmatpush1.xpose.msra.mxu0 0.0
      %458 = vmatprep.subr.mxu0 0.0
      %459 = vmatpush1.xpose.msra.mxu0 0.0
      %460 = vmatprep.subr.mxu0 0.0
      %461 = vmatpush1.xpose.msra.mxu0 0.0
      %462 = vmatprep.subr.mxu0 0.0
      %463 = vmatpush1.xpose.msra.mxu0 0.0
      %464 = vmatprep.subr.mxu0 0.0
      %465 = vmatpush1.xpose.msra.mxu0 0.0
      %466 = vmatprep.subr.mxu0 0.0
      %467 = vmatpush1.xpose.msra.mxu0 0.0
      %468 = vmatprep.subr.mxu0 0.0
      %469 = vmatpush1.xpose.msra.mxu0 0.0
      %470 = vmatprep.subr.mxu0 0.0
      %471 = vmatpush1.xpose.msra.mxu0 0.0
      %472 = vmatprep.subr.mxu0 0.0
      %473 = vmatpush1.xpose.msra.mxu0 0.0
      %474 = vmatprep.subr.mxu0 0.0
      %475 = vmatpush1.xpose.msra.mxu0 0.0
      %476 = vmatprep.subr.mxu0 0.0
      %477 = vmatpush1.xpose.msra.mxu0 0.0
      %478 = vmatprep.subr.mxu0 0.0
      %479 = vmatpush1.xpose.msra.mxu0 0.0
      %480 = vmatprep.subr.mxu0 0.0
      %481 = vmatpush1.xpose.msra.mxu0 0.0
      %482 = vmatprep.subr.mxu0 0.0
      %483 = vmatpush1.xpose.msra.mxu0 0.0
      %484 = vmatprep.subr.mxu0 0.0
      %485 = vmatpush1.xpose.msra.mxu0 0.0
      %486 = vmatprep.subr.mxu0 0.0
      %487 = vmatpush1.xpose.msra.mxu0 0.0
      %488 = vmatprep.subr.mxu0 0.0
      %489 = vmatpush1.xpose.msra.mxu0 0.0
      %490 = vmatprep.subr.mxu0 0.0
      %491 = vmatpush1.xpose.msra.mxu0 0.0
      %492 = vmatprep.subr.mxu0 0.0
      %493 = vmatpush1.xpose.msra.mxu0 0.0
      %494 = vmatprep.mubr.f32.mxu0 0.0
      %495 = vmatmul.mubr.f32.gmra.mrb[0].mxu0 %v425
      %v496 = vpop.f32.mrb[0].mxu0
      %v497 = vadd.f32 0.0, %v496
      %v498 = vpop.f32.mrb[0].mxu0
      %499 = vdwg.mxu0
      %v500 = vld [vmem:[#allocation3] sm:$0xff]
      %vm501 = vcmask 64512
      %v502 = vsel %vm501, %v497, -inf
      %503 = vmax.xlane.f32.xlu0 %v502
      %v504 = vpop.xlane.xlu0 %503
      %v505 = vmax.f32 %v500, %v504
      %v506 = vsub.f32 %v500, %v505
      %v507 = vmul.f32 %v506, 1.442695
      %v508 = vpow.pop %v507
      %510 = vset.pattern.permute.xlu0 0
      %511 = vperm.xlu0 %510, %v505
      %v512 = vpop.permute.xlu0 %511
      %v514 = vsub.f32 %v497, %v512
      %v515 = vmul.f32 %v514, 1.442695
      %v516 = vpow.pop %v515
      %v517 = vld [vmem:[#allocation4] sm:$0xff]
      %v518 = vmul.f32 %v508, %v517
      %v519 = vsel %vm501, %v516, 0.0
      %520 = vadd.xlane.f32.xlu0 %v519
      %v521 = vpop.xlane.xlu0 %520
      %v522 = vadd.f32 %v518, %v521
      %vm523 = vcmask 7168
      %524 = vst.msk [vmem:[#allocation4] sm:$0xff] %vm523, %v522
      %v525 = vld [vmem:[#allocation5] sm:$0xff]
      %527 = vset.pattern.permute.xlu0 0
      %528 = vperm.xlu0 %527, %v508
      %v529 = vpop.permute.xlu0 %528
      %v531 = vmul.f32 %v529, %v525
      %v532 = vld [vmem:[%s364] sm:$0xff]
      %v534 = vsel %vm501, %v516, 0
      %536 = vmatprep.subr.mxu0 0.0
      %537 = vmatpush1.msra.mxu0 %v532
      %538 = vmatprep.subr.mxu0 0.0
      %539 = vmatpush1.msra.mxu0 0.0
      %540 = vmatprep.subr.mxu0 0.0
      %541 = vmatpush1.msra.mxu0 0.0
      %542 = vmatprep.subr.mxu0 0.0
      %543 = vmatpush1.msra.mxu0 0.0
      %544 = vmatprep.subr.mxu0 0.0
      %545 = vmatpush1.msra.mxu0 0.0
      %546 = vmatprep.subr.mxu0 0.0
      %547 = vmatpush1.msra.mxu0 0.0
      %548 = vmatprep.subr.mxu0 0.0
      %549 = vmatpush1.msra.mxu0 0.0
      %550 = vmatprep.subr.mxu0 0.0
      %551 = vmatpush1.msra.mxu0 0.0
      %552 = vmatprep.subr.mxu0 0.0
      %553 = vmatpush1.msra.mxu0 0.0
      %554 = vmatprep.subr.mxu0 0.0
      %555 = vmatpush1.msra.mxu0 0.0
      %556 = vmatprep.subr.mxu0 0.0
      %557 = vmatpush1.msra.mxu0 0.0
      %558 = vmatprep.subr.mxu0 0.0
      %559 = vmatpush1.msra.mxu0 0.0
      %560 = vmatprep.subr.mxu0 0.0
      %561 = vmatpush1.msra.mxu0 0.0
      %562 = vmatprep.subr.mxu0 0.0
      %563 = vmatpush1.msra.mxu0 0.0
      %564 = vmatprep.subr.mxu0 0.0
      %565 = vmatpush1.msra.mxu0 0.0
      %566 = vmatprep.subr.mxu0 0.0
      %567 = vmatpush1.msra.mxu0 0.0
      %568 = vmatprep.subr.mxu0 0.0
      %569 = vmatpush1.msra.mxu0 0.0
      %570 = vmatprep.subr.mxu0 0.0
      %571 = vmatpush1.msra.mxu0 0.0
      %572 = vmatprep.subr.mxu0 0.0
      %573 = vmatpush1.msra.mxu0 0.0
      %574 = vmatprep.subr.mxu0 0.0
      %575 = vmatpush1.msra.mxu0 0.0
      %576 = vmatprep.subr.mxu0 0.0
      %577 = vmatpush1.msra.mxu0 0.0
      %578 = vmatprep.subr.mxu0 0.0
      %579 = vmatpush1.msra.mxu0 0.0
      %580 = vmatprep.subr.mxu0 0.0
      %581 = vmatpush1.msra.mxu0 0.0
      %582 = vmatprep.subr.mxu0 0.0
      %583 = vmatpush1.msra.mxu0 0.0
      %584 = vmatprep.subr.mxu0 0.0
      %585 = vmatpush1.msra.mxu0 0.0
      %586 = vmatprep.subr.mxu0 0.0
      %587 = vmatpush1.msra.mxu0 0.0
      %588 = vmatprep.subr.mxu0 0.0
      %589 = vmatpush1.msra.mxu0 0.0
      %590 = vmatprep.subr.mxu0 0.0
      %591 = vmatpush1.msra.mxu0 0.0
      %592 = vmatprep.subr.mxu0 0.0
      %593 = vmatpush1.msra.mxu0 0.0
      %594 = vmatprep.subr.mxu0 0.0
      %595 = vmatpush1.msra.mxu0 0.0
      %596 = vmatprep.subr.mxu0 0.0
      %597 = vmatpush1.msra.mxu0 0.0
      %598 = vmatprep.subr.mxu0 0.0
      %599 = vmatpush1.msra.mxu0 0.0
      %600 = vmatprep.mubr.f32.mxu0 0.0
      %601 = vmatmul.mubr.f32.gmra.mrb[0].mxu0 %v534
      %v602 = vpop.f32.mrb[0].mxu0
      %v603 = vadd.f32 0.0, %v602
      %v604 = vpop.f32.mrb[0].mxu0
      %605 = vdwg.mxu0
      %v606 = vadd.f32 %v531, %v603
      %607 = vst.msk [vmem:[#allocation5] sm:$0xff] %vm406, %v606
      %608 = vst.msk [vmem:[#allocation3] sm:$0xff] %vm523, %v505
      // Predicated region
      $region45: #{mmdit_forward.26} parent=39 // pred_check
        %p609 = pneg %p375
      $region46: #{mmdit_forward.26} parent=39 // pred_check_branch
        %611 = sbr.rel (%p609) target = $region48
      $region47: #{mmdit_forward.26} parent=39 // pred_region
        %v612 = vld [vmem:[#allocation5] sm:$0xff]
        %v613 = vld [vmem:[#allocation4] sm:$0xff]
        %v614 = vrcp.pop %v613
        %616 = vset.pattern.permute.xlu0 0
        %617 = vperm.xlu0 %616, %v614
        %v618 = vpop.permute.xlu0 %617
        %v620 = vmul.f32 %v612, %v618
        %621 = vst.msk [vmem:[%s374] sm:$0xff] %vm406, %v620
      $region48: #{mmdit_forward.26} parent=39 // pred_fallthru
        _
      %p622 = scmp.lt.s32.totalorder %s21, 1
      %s623 = scalar_select %p622, %s21, 1
      %p624 = scmp.lt.s32.totalorder %s22, 1
      %s625 = scalar_select %p624, %s22, 1
      %s626 = smul.addr %s623, 2
      %s627 = sadd.s32 %s625, %s626
      %s628 = smul.addr %s627, 8
      %s629 = scalar_lea.vmem %s5, %s628
      // Predicated region
      $region49: #{mmdit_forward.26} parent=39 // pred_check
        %p630 = pneg %p193
      $region50: #{mmdit_forward.26} parent=39 // pred_check_branch
        %632 = sbr.rel (%p630) target = $region52
      $region51: #{mmdit_forward.26} parent=39 // pred_region
        _
      $region52: #{mmdit_forward.26} parent=39 // pred_fallthru
        _
    $region40: #{mmdit_forward.26} parent=5 // pred_fallthru
      _
    %p633 = scmp.le.s32.totalorder 2, %s11
    // Predicated region
    $region53: #{mmdit_forward.26} parent=5 // pred_check
      %p634 = pneg %p633
    $region54: #{mmdit_forward.26} parent=5 // pred_check_branch
      %636 = sbr.rel (%p634) target = $region56
    $region55: #{mmdit_forward.26} parent=5 // pred_region
      %s637 = ssub.s32 %s11, 2
      // Predicated region
      $region57: #{mmdit_forward.26} parent=55 // pred_check
        %p638 = pneg %p199
      $region58: #{mmdit_forward.26} parent=55 // pred_check_branch
        %640 = sbr.rel (%p638) target = $region60
      $region59: #{mmdit_forward.26} parent=55 // pred_region
        %p641 = scmp.lt.s32.totalorder %s24, 1
        %s642 = scalar_select %p641, %s24, 1
        %p643 = scmp.lt.s32.totalorder %s25, 1
        %s644 = scalar_select %p643, %s25, 1
        %s645 = smul.addr %s642, 2
        %s646 = sadd.s32 %s644, %s645
        %s647 = smul.addr %s646, 8
        %s648 = scalar_lea.vmem %s5, %s647
      $region60: #{mmdit_forward.26} parent=55 // pred_fallthru
        _
    $region56: #{mmdit_forward.26} parent=5 // pred_fallthru
      _
  $region6: #{mmdit_forward.26} parent=0 // loop_footer
    %s15 = sadd.s32 1, %s11
  $region7: #{mmdit_forward.26} parent=0 // loop_footer_branch
    %10 = sbr.rel target = $region3
  $region8: #{mmdit_forward.26} parent=0 // loop_exit
    _

// kernel: mmdit_forward.29
$region0: #{mmdit_forward.29}
  #allocation0 [shape = 'u32[]', space=smem, size = 0x4, offset = 0x4, fixed_abs, tag = 'smem constant byte address 0x4 - core index']
  #allocation1 [shape = 'u32[144,128]{1,0:T(1,128)}', space=vmem, size = 0x12000, scoped, tag = 'internal scratch']
  #allocation2 [shape = 'f32[8,32]{1,0:T(8,128)}', space=vmem, size = 0x1000, scoped, tag = 'scratch operand']
  %s0 = inlined_call_operand.vmem [shape: f32[2,8,32], index: 0, kind: input, shape index: {}]
  %s1 = inlined_call_operand.vmem [shape: f32[32,32], index: 1, kind: input, shape index: {}]
  %s2 = inlined_call_operand.vmem [shape: f32[1,32], index: 2, kind: input, shape index: {}]
  %s3 = inlined_call_operand.vmem [shape: f32[2,8,32], index: 3, kind: input, shape index: {}]
  %s4 = inlined_call_operand.vmem [shape: f32[2,1,32], index: 4, kind: input, shape index: {}]
  %s5 = inlined_call_operand.hbm [shape: f32[2,8,32], index: 5, kind: output, shape index: {}]
  %s6 = sld [smem:[#allocation0]]
  $region61: #{mmdit_forward.29} parent=0
    _
  %s8 = ssub.s32 1, %s6
  %s9 = scalar_select 0, %s8, %s6
  $region1: #{mmdit_forward.29} parent=0
    #allocation3 [shape = 'u8[8192]{0}', space=vmem, size = 0x2000, scoped, tag = 'output window, operand 0']
    #allocation4 [shape = 's32[2]{0}', space=sflag, size = 0x8, scoped, tag = 'scoped memory for mmdit_forward.29']
    %10 = vsyncpa [#allocation4], 0
    %s11 = scalar_lea.sflag [#allocation4], 1
    %12 = vsyncpa %s11, 0
    loop: start=0, step=1, limit=4
    $region2: #{mmdit_forward.29} parent=1 // loop_pre_header
      _
    $region3: #{mmdit_forward.29} parent=1 // loop_header
      %s14 = sphi 0, %s18
      %p15 = scmp.ge.s32.totalorder %s14, 4
      %s21 = sphi 0, %s47
      %s22 = sphi 0, %s43
      %s23 = sphi 0, %s39
      %s24 = sphi 0, %s35
      %s25 = sphi 0, %s21
      %s26 = sphi 0, %s22
      %s27 = sphi 0, %s23
      %s28 = sphi 0, %s24
      %s29 = sphi 0, %s25
      %s30 = sphi 0, %s26
      %s31 = sphi 0, %s27
      %s32 = sphi 0, %s28
      %s54 = sphi 0, %s56
      %s57 = sphi 0, %s54
      %s58 = sphi 0, %s57
      %s74 = sphi 0, %s58
      %s82 = sphi 0, %s84
      %s85 = sphi 0, %s82
      %s86 = sphi 0, %s85
      %s102 = sphi 0, %s86
      %s108 = sphi 0, %s110
      %s111 = sphi 0, %s108
      %s112 = sphi 0, %s111
      %s128 = sphi 0, %s112
      %s138 = sphi 0, %s140
      %s141 = sphi 0, %s138
      %s142 = sphi 0, %s141
      %s158 = sphi 0, %s142
      %s166 = sphi 0, %s168
      %s169 = sphi 0, %s166
      %s170 = sphi 0, %s169
      %s186 = sphi 0, %s170
      %s196 = sphi 0, %s198
      %s199 = sphi 0, %s196
      %s200 = sphi 0, %s199
      %s216 = sphi 0, %s200
    $region4: #{mmdit_forward.29} parent=1 // loop_header_branch
      %17 = sbr.rel (%p15) target = $region8
    $region5: #{mmdit_forward.29} parent=1 // loop_body
      %s19 = ssub.s32 %s14, 1
      %s20 = ssub.s32 %s14, 2
      %s33 = sadd.s32 1, %s24
      %p34 = scmp.ge.s32.totalorder %s33, 1
      %s35 = scalar_select %p34, 0, %s33
      %s36 = sadd.s32 1, %s23
      %s37 = scalar_select %p34, %s36, %s23
      %p38 = scmp.ge.s32.totalorder %s37, 1
      %s39 = scalar_select %p38, 0, %s37
      %s40 = sadd.s32 1, %s22
      %s41 = scalar_select %p38, %s40, %s22
      %p42 = scmp.ge.s32.totalorder %s41, 1
      %s43 = scalar_select %p42, 0, %s41
      %s44 = sadd.s32 1, %s21
      %s45 = scalar_select %p42, %s44, %s21
      %p46 = scmp.ge.s32.totalorder %s45, 2
      %s47 = scalar_select %p46, 0, %s45
      %s48 = ssub.s32 %s21, %s47
      %s49 = ssub.s32 %s22, %s43
      %s50 = sor.u32 %s48, %s49
      %s51 = ssub.s32 %s24, %s35
      %s52 = sor.u32 %s50, %s51
      %p53 = scmp.eq.s32.totalorder %s52, 0
      %s55 = sadd.s32 %s54, 1
      %s56 = scalar_select %p53, %s54, %s55
      %p59 = pneg %p53
      %p60 = scmp.eq.s32.totalorder %s14, 1
      %p61 = por %p59, %p60
      %p62 = scmp.ne.s32.totalorder %s54, %s57
      %p63 = scmp.eq.s32.totalorder %s14, 0
      %p64 = por %p62, %p63
      %p65 = scmp.ne.s32.totalorder %s54, %s57
      %p66 = scmp.eq.s32.totalorder %s19, 1
      %p67 = por %p65, %p66
      %p68 = scmp.ne.s32.totalorder %s57, %s58
      %p69 = scmp.eq.s32.totalorder %s19, 0
      %p70 = por %p68, %p69
      %p71 = scmp.ne.s32.totalorder %s57, %s58
      %p72 = scmp.eq.s32.totalorder %s20, 1
      %p73 = por %p71, %p72
      %p75 = scmp.ne.s32.totalorder %s58, %s74
      %p76 = scmp.eq.s32.totalorder %s20, 0
      %p77 = por %p75, %p76
      %s78 = ssub.s32 %s24, %s35
      %s79 = ssub.s32 %s23, %s39
      %s80 = sor.u32 %s78, %s79
      %p81 = scmp.eq.s32.totalorder %s80, 0
      %s83 = sadd.s32 %s82, 1
      %s84 = scalar_select %p81, %s82, %s83
      %p87 = pneg %p81
      %p88 = scmp.eq.s32.totalorder %s14, 1
      %p89 = por %p87, %p88
      %p90 = scmp.ne.s32.totalorder %s82, %s85
      %p91 = scmp.eq.s32.totalorder %s14, 0
      %p92 = por %p90, %p91
      %p93 = scmp.ne.s32.totalorder %s82, %s85
      %p94 = scmp.eq.s32.totalorder %s19, 1
      %p95 = por %p93, %p94
      %p96 = scmp.ne.s32.totalorder %s85, %s86
      %p97 = scmp.eq.s32.totalorder %s19, 0
      %p98 = por %p96, %p97
      %p99 = scmp.ne.s32.totalorder %s85, %s86
      %p100 = scmp.eq.s32.totalorder %s20, 1
      %p101 = por %p99, %p100
      %p103 = scmp.ne.s32.totalorder %s86, %s102
      %p104 = scmp.eq.s32.totalorder %s20, 0
      %p105 = por %p103, %p104
      %s106 = ssub.s32 %s23, %s39
      %p107 = scmp.eq.s32.totalorder %s106, 0
      %s109 = sadd.s32 %s108, 1
      %s110 = scalar_select %p107, %s108, %s109
      %p113 = pneg %p107
      %p114 = scmp.eq.s32.totalorder %s14, 1
      %p115 = por %p113, %p114
      %p116 = scmp.ne.s32.totalorder %s108, %s111
      %p117 = scmp.eq.s32.totalorder %s14, 0
      %p118 = por %p116, %p117
      %p119 = scmp.ne.s32.totalorder %s108, %s111
      %p120 = scmp.eq.s32.totalorder %s19, 1
      %p121 = por %p119, %p120
      %p122 = scmp.ne.s32.totalorder %s111, %s112
      %p123 = scmp.eq.s32.totalorder %s19, 0
      %p124 = por %p122, %p123
      %p125 = scmp.ne.s32.totalorder %s111, %s112
      %p126 = scmp.eq.s32.totalorder %s20, 1
      %p127 = por %p125, %p126
      %p129 = scmp.ne.s32.totalorder %s112, %s128
      %p130 = scmp.eq.s32.totalorder %s20, 0
      %p131 = por %p129, %p130
      %s132 = ssub.s32 %s21, %s47
      %s133 = ssub.s32 %s22, %s43
      %s134 = sor.u32 %s132, %s133
      %s135 = ssub.s32 %s23, %s39
      %s136 = sor.u32 %s134, %s135
      %p137 = scmp.eq.s32.totalorder %s136, 0
      %s139 = sadd.s32 %s138, 1
      %s140 = scalar_select %p137, %s138, %s139
      %p143 = pneg %p137
      %p144 = scmp.eq.s32.totalorder %s14, 1
      %p145 = por %p143, %p144
      %p146 = scmp.ne.s32.totalorder %s138, %s141
      %p147 = scmp.eq.s32.totalorder %s14, 0
      %p148 = por %p146, %p147
      %p149 = scmp.ne.s32.totalorder %s138, %s141
      %p150 = scmp.eq.s32.totalorder %s19, 1
      %p151 = por %p149, %p150
      %p152 = scmp.ne.s32.totalorder %s141, %s142
      %p153 = scmp.eq.s32.totalorder %s19, 0
      %p154 = por %p152, %p153
      %p155 = scmp.ne.s32.totalorder %s141, %s142
      %p156 = scmp.eq.s32.totalorder %s20, 1
      %p157 = por %p155, %p156
      %p159 = scmp.ne.s32.totalorder %s142, %s158
      %p160 = scmp.eq.s32.totalorder %s20, 0
      %p161 = por %p159, %p160
      %s162 = ssub.s32 %s21, %s47
      %s163 = ssub.s32 %s23, %s39
      %s164 = sor.u32 %s162, %s163
      %p165 = scmp.eq.s32.totalorder %s164, 0
      %s167 = sadd.s32 %s166, 1
      %s168 = scalar_select %p165, %s166, %s167
      %p171 = pneg %p165
      %p172 = scmp.eq.s32.totalorder %s14, 1
      %p173 = por %p171, %p172
      %p174 = scmp.ne.s32.totalorder %s166, %s169
      %p175 = scmp.eq.s32.totalorder %s14, 0
      %p176 = por %p174, %p175
      %p177 = scmp.ne.s32.totalorder %s166, %s169
      %p178 = scmp.eq.s32.totalorder %s19, 1
      %p179 = por %p177, %p178
      %p180 = scmp.ne.s32.totalorder %s169, %s170
      %p181 = scmp.eq.s32.totalorder %s19, 0
      %p182 = por %p180, %p181
      %p183 = scmp.ne.s32.totalorder %s169, %s170
      %p184 = scmp.eq.s32.totalorder %s20, 1
      %p185 = por %p183, %p184
      %p187 = scmp.ne.s32.totalorder %s170, %s186
      %p188 = scmp.eq.s32.totalorder %s20, 0
      %p189 = por %p187, %p188
      %s190 = ssub.s32 %s21, %s47
      %s191 = ssub.s32 %s22, %s43
      %s192 = sor.u32 %s190, %s191
      %s193 = ssub.s32 %s23, %s39
      %s194 = sor.u32 %s192, %s193
      %p195 = scmp.eq.s32.totalorder %s194, 0
      %s197 = sadd.s32 %s196, 1
      %s198 = scalar_select %p195, %s196, %s197
      %p201 = pneg %p195
      %p202 = scmp.eq.s32.totalorder %s14, 1
      %p203 = por %p201, %p202
      %p204 = scmp.ne.s32.totalorder %s196, %s199
      %p205 = scmp.eq.s32.totalorder %s14, 0
      %p206 = por %p204, %p205
      %p207 = scmp.ne.s32.totalorder %s196, %s199
      %p208 = scmp.eq.s32.totalorder %s19, 1
      %p209 = por %p207, %p208
      %p210 = scmp.ne.s32.totalorder %s199, %s200
      %p211 = scmp.eq.s32.totalorder %s19, 0
      %p212 = por %p210, %p211
      %p213 = scmp.ne.s32.totalorder %s199, %s200
      %p214 = scmp.eq.s32.totalorder %s20, 1
      %p215 = por %p213, %p214
      %p217 = scmp.ne.s32.totalorder %s200, %s216
      %p218 = scmp.eq.s32.totalorder %s20, 0
      %p219 = por %p217, %p218
      %p220 = scmp.le.s32.totalorder 1, %s14
      %p221 = scmp.lt.s32.totalorder %s14, 3
      %p222 = pnand %p220, %p221
      %p223 = pneg %p222
      // Predicated region
      $region9: #{mmdit_forward.29} parent=5 // pred_check
        _
      $region10: #{mmdit_forward.29} parent=5 // pred_check_branch
        %225 = sbr.rel (%p222) target = $region12
      $region11: #{mmdit_forward.29} parent=5 // pred_region
        %s226 = ssub.s32 %s14, 1
        // Predicated region
        $region13: #{mmdit_forward.29} parent=11 // pred_check
          %p227 = pneg %p98
        $region14: #{mmdit_forward.29} parent=11 // pred_check_branch
          %229 = sbr.rel (%p227) target = $region16
        $region15: #{mmdit_forward.29} parent=11 // pred_region
          %s230 = smul.u32 4, %s28
          %p231 = scmp.lt.s32.totalorder %s230, 3
          %s232 = scalar_select %p231, %s230, 3
          %p233 = scmp.lt.s32.totalorder %s27, 0
          %s234 = scalar_select %p233, %s27, 0
          %s235 = sadd.s32 %s234, %s232
          %s236 = smul.addr %s235, 8
          %s237 = scalar_lea.vmem %s1, %s236
          %s238 = smul.u32 4, %s28
        $region16: #{mmdit_forward.29} parent=11 // pred_fallthru
          _
        // Predicated region
        $region17: #{mmdit_forward.29} parent=11 // pred_check
          %p239 = pneg %p124
        $region18: #{mmdit_forward.29} parent=11 // pred_check_branch
          %241 = sbr.rel (%p239) target = $region20
        $region19: #{mmdit_forward.29} parent=11 // pred_region
          %p242 = scmp.lt.s32.totalorder %s27, 0
          %s243 = scalar_select %p242, %s27, 0
          %s244 = scalar_lea.vmem %s2, %s243
        $region20: #{mmdit_forward.29} parent=11 // pred_fallthru
          _
      $region12: #{mmdit_forward.29} parent=5 // pred_fallthru
        _
      %p245 = scmp.lt.s32.totalorder %s14, 2
      // Predicated region
      $region21: #{mmdit_forward.29} parent=5 // pred_check
        %p246 = pneg %p245
      $region22: #{mmdit_forward.29} parent=5 // pred_check_branch
        %248 = sbr.rel (%p246) target = $region24
      $region23: #{mmdit_forward.29} parent=5 // pred_region
        // Predicated region
        $region25: #{mmdit_forward.29} parent=23 // pred_check
          %p249 = pneg %p64
        $region26: #{mmdit_forward.29} parent=23 // pred_check_branch
          %251 = sbr.rel (%p249) target = $region28
        $region27: #{mmdit_forward.29} parent=23 // pred_region
          %p252 = scmp.lt.s32.totalorder %s21, 1
          %s253 = scalar_select %p252, %s21, 1
          %p254 = scmp.lt.s32.totalorder %s22, 0
          %s255 = scalar_select %p254, %s22, 0
          %p256 = scmp.lt.s32.totalorder %s24, 0
          %s257 = scalar_select %p256, %s24, 0
          %s258 = sadd.s32 %s257, %s255
          %s259 = sadd.s32 %s258, %s253
          %s260 = smul.addr %s259, 8
          %s261 = scalar_lea.vmem %s0, %s260
        $region28: #{mmdit_forward.29} parent=23 // pred_fallthru
          _
        // Predicated region
        $region29: #{mmdit_forward.29} parent=23 // pred_check
          %p262 = pneg %p148
        $region30: #{mmdit_forward.29} parent=23 // pred_check_branch
          %264 = sbr.rel (%p262) target = $region32
        $region31: #{mmdit_forward.29} parent=23 // pred_region
          %p265 = scmp.lt.s32.totalorder %s21, 1
          %s266 = scalar_select %p265, %s21, 1
          %p267 = scmp.lt.s32.totalorder %s22, 0
          %s268 = scalar_select %p267, %s22, 0
          %p269 = scmp.lt.s32.totalorder %s23, 0
          %s270 = scalar_select %p269, %s23, 0
          %s271 = sadd.s32 %s270, %s268
          %s272 = sadd.s32 %s271, %s266
          %s273 = smul.addr %s272, 8
          %s274 = scalar_lea.vmem %s3, %s273
        $region32: #{mmdit_forward.29} parent=23 // pred_fallthru
          _
        // Predicated region
        $region33: #{mmdit_forward.29} parent=23 // pred_check
          %p275 = pneg %p176
        $region34: #{mmdit_forward.29} parent=23 // pred_check_branch
          %277 = sbr.rel (%p275) target = $region36
        $region35: #{mmdit_forward.29} parent=23 // pred_region
          %p278 = scmp.lt.s32.totalorder %s21, 1
          %s279 = scalar_select %p278, %s21, 1
          %p280 = scmp.lt.s32.totalorder %s23, 0
          %s281 = scalar_select %p280, %s23, 0
          %s282 = sadd.s32 %s281, %s279
          %s283 = scalar_lea.vmem %s4, %s282
        $region36: #{mmdit_forward.29} parent=23 // pred_fallthru
          _
      $region24: #{mmdit_forward.29} parent=5 // pred_fallthru
        _
      %p284 = scmp.le.s32.totalorder 1, %s14
      %p285 = scmp.lt.s32.totalorder %s14, 3
      %p286 = pnand %p284, %p285
      %p287 = pneg %p286
      // Predicated region
      $region37: #{mmdit_forward.29} parent=5 // pred_check
        _
      $region38: #{mmdit_forward.29} parent=5 // pred_check_branch
        %289 = sbr.rel (%p286) target = $region40
      $region39: #{mmdit_forward.29} parent=5 // pred_region
        %s290 = ssub.s32 %s14, 1
        %p291 = scmp.lt.s32.totalorder %s25, 1
        %s292 = scalar_select %p291, %s25, 1
        %p293 = scmp.lt.s32.totalorder %s26, 0
        %s294 = scalar_select %p293, %s26, 0
        %p295 = scmp.lt.s32.totalorder %s28, 0
        %s296 = scalar_select %p295, %s28, 0
        %s297 = sadd.s32 %s296, %s294
        %s298 = sadd.s32 %s297, %s292
        %s299 = smul.addr %s298, 8
        %s300 = scalar_lea.vmem %s0, %s299
        %p301 = pneg %p70
        %p302 = pneg %p67
        %s303 = smul.u32 4, %s28
        %p304 = scmp.lt.s32.totalorder %s303, 3
        %s305 = scalar_select %p304, %s303, 3
        %p306 = scmp.lt.s32.totalorder %s27, 0
        %s307 = scalar_select %p306, %s27, 0
        %s308 = sadd.s32 %s307, %s305
        %s309 = smul.addr %s308, 8
        %s310 = scalar_lea.vmem %s1, %s309
        %p311 = pneg %p98
        %p312 = pneg %p95
        %p313 = scmp.lt.s32.totalorder %s27, 0
        %s314 = scalar_select %p313, %s27, 0
        %s315 = scalar_lea.vmem %s2, %s314
        %p316 = pneg %p124
        %p317 = pneg %p121
        %p318 = scmp.lt.s32.totalorder %s25, 1
        %s319 = scalar_select %p318, %s25, 1
        %p320 = scmp.lt.s32.totalorder %s26, 0
        %s321 = scalar_select %p320, %s26, 0
        %p322 = scmp.lt.s32.totalorder %s27, 0
        %s323 = scalar_select %p322, %s27, 0
        %s324 = sadd.s32 %s323, %s321
        %s325 = sadd.s32 %s324, %s319
        %s326 = smul.addr %s325, 8
        %s327 = scalar_lea.vmem %s3, %s326
        %p328 = pneg %p154
        %p329 = pneg %p151
        %p330 = scmp.lt.s32.totalorder %s25, 1
        %s331 = scalar_select %p330, %s25, 1
        %p332 = scmp.lt.s32.totalorder %s27, 0
        %s333 = scalar_select %p332, %s27, 0
        %s334 = sadd.s32 %s333, %s331
        %s335 = scalar_lea.vmem %s4, %s334
        %p336 = pneg %p182
        %p337 = pneg %p179
        %p338 = pneg %p212
        %p339 = pneg %p209
        %s340 = sand.u32 %s199, 1
        %s341 = scalar_lea.sflag [#allocation4], %s340
        %s342 = sand.u32 %s199, 1
        %s343 = smul.addr %s342, 8
        %s344 = scalar_lea.vmem [#allocation3], %s343
        %p345 = scmp.lt.s32.totalorder %s25, 1
        %s346 = scalar_select %p345, %s25, 1
        %p347 = scmp.lt.s32.totalorder %s26, 0
        %s348 = scalar_select %p347, %s26, 0
        %p349 = scmp.lt.s32.totalorder %s28, 0
        %s350 = scalar_select %p349, %s28, 0
        %s351 = sadd.s32 %s350, %s348
        %s352 = sadd.s32 %s351, %s346
        %s353 = smul.addr %s352, 8
        %s354 = scalar_lea.vmem %s0, %s353
        %s355 = smul.u32 4, %s28
        %p356 = scmp.lt.s32.totalorder %s355, 3
        %s357 = scalar_select %p356, %s355, 3
        %p358 = scmp.lt.s32.totalorder %s27, 0
        %s359 = scalar_select %p358, %s27, 0
        %s360 = sadd.s32 %s359, %s357
        %s361 = smul.addr %s360, 8
        %s362 = scalar_lea.vmem %s1, %s361
        %s363 = smul.u32 4, %s28
        %p364 = scmp.lt.s32.totalorder %s27, 0
        %s365 = scalar_select %p364, %s27, 0
        %s366 = scalar_lea.vmem %s2, %s365
        %p367 = scmp.lt.s32.totalorder %s25, 1
        %s368 = scalar_select %p367, %s25, 1
        %p369 = scmp.lt.s32.totalorder %s26, 0
        %s370 = scalar_select %p369, %s26, 0
        %p371 = scmp.lt.s32.totalorder %s27, 0
        %s372 = scalar_select %p371, %s27, 0
        %s373 = sadd.s32 %s372, %s370
        %s374 = sadd.s32 %s373, %s368
        %s375 = smul.addr %s374, 8
        %s376 = scalar_lea.vmem %s3, %s375
        %p377 = scmp.lt.s32.totalorder %s25, 1
        %s378 = scalar_select %p377, %s25, 1
        %p379 = scmp.lt.s32.totalorder %s27, 0
        %s380 = scalar_select %p379, %s27, 0
        %s381 = sadd.s32 %s380, %s378
        %s382 = scalar_lea.vmem %s4, %s381
        %p383 = scmp.eq.s32.totalorder %s28, 0
        // Predicated region
        $region41: #{mmdit_forward.29} parent=39 // pred_check
          %p384 = pneg %p383
        $region42: #{mmdit_forward.29} parent=39 // pred_check_branch
          %386 = sbr.rel (%p384) target = $region44
        $region43: #{mmdit_forward.29} parent=39 // pred_region
          %vm387 = vcmask 261120
          %388 = vst.msk [vmem:[#allocation2] sm:$0xff] %vm387, 0.0
        $region44: #{mmdit_forward.29} parent=39 // pred_fallthru
          _
        %v389 = vld [vmem:[#allocation2] sm:$0xff]
        %v390 = vld [vmem:[%s354] sm:$0xff]
        %v391 = vld [vmem:[%s362] sm:$0xff]
        %v392 = vld [vmem:[%s362 + $0x8] sm:$0xff]
        %v393 = vld [vmem:[%s362 + $0x10] sm:$0xff]
        %v394 = vld [vmem:[%s362 + $0x18] sm:$0xff]
        %vm395 = vcmask 261120
        %v397 = vsel %vm395, %v390, 0
        %399 = vmatprep.subr.mxu0 0.0
        %400 = vmatpush1.msra.mxu0 %v391
        %401 = vmatprep.subr.mxu0 0.0
        %402 = vmatpush1.msra.mxu0 %v392
        %403 = vmatprep.subr.mxu0 0.0
        %404 = vmatpush1.msra.mxu0 %v393
        %405 = vmatprep.subr.mxu0 0.0
        %406 = vmatpush1.msra.mxu0 %v394
        %407 = vmatprep.subr.mxu0 0.0
        %408 = vmatpush1.msra.mxu0 0.0
        %409 = vmatprep.subr.mxu0 0.0
        %410 = vmatpush1.msra.mxu0 0.0
        %411 = vmatprep.subr.mxu0 0.0
        %412 = vmatpush1.msra.mxu0 0.0
        %413 = vmatprep.subr.mxu0 0.0
        %414 = vmatpush1.msra.mxu0 0.0
        %415 = vmatprep.subr.mxu0 0.0
        %416 = vmatpush1.msra.mxu0 0.0
        %417 = vmatprep.subr.mxu0 0.0
        %418 = vmatpush1.msra.mxu0 0.0
        %419 = vmatprep.subr.mxu0 0.0
        %420 = vmatpush1.msra.mxu0 0.0
        %421 = vmatprep.subr.mxu0 0.0
        %422 = vmatpush1.msra.mxu0 0.0
        %423 = vmatprep.subr.mxu0 0.0
        %424 = vmatpush1.msra.mxu0 0.0
        %425 = vmatprep.subr.mxu0 0.0
        %426 = vmatpush1.msra.mxu0 0.0
        %427 = vmatprep.subr.mxu0 0.0
        %428 = vmatpush1.msra.mxu0 0.0
        %429 = vmatprep.subr.mxu0 0.0
        %430 = vmatpush1.msra.mxu0 0.0
        %431 = vmatprep.subr.mxu0 0.0
        %432 = vmatpush1.msra.mxu0 0.0
        %433 = vmatprep.subr.mxu0 0.0
        %434 = vmatpush1.msra.mxu0 0.0
        %435 = vmatprep.subr.mxu0 0.0
        %436 = vmatpush1.msra.mxu0 0.0
        %437 = vmatprep.subr.mxu0 0.0
        %438 = vmatpush1.msra.mxu0 0.0
        %439 = vmatprep.subr.mxu0 0.0
        %440 = vmatpush1.msra.mxu0 0.0
        %441 = vmatprep.subr.mxu0 0.0
        %442 = vmatpush1.msra.mxu0 0.0
        %443 = vmatprep.subr.mxu0 0.0
        %444 = vmatpush1.msra.mxu0 0.0
        %445 = vmatprep.subr.mxu0 0.0
        %446 = vmatpush1.msra.mxu0 0.0
        %447 = vmatprep.subr.mxu0 0.0
        %448 = vmatpush1.msra.mxu0 0.0
        %449 = vmatprep.subr.mxu0 0.0
        %450 = vmatpush1.msra.mxu0 0.0
        %451 = vmatprep.subr.mxu0 0.0
        %452 = vmatpush1.msra.mxu0 0.0
        %453 = vmatprep.subr.mxu0 0.0
        %454 = vmatpush1.msra.mxu0 0.0
        %455 = vmatprep.subr.mxu0 0.0
        %456 = vmatpush1.msra.mxu0 0.0
        %457 = vmatprep.subr.mxu0 0.0
        %458 = vmatpush1.msra.mxu0 0.0
        %459 = vmatprep.subr.mxu0 0.0
        %460 = vmatpush1.msra.mxu0 0.0
        %461 = vmatprep.subr.mxu0 0.0
        %462 = vmatpush1.msra.mxu0 0.0
        %463 = vmatprep.mubr.f32.mxu0 0.0
        %464 = vmatmul.mubr.f32.gmra.mrb[0].mxu0 %v397
        %v465 = vpop.f32.mrb[0].mxu0
        %v466 = vadd.f32 0.0, %v465
        %v467 = vpop.f32.mrb[0].mxu0
        %468 = vdwg.mxu0
        %v469 = vadd.f32 %v389, %v466
        %470 = vst.msk [vmem:[#allocation2] sm:$0xff] %vm395, %v469
        // Predicated region
        $region45: #{mmdit_forward.29} parent=39 // pred_check
          %p471 = pneg %p383
        $region46: #{mmdit_forward.29} parent=39 // pred_check_branch
          %473 = sbr.rel (%p471) target = $region48
        $region47: #{mmdit_forward.29} parent=39 // pred_region
          %v474 = vld [vmem:[#allocation2] sm:$0xff]
          %v475 = vld [vmem:[%s366] sm:$0x1]
          %v477 = vlaneseq
          %v478 = vshrl.u32 %v477, 7
          %v479 = vsub.s32 0, %v478
          %v480 = vrot.slane %v475, %v479
          %v482 = vadd.f32 %v474, %v480
          %v483 = vld [vmem:[%s376] sm:$0xff]
          %v484 = vld [vmem:[%s382] sm:$0x1]
          %v486 = vlaneseq
          %v487 = vshrl.u32 %v486, 7
          %v488 = vsub.s32 0, %v487
          %v489 = vrot.slane %v484, %v488
          %v491 = vmul.f32 %v489, %v482
          %v492 = vadd.f32 %v483, %v491
          %493 = vst.msk [vmem:[%s344] sm:$0xff] %vm395, %v492
        $region48: #{mmdit_forward.29} parent=39 // pred_fallthru
          _
        %s494 = sand.u32 %s199, 1
        %s495 = scalar_lea.sflag [#allocation4], %s494
        %s496 = sand.u32 %s199, 1
        %s497 = smul.addr %s496, 8
        %s498 = scalar_lea.vmem [#allocation3], %s497
        // Predicated region
        $region49: #{mmdit_forward.29} parent=39 // pred_check
          %p499 = pneg %p209
        $region50: #{mmdit_forward.29} parent=39 // pred_check_branch
          %501 = sbr.rel (%p499) target = $region52
        $region51: #{mmdit_forward.29} parent=39 // pred_region
          %s503 = ssub.s32 128, 128
          %504 = vsyncadd %s495, %s503
          %s505 = sadd.s32 %s27, %s26
          %s506 = sadd.s32 %s505, %s25
          %s507 = smul.addr %s506, 128
          %s508 = scalar_lea.hbm %s5, %s507
          %s510 = sshll.u32 %s498, 4
          %s511 = int_to_ptr.vmem [resolvable:$true] %s510
          %513 = dma.vmem_to_hbm [thread:$0]  %s511, 128, %s508, %s495
        $region52: #{mmdit_forward.29} parent=39 // pred_fallthru
          _
      $region40: #{mmdit_forward.29} parent=5 // pred_fallthru
        _
      %p514 = scmp.le.s32.totalorder 2, %s14
      // Predicated region
      $region53: #{mmdit_forward.29} parent=5 // pred_check
        %p515 = pneg %p514
      $region54: #{mmdit_forward.29} parent=5 // pred_check_branch
        %517 = sbr.rel (%p515) target = $region56
      $region55: #{mmdit_forward.29} parent=5 // pred_region
        %s518 = ssub.s32 %s14, 2
        // Predicated region
        $region57: #{mmdit_forward.29} parent=55 // pred_check
          %p519 = pneg %p215
        $region58: #{mmdit_forward.29} parent=55 // pred_check_branch
          %521 = sbr.rel (%p519) target = $region60
        $region59: #{mmdit_forward.29} parent=55 // pred_region
          %s522 = sand.u32 %s200, 1
          %s523 = scalar_lea.sflag [#allocation4], %s522
          %s524 = sand.u32 %s200, 1
          %s525 = smul.addr %s524, 8
          %s526 = scalar_lea.vmem [#allocation3], %s525
          %527 = dma.done %s523, 128
        $region60: #{mmdit_forward.29} parent=55 // pred_fallthru
          _
      $region56: #{mmdit_forward.29} parent=5 // pred_fallthru
        _
    $region6: #{mmdit_forward.29} parent=1 // loop_footer
      %s18 = sadd.s32 1, %s14
    $region7: #{mmdit_forward.29} parent=1 // loop_footer_branch
      %13 = sbr.rel target = $region3
    $region8: #{mmdit_forward.29} parent=1 // loop_exit
      _
    %528 = vsyncpa [#allocation4], 1
    %s529 = scalar_lea.sflag [#allocation4], 1
    %530 = vsyncpa %s529, 1

// kernel: mmdit_forward.21
$region0: #{mmdit_forward.21}
  #allocation0 [shape = 'u32[]', space=smem, size = 0x4, offset = 0x4, fixed_abs, tag = 'smem constant byte address 0x4 - core index']
  #allocation1 [shape = 'u32[144,128]{1,0:T(1,128)}', space=vmem, size = 0x12000, scoped, tag = 'internal scratch']
  #allocation2 [shape = 'f32[8,16]{1,0:T(8,128)}', space=vmem, size = 0x1000, scoped, tag = 'scratch operand']
  #allocation3 [shape = 'f32[8,1]{1,0:T(8,128)}', space=vmem, size = 0x1000, scoped, tag = 'scratch operand']
  #allocation4 [shape = 'f32[8,1]{1,0:T(8,128)}', space=vmem, size = 0x1000, scoped, tag = 'scratch operand']
  #allocation5 [shape = 'f32[8,16]{1,0:T(8,128)}', space=vmem, size = 0x1000, scoped, tag = 'scratch operand']
  %s0 = inlined_call_operand.vmem [shape: f32[2,2,8,16], index: 0, kind: input, shape index: {}]
  %s1 = inlined_call_operand.vmem [shape: f32[2,2,8,16], index: 1, kind: input, shape index: {}]
  %s2 = inlined_call_operand.vmem [shape: f32[2,2,8,16], index: 2, kind: input, shape index: {}]
  %s3 = inlined_call_operand.vmem [shape: f32[2,2,8,16], index: 3, kind: input, shape index: {}]
  %s4 = inlined_call_operand.vmem [shape: f32[2,2,8,16], index: 4, kind: input, shape index: {}]
  %s5 = inlined_call_operand.vmem [shape: f32[1,16], index: 5, kind: input, shape index: {}]
  %s6 = inlined_call_operand.vmem [shape: f32[1,16], index: 6, kind: input, shape index: {}]
  %s7 = inlined_call_operand.vmem [shape: f32[1,16], index: 7, kind: input, shape index: {}]
  %s8 = inlined_call_operand.vmem [shape: f32[2,2,8,16], index: 8, kind: output, shape index: {}]
  %s9 = sld [smem:[#allocation0]]
  $region81: #{mmdit_forward.21} parent=0
    _
  %s11 = ssub.s32 1, %s9
  %s12 = scalar_select 0, %s11, %s9
  loop: start=0, step=1, limit=10
  $region2: #{mmdit_forward.21} parent=0 // loop_pre_header
    _
  $region3: #{mmdit_forward.21} parent=0 // loop_header
    %s14 = sphi 0, %s18
    %p15 = scmp.ge.s32.totalorder %s14, 10
    %s21 = sphi 0, %s40
    %s22 = sphi 0, %s36
    %s23 = sphi 0, %s32
    %s24 = sphi 0, %s21
    %s25 = sphi 0, %s22
    %s26 = sphi 0, %s23
    %s27 = sphi 0, %s24
    %s28 = sphi 0, %s25
    %s29 = sphi 0, %s26
    %s45 = sphi 0, %s47
    %s48 = sphi 0, %s45
    %s49 = sphi 0, %s48
    %s65 = sphi 0, %s49
    %s79 = sphi 0, %s81
    %s82 = sphi 0, %s79
    %s83 = sphi 0, %s82
    %s99 = sphi 0, %s83
    %s113 = sphi 0, %s115
    %s116 = sphi 0, %s113
    %s117 = sphi 0, %s116
    %s133 = sphi 0, %s117
    %s149 = sphi 0, %s151
    %s152 = sphi 0, %s149
    %s153 = sphi 0, %s152
    %s169 = sphi 0, %s153
    %s185 = sphi 0, %s187
    %s188 = sphi 0, %s185
    %s189 = sphi 0, %s188
    %s205 = sphi 0, %s189
    %s209 = sphi 0, %s209
    %s211 = sphi 0, %s209
    %s212 = sphi 0, %s211
    %s226 = sphi 0, %s212
    %s230 = sphi 0, %s230
    %s232 = sphi 0, %s230
    %s233 = sphi 0, %s232
    %s247 = sphi 0, %s233
    %s251 = sphi 0, %s251
    %s253 = sphi 0, %s251
    %s254 = sphi 0, %s253
    %s268 = sphi 0, %s254
    %s276 = sphi 0, %s278
    %s279 = sphi 0, %s276
    %s280 = sphi 0, %s279
    %s296 = sphi 0, %s280
  $region4: #{mmdit_forward.21} parent=0 // loop_header_branch
    %17 = sbr.rel (%p15) target = $region8
  $region5: #{mmdit_forward.21} parent=0 // loop_body
    %s19 = ssub.s32 %s14, 1
    %s20 = ssub.s32 %s14, 2
    %s30 = sadd.s32 1, %s23
    %p31 = scmp.ge.s32.totalorder %s30, 2
    %s32 = scalar_select %p31, 0, %s30
    %s33 = sadd.s32 1, %s22
    %s34 = scalar_select %p31, %s33, %s22
    %p35 = scmp.ge.s32.totalorder %s34, 2
    %s36 = scalar_select %p35, 0, %s34
    %s37 = sadd.s32 1, %s21
    %s38 = scalar_select %p35, %s37, %s21
    %p39 = scmp.ge.s32.totalorder %s38, 2
    %s40 = scalar_select %p39, 0, %s38
    %s41 = ssub.s32 %s21, %s40
    %s42 = ssub.s32 %s22, %s36
    %s43 = sor.u32 %s41, %s42
    %p44 = scmp.eq.s32.totalorder %s43, 0
    %s46 = sadd.s32 %s45, 1
    %s47 = scalar_select %p44, %s45, %s46
    %p50 = pneg %p44
    %p51 = scmp.eq.s32.totalorder %s14, 7
    %p52 = por %p50, %p51
    %p53 = scmp.ne.s32.totalorder %s45, %s48
    %p54 = scmp.eq.s32.totalorder %s14, 0
    %p55 = por %p53, %p54
    %p56 = scmp.ne.s32.totalorder %s45, %s48
    %p57 = scmp.eq.s32.totalorder %s19, 7
    %p58 = por %p56, %p57
    %p59 = scmp.ne.s32.totalorder %s48, %s49
    %p60 = scmp.eq.s32.totalorder %s19, 0
    %p61 = por %p59, %p60
    %p62 = scmp.ne.s32.totalorder %s48, %s49
    %p63 = scmp.eq.s32.totalorder %s20, 7
    %p64 = por %p62, %p63
    %p66 = scmp.ne.s32.totalorder %s49, %s65
    %p67 = scmp.eq.s32.totalorder %s20, 0
    %p68 = por %p66, %p67
    %p69 = scmp.lt.s32.totalorder %s23, 0
    %s70 = scalar_select %p69, %s23, 0
    %p71 = scmp.lt.s32.totalorder %s32, 0
    %s72 = scalar_select %p71, %s32, 0
    %s73 = ssub.s32 %s21, %s40
    %s74 = ssub.s32 %s22, %s36
    %s75 = sor.u32 %s73, %s74
    %s76 = ssub.s32 %s70, %s72
    %s77 = sor.u32 %s75, %s76
    %p78 = scmp.eq.s32.totalorder %s77, 0
    %s80 = sadd.s32 %s79, 1
    %s81 = scalar_select %p78, %s79, %s80
    %p84 = pneg %p78
    %p85 = scmp.eq.s32.totalorder %s14, 7
    %p86 = por %p84, %p85
    %p87 = scmp.ne.s32.totalorder %s79, %s82
    %p88 = scmp.eq.s32.totalorder %s14, 0
    %p89 = por %p87, %p88
    %p90 = scmp.ne.s32.totalorder %s79, %s82
    %p91 = scmp.eq.s32.totalorder %s19, 7
    %p92 = por %p90, %p91
    %p93 = scmp.ne.s32.totalorder %s82, %s83
    %p94 = scmp.eq.s32.totalorder %s19, 0
    %p95 = por %p93, %p94
    %p96 = scmp.ne.s32.totalorder %s82, %s83
    %p97 = scmp.eq.s32.totalorder %s20, 7
    %p98 = por %p96, %p97
    %p100 = scmp.ne.s32.totalorder %s83, %s99
    %p101 = scmp.eq.s32.totalorder %s20, 0
    %p102 = por %p100, %p101
    %p103 = scmp.lt.s32.totalorder %s23, 0
    %s104 = scalar_select %p103, %s23, 0
    %p105 = scmp.lt.s32.totalorder %s32, 0
    %s106 = scalar_select %p105, %s32, 0
    %s107 = ssub.s32 %s21, %s40
    %s108 = ssub.s32 %s22, %s36
    %s109 = sor.u32 %s107, %s108
    %s110 = ssub.s32 %s104, %s106
    %s111 = sor.u32 %s109, %s110
    %p112 = scmp.eq.s32.totalorder %s111, 0
    %s114 = sadd.s32 %s113, 1
    %s115 = scalar_select %p112, %s113, %s114
    %p118 = pneg %p112
    %p119 = scmp.eq.s32.totalorder %s14, 7
    %p120 = por %p118, %p119
    %p121 = scmp.ne.s32.totalorder %s113, %s116
    %p122 = scmp.eq.s32.totalorder %s14, 0
    %p123 = por %p121, %p122
    %p124 = scmp.ne.s32.totalorder %s113, %s116
    %p125 = scmp.eq.s32.totalorder %s19, 7
    %p126 = por %p124, %p125
    %p127 = scmp.ne.s32.totalorder %s116, %s117
    %p128 = scmp.eq.s32.totalorder %s19, 0
    %p129 = por %p127, %p128
    %p130 = scmp.ne.s32.totalorder %s116, %s117
    %p131 = scmp.eq.s32.totalorder %s20, 7
    %p132 = por %p130, %p131
    %p134 = scmp.ne.s32.totalorder %s117, %s133
    %p135 = scmp.eq.s32.totalorder %s20, 0
    %p136 = por %p134, %p135
    %s137 = ssub.s32 %s23, 1
    %p138 = scmp.gt.s32.totalorder %s137, 0
    %s139 = scalar_select %p138, %s137, 0
    %s140 = ssub.s32 %s32, 1
    %p141 = scmp.gt.s32.totalorder %s140, 0
    %s142 = scalar_select %p141, %s140, 0
    %s143 = ssub.s32 %s21, %s40
    %s144 = ssub.s32 %s22, %s36
    %s145 = sor.u32 %s143, %s144
    %s146 = ssub.s32 %s139, %s142
    %s147 = sor.u32 %s145, %s146
    %p148 = scmp.eq.s32.totalorder %s147, 0
    %s150 = sadd.s32 %s149, 1
    %s151 = scalar_select %p148, %s149, %s150
    %p154 = pneg %p148
    %p155 = scmp.eq.s32.totalorder %s14, 7
    %p156 = por %p154, %p155
    %p157 = scmp.ne.s32.totalorder %s149, %s152
    %p158 = scmp.eq.s32.totalorder %s14, 0
    %p159 = por %p157, %p158
    %p160 = scmp.ne.s32.totalorder %s149, %s152
    %p161 = scmp.eq.s32.totalorder %s19, 7
    %p162 = por %p160, %p161
    %p163 = scmp.ne.s32.totalorder %s152, %s153
    %p164 = scmp.eq.s32.totalorder %s19, 0
    %p165 = por %p163, %p164
    %p166 = scmp.ne.s32.totalorder %s152, %s153
    %p167 = scmp.eq.s32.totalorder %s20, 7
    %p168 = por %p166, %p167
    %p170 = scmp.ne.s32.totalorder %s153, %s169
    %p171 = scmp.eq.s32.totalorder %s20, 0
    %p172 = por %p170, %p171
    %s173 = ssub.s32 %s23, 1
    %p174 = scmp.gt.s32.totalorder %s173, 0
    %s175 = scalar_select %p174, %s173, 0
    %s176 = ssub.s32 %s32, 1
    %p177 = scmp.gt.s32.totalorder %s176, 0
    %s178 = scalar_select %p177, %s176, 0
    %s179 = ssub.s32 %s21, %s40
    %s180 = ssub.s32 %s22, %s36
    %s181 = sor.u32 %s179, %s180
    %s182 = ssub.s32 %s175, %s178
    %s183 = sor.u32 %s181, %s182
    %p184 = scmp.eq.s32.totalorder %s183, 0
    %s186 = sadd.s32 %s185, 1
    %s187 = scalar_select %p184, %s185, %s186
    %p190 = pneg %p184
    %p191 = scmp.eq.s32.totalorder %s14, 7
    %p192 = por %p190, %p191
    %p193 = scmp.ne.s32.totalorder %s185, %s188
    %p194 = scmp.eq.s32.totalorder %s14, 0
    %p195 = por %p193, %p194
    %p196 = scmp.ne.s32.totalorder %s185, %s188
    %p197 = scmp.eq.s32.totalorder %s19, 7
    %p198 = por %p196, %p197
    %p199 = scmp.ne.s32.totalorder %s188, %s189
    %p200 = scmp.eq.s32.totalorder %s19, 0
    %p201 = por %p199, %p200
    %p202 = scmp.ne.s32.totalorder %s188, %s189
    %p203 = scmp.eq.s32.totalorder %s20, 7
    %p204 = por %p202, %p203
    %p206 = scmp.ne.s32.totalorder %s189, %s205
    %p207 = scmp.eq.s32.totalorder %s20, 0
    %p208 = por %p206, %p207
    %s210 = sadd.s32 %s209, 1
    %p213 = scmp.eq.s32.totalorder %s14, 7
    %p214 = scmp.ne.s32.totalorder %s209, %s211
    %p215 = scmp.eq.s32.totalorder %s14, 0
    %p216 = por %p214, %p215
    %p217 = scmp.ne.s32.totalorder %s209, %s211
    %p218 = scmp.eq.s32.totalorder %s19, 7
    %p219 = por %p217, %p218
    %p220 = scmp.ne.s32.totalorder %s211, %s212
    %p221 = scmp.eq.s32.totalorder %s19, 0
    %p222 = por %p220, %p221
    %p223 = scmp.ne.s32.totalorder %s211, %s212
    %p224 = scmp.eq.s32.totalorder %s20, 7
    %p225 = por %p223, %p224
    %p227 = scmp.ne.s32.totalorder %s212, %s226
    %p228 = scmp.eq.s32.totalorder %s20, 0
    %p229 = por %p227, %p228
    %s231 = sadd.s32 %s230, 1
    %p234 = scmp.eq.s32.totalorder %s14, 7
    %p235 = scmp.ne.s32.totalorder %s230, %s232
    %p236 = scmp.eq.s32.totalorder %s14, 0
    %p237 = por %p235, %p236
    %p238 = scmp.ne.s32.totalorder %s230, %s232
    %p239 = scmp.eq.s32.totalorder %s19, 7
    %p240 = por %p238, %p239
    %p241 = scmp.ne.s32.totalorder %s232, %s233
    %p242 = scmp.eq.s32.totalorder %s19, 0
    %p243 = por %p241, %p242
    %p244 = scmp.ne.s32.totalorder %s232, %s233
    %p245 = scmp.eq.s32.totalorder %s20, 7
    %p246 = por %p244, %p245
    %p248 = scmp.ne.s32.totalorder %s233, %s247
    %p249 = scmp.eq.s32.totalorder %s20, 0
    %p250 = por %p248, %p249
    %s252 = sadd.s32 %s251, 1
    %p255 = scmp.eq.s32.totalorder %s14, 7
    %p256 = scmp.ne.s32.totalorder %s251, %s253
    %p257 = scmp.eq.s32.totalorder %s14, 0
    %p258 = por %p256, %p257
    %p259 = scmp.ne.s32.totalorder %s251, %s253
    %p260 = scmp.eq.s32.totalorder %s19, 7
    %p261 = por %p259, %p260
    %p262 = scmp.ne.s32.totalorder %s253, %s254
    %p263 = scmp.eq.s32.totalorder %s19, 0
    %p264 = por %p262, %p263
    %p265 = scmp.ne.s32.totalorder %s253, %s254
    %p266 = scmp.eq.s32.totalorder %s20, 7
    %p267 = por %p265, %p266
    %p269 = scmp.ne.s32.totalorder %s254, %s268
    %p270 = scmp.eq.s32.totalorder %s20, 0
    %p271 = por %p269, %p270
    %s272 = ssub.s32 %s21, %s40
    %s273 = ssub.s32 %s22, %s36
    %s274 = sor.u32 %s272, %s273
    %p275 = scmp.eq.s32.totalorder %s274, 0
    %s277 = sadd.s32 %s276, 1
    %s278 = scalar_select %p275, %s276, %s277
    %p281 = pneg %p275
    %p282 = scmp.eq.s32.totalorder %s14, 7
    %p283 = por %p281, %p282
    %p284 = scmp.ne.s32.totalorder %s276, %s279
    %p285 = scmp.eq.s32.totalorder %s14, 0
    %p286 = por %p284, %p285
    %p287 = scmp.ne.s32.totalorder %s276, %s279
    %p288 = scmp.eq.s32.totalorder %s19, 7
    %p289 = por %p287, %p288
    %p290 = scmp.ne.s32.totalorder %s279, %s280
    %p291 = scmp.eq.s32.totalorder %s19, 0
    %p292 = por %p290, %p291
    %p293 = scmp.ne.s32.totalorder %s279, %s280
    %p294 = scmp.eq.s32.totalorder %s20, 7
    %p295 = por %p293, %p294
    %p297 = scmp.ne.s32.totalorder %s280, %s296
    %p298 = scmp.eq.s32.totalorder %s20, 0
    %p299 = por %p297, %p298
    %p300 = scmp.le.s32.totalorder 1, %s14
    %p301 = scmp.lt.s32.totalorder %s14, 9
    %p302 = pnand %p300, %p301
    %p303 = pneg %p302
    // Predicated region
    $region9: #{mmdit_forward.21} parent=5 // pred_check
      _
    $region10: #{mmdit_forward.21} parent=5 // pred_check_branch
      %305 = sbr.rel (%p302) target = $region12
    $region11: #{mmdit_forward.21} parent=5 // pred_region
      %s306 = ssub.s32 %s14, 1
      // Predicated region
      $region13: #{mmdit_forward.21} parent=11 // pred_check
        %p307 = pneg %p222
      $region14: #{mmdit_forward.21} parent=11 // pred_check_branch
        %309 = sbr.rel (%p307) target = $region16
      $region15: #{mmdit_forward.21} parent=11 // pred_region
        _
      $region16: #{mmdit_forward.21} parent=11 // pred_fallthru
        _
      // Predicated region
      $region17: #{mmdit_forward.21} parent=11 // pred_check
        %p310 = pneg %p243
      $region18: #{mmdit_forward.21} parent=11 // pred_check_branch
        %312 = sbr.rel (%p310) target = $region20
      $region19: #{mmdit_forward.21} parent=11 // pred_region
        _
      $region20: #{mmdit_forward.21} parent=11 // pred_fallthru
        _
      // Predicated region
      $region21: #{mmdit_forward.21} parent=11 // pred_check
        %p313 = pneg %p264
      $region22: #{mmdit_forward.21} parent=11 // pred_check_branch
        %315 = sbr.rel (%p313) target = $region24
      $region23: #{mmdit_forward.21} parent=11 // pred_region
        _
      $region24: #{mmdit_forward.21} parent=11 // pred_fallthru
        _
    $region12: #{mmdit_forward.21} parent=5 // pred_fallthru
      _
    %p316 = scmp.lt.s32.totalorder %s14, 8
    // Predicated region
    $region25: #{mmdit_forward.21} parent=5 // pred_check
      %p317 = pneg %p316
    $region26: #{mmdit_forward.21} parent=5 // pred_check_branch
      %319 = sbr.rel (%p317) target = $region28
    $region27: #{mmdit_forward.21} parent=5 // pred_region
      // Predicated region
      $region29: #{mmdit_forward.21} parent=27 // pred_check
        %p320 = pneg %p55
      $region30: #{mmdit_forward.21} parent=27 // pred_check_branch
        %322 = sbr.rel (%p320) target = $region32
      $region31: #{mmdit_forward.21} parent=27 // pred_region
        %p323 = scmp.lt.s32.totalorder %s21, 1
        %s324 = scalar_select %p323, %s21, 1
        %p325 = scmp.lt.s32.totalorder %s22, 1
        %s326 = scalar_select %p325, %s22, 1
        %s327 = smul.addr %s324, 2
        %s328 = sadd.s32 %s326, %s327
        %s329 = smul.addr %s328, 8
        %s330 = scalar_lea.vmem %s0, %s329
      $region32: #{mmdit_forward.21} parent=27 // pred_fallthru
        _
      // Predicated region
      $region33: #{mmdit_forward.21} parent=27 // pred_check
        %p331 = pneg %p89
      $region34: #{mmdit_forward.21} parent=27 // pred_check_branch
        %333 = sbr.rel (%p331) target = $region36
      $region35: #{mmdit_forward.21} parent=27 // pred_region
        %p334 = scmp.lt.s32.totalorder %s23, 0
        %s335 = scalar_select %p334, %s23, 0
        %p336 = scmp.lt.s32.totalorder %s21, 1
        %s337 = scalar_select %p336, %s21, 1
        %p338 = scmp.lt.s32.totalorder %s22, 1
        %s339 = scalar_select %p338, %s22, 1
        %p340 = scmp.lt.s32.totalorder %s335, 0
        %s341 = scalar_select %p340, %s335, 0
        %s342 = sadd.s32 %s341, %s339
        %s343 = smul.addr %s337, 2
        %s344 = sadd.s32 %s342, %s343
        %s345 = smul.addr %s344, 8
        %s346 = scalar_lea.vmem %s1, %s345
        %p347 = scmp.lt.s32.totalorder %s23, 0
        %s348 = scalar_select %p347, %s23, 0
      $region36: #{mmdit_forward.21} parent=27 // pred_fallthru
        _
      // Predicated region
      $region37: #{mmdit_forward.21} parent=27 // pred_check
        %p349 = pneg %p123
      $region38: #{mmdit_forward.21} parent=27 // pred_check_branch
        %351 = sbr.rel (%p349) target = $region40
      $region39: #{mmdit_forward.21} parent=27 // pred_region
        %p352 = scmp.lt.s32.totalorder %s23, 0
        %s353 = scalar_select %p352, %s23, 0
        %p354 = scmp.lt.s32.totalorder %s21, 1
        %s355 = scalar_select %p354, %s21, 1
        %p356 = scmp.lt.s32.totalorder %s22, 1
        %s357 = scalar_select %p356, %s22, 1
        %p358 = scmp.lt.s32.totalorder %s353, 0
        %s359 = scalar_select %p358, %s353, 0
        %s360 = sadd.s32 %s359, %s357
        %s361 = smul.addr %s355, 2
        %s362 = sadd.s32 %s360, %s361
        %s363 = smul.addr %s362, 8
        %s364 = scalar_lea.vmem %s2, %s363
        %p365 = scmp.lt.s32.totalorder %s23, 0
        %s366 = scalar_select %p365, %s23, 0
      $region40: #{mmdit_forward.21} parent=27 // pred_fallthru
        _
      // Predicated region
      $region41: #{mmdit_forward.21} parent=27 // pred_check
        %p367 = pneg %p159
      $region42: #{mmdit_forward.21} parent=27 // pred_check_branch
        %369 = sbr.rel (%p367) target = $region44
      $region43: #{mmdit_forward.21} parent=27 // pred_region
        %s370 = ssub.s32 %s23, 1
        %p371 = scmp.gt.s32.totalorder %s370, 0
        %s372 = scalar_select %p371, %s370, 0
        %p373 = scmp.lt.s32.totalorder %s21, 1
        %s374 = scalar_select %p373, %s21, 1
        %p375 = scmp.lt.s32.totalorder %s22, 1
        %s376 = scalar_select %p375, %s22, 1
        %p377 = scmp.lt.s32.totalorder %s372, 0
        %s378 = scalar_select %p377, %s372, 0
        %s379 = sadd.s32 %s378, %s376
        %s380 = smul.addr %s374, 2
        %s381 = sadd.s32 %s379, %s380
        %s382 = smul.addr %s381, 8
        %s383 = scalar_lea.vmem %s3, %s382
        %s384 = ssub.s32 %s23, 1
        %p385 = scmp.gt.s32.totalorder %s384, 0
        %s386 = scalar_select %p385, %s384, 0
      $region44: #{mmdit_forward.21} parent=27 // pred_fallthru
        _
      // Predicated region
      $region45: #{mmdit_forward.21} parent=27 // pred_check
        %p387 = pneg %p195
      $region46: #{mmdit_forward.21} parent=27 // pred_check_branch
        %389 = sbr.rel (%p387) target = $region48
      $region47: #{mmdit_forward.21} parent=27 // pred_region
        %s390 = ssub.s32 %s23, 1
        %p391 = scmp.gt.s32.totalorder %s390, 0
        %s392 = scalar_select %p391, %s390, 0
        %p393 = scmp.lt.s32.totalorder %s21, 1
        %s394 = scalar_select %p393, %s21, 1
        %p395 = scmp.lt.s32.totalorder %s22, 1
        %s396 = scalar_select %p395, %s22, 1
        %p397 = scmp.lt.s32.totalorder %s392, 0
        %s398 = scalar_select %p397, %s392, 0
        %s399 = sadd.s32 %s398, %s396
        %s400 = smul.addr %s394, 2
        %s401 = sadd.s32 %s399, %s400
        %s402 = smul.addr %s401, 8
        %s403 = scalar_lea.vmem %s4, %s402
        %s404 = ssub.s32 %s23, 1
        %p405 = scmp.gt.s32.totalorder %s404, 0
        %s406 = scalar_select %p405, %s404, 0
      $region48: #{mmdit_forward.21} parent=27 // pred_fallthru
        _
    $region28: #{mmdit_forward.21} parent=5 // pred_fallthru
      _
    %p407 = scmp.le.s32.totalorder 1, %s14
    %p408 = scmp.lt.s32.totalorder %s14, 9
    %p409 = pnand %p407, %p408
    %p410 = pneg %p409
    // Predicated region
    $region49: #{mmdit_forward.21} parent=5 // pred_check
      _
    $region50: #{mmdit_forward.21} parent=5 // pred_check_branch
      %412 = sbr.rel (%p409) target = $region52
    $region51: #{mmdit_forward.21} parent=5 // pred_region
      %s413 = ssub.s32 %s14, 1
      %p414 = scmp.lt.s32.totalorder %s24, 1
      %s415 = scalar_select %p414, %s24, 1
      %p416 = scmp.lt.s32.totalorder %s25, 1
      %s417 = scalar_select %p416, %s25, 1
      %s418 = smul.addr %s415, 2
      %s419 = sadd.s32 %s417, %s418
      %s420 = smul.addr %s419, 8
      %s421 = scalar_lea.vmem %s0, %s420
      %p422 = pneg %p61
      %p423 = pneg %p58
      %p424 = scmp.lt.s32.totalorder %s26, 0
      %s425 = scalar_select %p424, %s26, 0
      %p426 = scmp.lt.s32.totalorder %s24, 1
      %s427 = scalar_select %p426, %s24, 1
      %p428 = scmp.lt.s32.totalorder %s25, 1
      %s429 = scalar_select %p428, %s25, 1
      %p430 = scmp.lt.s32.totalorder %s425, 0
      %s431 = scalar_select %p430, %s425, 0
      %s432 = sadd.s32 %s431, %s429
      %s433 = smul.addr %s427, 2
      %s434 = sadd.s32 %s432, %s433
      %s435 = smul.addr %s434, 8
      %s436 = scalar_lea.vmem %s1, %s435
      %p437 = pneg %p95
      %p438 = pneg %p92
      %p439 = scmp.lt.s32.totalorder %s26, 0
      %s440 = scalar_select %p439, %s26, 0
      %p441 = scmp.lt.s32.totalorder %s24, 1
      %s442 = scalar_select %p441, %s24, 1
      %p443 = scmp.lt.s32.totalorder %s25, 1
      %s444 = scalar_select %p443, %s25, 1
      %p445 = scmp.lt.s32.totalorder %s440, 0
      %s446 = scalar_select %p445, %s440, 0
      %s447 = sadd.s32 %s446, %s444
      %s448 = smul.addr %s442, 2
      %s449 = sadd.s32 %s447, %s448
      %s450 = smul.addr %s449, 8
      %s451 = scalar_lea.vmem %s2, %s450
      %p452 = pneg %p129
      %p453 = pneg %p126
      %s454 = ssub.s32 %s26, 1
      %p455 = scmp.gt.s32.totalorder %s454, 0
      %s456 = scalar_select %p455, %s454, 0
      %p457 = scmp.lt.s32.totalorder %s24, 1
      %s458 = scalar_select %p457, %s24, 1
      %p459 = scmp.lt.s32.totalorder %s25, 1
      %s460 = scalar_select %p459, %s25, 1
      %p461 = scmp.lt.s32.totalorder %s456, 0
      %s462 = scalar_select %p461, %s456, 0
      %s463 = sadd.s32 %s462, %s460
      %s464 = smul.addr %s458, 2
      %s465 = sadd.s32 %s463, %s464
      %s466 = smul.addr %s465, 8
      %s467 = scalar_lea.vmem %s3, %s466
      %p468 = pneg %p165
      %p469 = pneg %p162
      %s470 = ssub.s32 %s26, 1
      %p471 = scmp.gt.s32.totalorder %s470, 0
      %s472 = scalar_select %p471, %s470, 0
      %p473 = scmp.lt.s32.totalorder %s24, 1
      %s474 = scalar_select %p473, %s24, 1
      %p475 = scmp.lt.s32.totalorder %s25, 1
      %s476 = scalar_select %p475, %s25, 1
      %p477 = scmp.lt.s32.totalorder %s472, 0
      %s478 = scalar_select %p477, %s472, 0
      %s479 = sadd.s32 %s478, %s476
      %s480 = smul.addr %s474, 2
      %s481 = sadd.s32 %s479, %s480
      %s482 = smul.addr %s481, 8
      %s483 = scalar_lea.vmem %s4, %s482
      %p484 = pneg %p201
      %p485 = pneg %p198
      %p486 = pneg %p222
      %p487 = pneg %p219
      %p488 = pneg %p243
      %p489 = pneg %p240
      %p490 = pneg %p264
      %p491 = pneg %p261
      %p492 = pneg %p292
      %p493 = pneg %p289
      %p494 = scmp.lt.s32.totalorder %s24, 1
      %s495 = scalar_select %p494, %s24, 1
      %p496 = scmp.lt.s32.totalorder %s25, 1
      %s497 = scalar_select %p496, %s25, 1
      %s498 = smul.addr %s495, 2
      %s499 = sadd.s32 %s497, %s498
      %s500 = smul.addr %s499, 8
      %s501 = scalar_lea.vmem %s8, %s500
      %p502 = scmp.lt.s32.totalorder %s24, 1
      %s503 = scalar_select %p502, %s24, 1
      %p504 = scmp.lt.s32.totalorder %s25, 1
      %s505 = scalar_select %p504, %s25, 1
      %s506 = smul.addr %s503, 2
      %s507 = sadd.s32 %s505, %s506
      %s508 = smul.addr %s507, 8
      %s509 = scalar_lea.vmem %s0, %s508
      %p510 = scmp.lt.s32.totalorder %s26, 0
      %s511 = scalar_select %p510, %s26, 0
      %p512 = scmp.lt.s32.totalorder %s24, 1
      %s513 = scalar_select %p512, %s24, 1
      %p514 = scmp.lt.s32.totalorder %s25, 1
      %s515 = scalar_select %p514, %s25, 1
      %p516 = scmp.lt.s32.totalorder %s511, 0
      %s517 = scalar_select %p516, %s511, 0
      %s518 = sadd.s32 %s517, %s515
      %s519 = smul.addr %s513, 2
      %s520 = sadd.s32 %s518, %s519
      %s521 = smul.addr %s520, 8
      %s522 = scalar_lea.vmem %s1, %s521
      %p523 = scmp.lt.s32.totalorder %s26, 0
      %s524 = scalar_select %p523, %s26, 0
      %p525 = scmp.lt.s32.totalorder %s26, 0
      %s526 = scalar_select %p525, %s26, 0
      %p527 = scmp.lt.s32.totalorder %s24, 1
      %s528 = scalar_select %p527, %s24, 1
      %p529 = scmp.lt.s32.totalorder %s25, 1
      %s530 = scalar_select %p529, %s25, 1
      %p531 = scmp.lt.s32.totalorder %s526, 0
      %s532 = scalar_select %p531, %s526, 0
      %s533 = sadd.s32 %s532, %s530
      %s534 = smul.addr %s528, 2
      %s535 = sadd.s32 %s533, %s534
      %s536 = smul.addr %s535, 8
      %s537 = scalar_lea.vmem %s2, %s536
      %p538 = scmp.lt.s32.totalorder %s26, 0
      %s539 = scalar_select %p538, %s26, 0
      %s540 = ssub.s32 %s26, 1
      %p541 = scmp.gt.s32.totalorder %s540, 0
      %s542 = scalar_select %p541, %s540, 0
      %p543 = scmp.lt.s32.totalorder %s24, 1
      %s544 = scalar_select %p543, %s24, 1
      %p545 = scmp.lt.s32.totalorder %s25, 1
      %s546 = scalar_select %p545, %s25, 1
      %p547 = scmp.lt.s32.totalorder %s542, 0
      %s548 = scalar_select %p547, %s542, 0
      %s549 = sadd.s32 %s548, %s546
      %s550 = smul.addr %s544, 2
      %s551 = sadd.s32 %s549, %s550
      %s552 = smul.addr %s551, 8
      %s553 = scalar_lea.vmem %s3, %s552
      %s554 = ssub.s32 %s26, 1
      %p555 = scmp.gt.s32.totalorder %s554, 0
      %s556 = scalar_select %p555, %s554, 0
      %s557 = ssub.s32 %s26, 1
      %p558 = scmp.gt.s32.totalorder %s557, 0
      %s559 = scalar_select %p558, %s557, 0
      %p560 = scmp.lt.s32.totalorder %s24, 1
      %s561 = scalar_select %p560, %s24, 1
      %p562 = scmp.lt.s32.totalorder %s25, 1
      %s563 = scalar_select %p562, %s25, 1
      %p564 = scmp.lt.s32.totalorder %s559, 0
      %s565 = scalar_select %p564, %s559, 0
      %s566 = sadd.s32 %s565, %s563
      %s567 = smul.addr %s561, 2
      %s568 = sadd.s32 %s566, %s567
      %s569 = smul.addr %s568, 8
      %s570 = scalar_lea.vmem %s4, %s569
      %s571 = ssub.s32 %s26, 1
      %p572 = scmp.gt.s32.totalorder %s571, 0
      %s573 = scalar_select %p572, %s571, 0
      %p574 = scmp.lt.s32.totalorder %s24, 1
      %s575 = scalar_select %p574, %s24, 1
      %p576 = scmp.lt.s32.totalorder %s25, 1
      %s577 = scalar_select %p576, %s25, 1
      %s578 = smul.addr %s575, 2
      %s579 = sadd.s32 %s577, %s578
      %s580 = smul.addr %s579, 8
      %s581 = scalar_lea.vmem %s8, %s580
      %p582 = scmp.eq.s32.totalorder %s26, 0
      // Predicated region
      $region53: #{mmdit_forward.21} parent=51 // pred_check
        %p583 = pneg %p582
      $region54: #{mmdit_forward.21} parent=51 // pred_check_branch
        %585 = sbr.rel (%p583) target = $region56
      $region55: #{mmdit_forward.21} parent=51 // pred_region
        %v586 = vld [vmem:[%s509] sm:$0xff]
        %v587 = vmul.f32 %v586, %v586
        %vm588 = vcmask 130048
        %v589 = vsel %vm588, %v587, 0.0
        %590 = vadd.xlane.f32.xlu0 %v589
        %v591 = vpop.xlane.xlu0 %590
        %v592 = vrcp.pop 16.0
        %v593 = vmul.f32 %v591, %v592
        %v594 = vadd.f32 %v593, 1e-06
        %v595 = vrsqrt.pop %v594
        %v596 = vmul.f32 %v586, %v595
        %v597 = vld [vmem:[%s5] sm:$0x1]
        %v599 = vlaneseq
        %v600 = vshrl.u32 %v599, 7
        %v601 = vsub.s32 0, %v600
        %v602 = vrot.slane %v597, %v601
        %v604 = vmul.f32 %v596, %v602
        %v605 = vmul.f32 %v604, 0.25
        %606 = vst.msk [vmem:[#allocation2] sm:$0xff] %vm588, %v605
        %vm607 = vcmask 7168
        %608 = vst.msk [vmem:[#allocation3] sm:$0xff] %vm607, -inf
        %609 = vst.msk [vmem:[#allocation4] sm:$0xff] %vm607, 0.0
        %610 = vst.msk [vmem:[#allocation5] sm:$0xff] %vm588, 0.0
      $region56: #{mmdit_forward.21} parent=51 // pred_fallthru
        _
      %p611 = scmp.lt.s32.totalorder %s26, 1
      // Predicated region
      $region57: #{mmdit_forward.21} parent=51 // pred_check
        %p612 = pneg %p611
      $region58: #{mmdit_forward.21} parent=51 // pred_check_branch
        %614 = sbr.rel (%p612) target = $region60
      $region59: #{mmdit_forward.21} parent=51 // pred_region
        %v615 = vld [vmem:[%s522] sm:$0xff]
        %v616 = vmul.f32 %v615, %v615
        %vm617 = vcmask 130048
        %v618 = vsel %vm617, %v616, 0.0
        %619 = vadd.xlane.f32.xlu0 %v618
        %v620 = vpop.xlane.xlu0 %619
        %v621 = vrcp.pop 16.0
        %v622 = vmul.f32 %v620, %v621
        %v623 = vadd.f32 %v622, 1e-06
        %v624 = vrsqrt.pop %v623
        %v625 = vmul.f32 %v615, %v624
        %v626 = vld [vmem:[%s6] sm:$0x1]
        %v628 = vlaneseq
        %v629 = vshrl.u32 %v628, 7
        %v630 = vsub.s32 0, %v629
        %v631 = vrot.slane %v626, %v630
        %v633 = vmul.f32 %v625, %v631
        %v634 = vld [vmem:[#allocation2] sm:$0xff]
        %v636 = vsel %vm617, %v634, 0
        %v639 = vsel %vm617, %v633, 0
        %641 = vmatprep.subr.mxu0 0.0
        %642 = vmatpush1.xpose.msra.mxu0 %v639
        %643 = vmatprep.subr.mxu0 0.0
        %644 = vmatpush1.xpose.msra.mxu0 0.0
        %645 = vmatprep.subr.mxu0 0.0
        %646 = vmatpush1.xpose.msra.mxu0 0.0
        %647 = vmatprep.subr.mxu0 0.0
        %648 = vmatpush1.xpose.msra.mxu0 0.0
        %649 = vmatprep.subr.mxu0 0.0
        %650 = vmatpush1.xpose.msra.mxu0 0.0
        %651 = vmatprep.subr.mxu0 0.0
        %652 = vmatpush1.xpose.msra.mxu0 0.0
        %653 = vmatprep.subr.mxu0 0.0
        %654 = vmatpush1.xpose.msra.mxu0 0.0
        %655 = vmatprep.subr.mxu0 0.0
        %656 = vmatpush1.xpose.msra.mxu0 0.0
        %657 = vmatprep.subr.mxu0 0.0
        %658 = vmatpush1.xpose.msra.mxu0 0.0
        %659 = vmatprep.subr.mxu0 0.0
        %660 = vmatpush1.xpose.msra.mxu0 0.0
        %661 = vmatprep.subr.mxu0 0.0
        %662 = vmatpush1.xpose.msra.mxu0 0.0
        %663 = vmatprep.subr.mxu0 0.0
        %664 = vmatpush1.xpose.msra.mxu0 0.0
        %665 = vmatprep.subr.mxu0 0.0
        %666 = vmatpush1.xpose.msra.mxu0 0.0
        %667 = vmatprep.subr.mxu0 0.0
        %668 = vmatpush1.xpose.msra.mxu0 0.0
        %669 = vmatprep.subr.mxu0 0.0
        %670 = vmatpush1.xpose.msra.mxu0 0.0
        %671 = vmatprep.subr.mxu0 0.0
        %672 = vmatpush1.xpose.msra.mxu0 0.0
        %673 = vmatprep.subr.mxu0 0.0
        %674 = vmatpush1.xpose.msra.mxu0 0.0
        %675 = vmatprep.subr.mxu0 0.0
        %676 = vmatpush1.xpose.msra.mxu0 0.0
        %677 = vmatprep.subr.mxu0 0.0
        %678 = vmatpush1.xpose.msra.mxu0 0.0
        %679 = vmatprep.subr.mxu0 0.0
        %680 = vmatpush1.xpose.msra.mxu0 0.0
        %681 = vmatprep.subr.mxu0 0.0
        %682 = vmatpush1.xpose.msra.mxu0 0.0
        %683 = vmatprep.subr.mxu0 0.0
        %684 = vmatpush1.xpose.msra.mxu0 0.0
        %685 = vmatprep.subr.mxu0 0.0
        %686 = vmatpush1.xpose.msra.mxu0 0.0
        %687 = vmatprep.subr.mxu0 0.0
        %688 = vmatpush1.xpose.msra.mxu0 0.0
        %689 = vmatprep.subr.mxu0 0.0
        %690 = vmatpush1.xpose.msra.mxu0 0.0
        %691 = vmatprep.subr.mxu0 0.0
        %692 = vmatpush1.xpose.msra.mxu0 0.0
        %693 = vmatprep.subr.mxu0 0.0
        %694 = vmatpush1.xpose.msra.mxu0 0.0
        %695 = vmatprep.subr.mxu0 0.0
        %696 = vmatpush1.xpose.msra.mxu0 0.0
        %697 = vmatprep.subr.mxu0 0.0
        %698 = vmatpush1.xpose.msra.mxu0 0.0
        %699 = vmatprep.subr.mxu0 0.0
        %700 = vmatpush1.xpose.msra.mxu0 0.0
        %701 = vmatprep.subr.mxu0 0.0
        %702 = vmatpush1.xpose.msra.mxu0 0.0
        %703 = vmatprep.subr.mxu0 0.0
        %704 = vmatpush1.xpose.msra.mxu0 0.0
        %705 = vmatprep.mubr.f32.mxu0 0.0
        %706 = vmatmul.mubr.f32.gmra.mrb[0].mxu0 %v636
        %v707 = vpop.f32.mrb[0].mxu0
        %v708 = vadd.f32 0.0, %v707
        %v709 = vpop.f32.mrb[0].mxu0
        %710 = vdwg.mxu0
        %v711 = vld [vmem:[#allocation3] sm:$0xff]
        %vm712 = vcmask 64512
        %v713 = vsel %vm712, %v708, -inf
        %714 = vmax.xlane.f32.xlu0 %v713
        %v715 = vpop.xlane.xlu0 %714
        %v716 = vmax.f32 %v711, %v715
        %v717 = vsub.f32 %v711, %v716
        %v718 = vmul.f32 %v717, 1.442695
        %v719 = vpow.pop %v718
        %721 = vset.pattern.permute.xlu0 0
        %722 = vperm.xlu0 %721, %v716
        %v723 = vpop.permute.xlu0 %722
        %v725 = vsub.f32 %v708, %v723
        %v726 = vmul.f32 %v725, 1.442695
        %v727 = vpow.pop %v726
        %v728 = vld [vmem:[#allocation4] sm:$0xff]
        %v729 = vmul.f32 %v719, %v728
        %v730 = vsel %vm712, %v727, 0.0
        %731 = vadd.xlane.f32.xlu0 %v730
        %v732 = vpop.xlane.xlu0 %731
        %v733 = vadd.f32 %v729, %v732
        %vm734 = vcmask 7168
        %735 = vst.msk [vmem:[#allocation4] sm:$0xff] %vm734, %v733
        %v736 = vld [vmem:[#allocation5] sm:$0xff]
        %738 = vset.pattern.permute.xlu0 0
        %739 = vperm.xlu0 %738, %v719
        %v740 = vpop.permute.xlu0 %739
        %v742 = vmul.f32 %v740, %v736
        %v743 = vld [vmem:[%s537] sm:$0xff]
        %v745 = vsel %vm712, %v727, 0
        %747 = vmatprep.subr.mxu0 0.0
        %748 = vmatpush1.msra.mxu0 %v743
        %749 = vmatprep.subr.mxu0 0.0
        %750 = vmatpush1.msra.mxu0 0.0
        %751 = vmatprep.subr.mxu0 0.0
        %752 = vmatpush1.msra.mxu0 0.0
        %753 = vmatprep.subr.mxu0 0.0
        %754 = vmatpush1.msra.mxu0 0.0
        %755 = vmatprep.subr.mxu0 0.0
        %756 = vmatpush1.msra.mxu0 0.0
        %757 = vmatprep.subr.mxu0 0.0
        %758 = vmatpush1.msra.mxu0 0.0
        %759 = vmatprep.subr.mxu0 0.0
        %760 = vmatpush1.msra.mxu0 0.0
        %761 = vmatprep.subr.mxu0 0.0
        %762 = vmatpush1.msra.mxu0 0.0
        %763 = vmatprep.subr.mxu0 0.0
        %764 = vmatpush1.msra.mxu0 0.0
        %765 = vmatprep.subr.mxu0 0.0
        %766 = vmatpush1.msra.mxu0 0.0
        %767 = vmatprep.subr.mxu0 0.0
        %768 = vmatpush1.msra.mxu0 0.0
        %769 = vmatprep.subr.mxu0 0.0
        %770 = vmatpush1.msra.mxu0 0.0
        %771 = vmatprep.subr.mxu0 0.0
        %772 = vmatpush1.msra.mxu0 0.0
        %773 = vmatprep.subr.mxu0 0.0
        %774 = vmatpush1.msra.mxu0 0.0
        %775 = vmatprep.subr.mxu0 0.0
        %776 = vmatpush1.msra.mxu0 0.0
        %777 = vmatprep.subr.mxu0 0.0
        %778 = vmatpush1.msra.mxu0 0.0
        %779 = vmatprep.subr.mxu0 0.0
        %780 = vmatpush1.msra.mxu0 0.0
        %781 = vmatprep.subr.mxu0 0.0
        %782 = vmatpush1.msra.mxu0 0.0
        %783 = vmatprep.subr.mxu0 0.0
        %784 = vmatpush1.msra.mxu0 0.0
        %785 = vmatprep.subr.mxu0 0.0
        %786 = vmatpush1.msra.mxu0 0.0
        %787 = vmatprep.subr.mxu0 0.0
        %788 = vmatpush1.msra.mxu0 0.0
        %789 = vmatprep.subr.mxu0 0.0
        %790 = vmatpush1.msra.mxu0 0.0
        %791 = vmatprep.subr.mxu0 0.0
        %792 = vmatpush1.msra.mxu0 0.0
        %793 = vmatprep.subr.mxu0 0.0
        %794 = vmatpush1.msra.mxu0 0.0
        %795 = vmatprep.subr.mxu0 0.0
        %796 = vmatpush1.msra.mxu0 0.0
        %797 = vmatprep.subr.mxu0 0.0
        %798 = vmatpush1.msra.mxu0 0.0
        %799 = vmatprep.subr.mxu0 0.0
        %800 = vmatpush1.msra.mxu0 0.0
        %801 = vmatprep.subr.mxu0 0.0
        %802 = vmatpush1.msra.mxu0 0.0
        %803 = vmatprep.subr.mxu0 0.0
        %804 = vmatpush1.msra.mxu0 0.0
        %805 = vmatprep.subr.mxu0 0.0
        %806 = vmatpush1.msra.mxu0 0.0
        %807 = vmatprep.subr.mxu0 0.0
        %808 = vmatpush1.msra.mxu0 0.0
        %809 = vmatprep.subr.mxu0 0.0
        %810 = vmatpush1.msra.mxu0 0.0
        %811 = vmatprep.mubr.f32.mxu0 0.0
        %812 = vmatmul.mubr.f32.gmra.mrb[0].mxu0 %v745
        %v813 = vpop.f32.mrb[0].mxu0
        %v814 = vadd.f32 0.0, %v813
        %v815 = vpop.f32.mrb[0].mxu0
        %816 = vdwg.mxu0
        %v817 = vadd.f32 %v742, %v814
        %818 = vst.msk [vmem:[#allocation5] sm:$0xff] %vm617, %v817
        %819 = vst.msk [vmem:[#allocation3] sm:$0xff] %vm734, %v716
      $region60: #{mmdit_forward.21} parent=51 // pred_fallthru
        _
      %p820 = scmp.ge.s32.totalorder %s26, 1
      // Predicated region
      $region61: #{mmdit_forward.21} parent=51 // pred_check
        %p821 = pneg %p820
      $region62: #{mmdit_forward.21} parent=51 // pred_check_branch
        %823 = sbr.rel (%p821) target = $region64
      $region63: #{mmdit_forward.21} parent=51 // pred_region
        %v824 = vld [vmem:[%s553] sm:$0xff]
        %v825 = vmul.f32 %v824, %v824
        %vm826 = vcmask 130048
        %v827 = vsel %vm826, %v825, 0.0
        %828 = vadd.xlane.f32.xlu0 %v827
        %v829 = vpop.xlane.xlu0 %828
        %v830 = vrcp.pop 16.0
        %v831 = vmul.f32 %v829, %v830
        %v832 = vadd.f32 %v831, 1e-06
        %v833 = vrsqrt.pop %v832
        %v834 = vmul.f32 %v824, %v833
        %v835 = vld [vmem:[%s7] sm:$0x1]
        %v837 = vlaneseq
        %v838 = vshrl.u32 %v837, 7
        %v839 = vsub.s32 0, %v838
        %v840 = vrot.slane %v835, %v839
        %v842 = vmul.f32 %v834, %v840
        %v843 = vld [vmem:[#allocation2] sm:$0xff]
        %v845 = vsel %vm826, %v843, 0
        %v848 = vsel %vm826, %v842, 0
        %850 = vmatprep.subr.mxu0 0.0
        %851 = vmatpush1.xpose.msra.mxu0 %v848
        %852 = vmatprep.subr.mxu0 0.0
        %853 = vmatpush1.xpose.msra.mxu0 0.0
        %854 = vmatprep.subr.mxu0 0.0
        %855 = vmatpush1.xpose.msra.mxu0 0.0
        %856 = vmatprep.subr.mxu0 0.0
        %857 = vmatpush1.xpose.msra.mxu0 0.0
        %858 = vmatprep.subr.mxu0 0.0
        %859 = vmatpush1.xpose.msra.mxu0 0.0
        %860 = vmatprep.subr.mxu0 0.0
        %861 = vmatpush1.xpose.msra.mxu0 0.0
        %862 = vmatprep.subr.mxu0 0.0
        %863 = vmatpush1.xpose.msra.mxu0 0.0
        %864 = vmatprep.subr.mxu0 0.0
        %865 = vmatpush1.xpose.msra.mxu0 0.0
        %866 = vmatprep.subr.mxu0 0.0
        %867 = vmatpush1.xpose.msra.mxu0 0.0
        %868 = vmatprep.subr.mxu0 0.0
        %869 = vmatpush1.xpose.msra.mxu0 0.0
        %870 = vmatprep.subr.mxu0 0.0
        %871 = vmatpush1.xpose.msra.mxu0 0.0
        %872 = vmatprep.subr.mxu0 0.0
        %873 = vmatpush1.xpose.msra.mxu0 0.0
        %874 = vmatprep.subr.mxu0 0.0
        %875 = vmatpush1.xpose.msra.mxu0 0.0
        %876 = vmatprep.subr.mxu0 0.0
        %877 = vmatpush1.xpose.msra.mxu0 0.0
        %878 = vmatprep.subr.mxu0 0.0
        %879 = vmatpush1.xpose.msra.mxu0 0.0
        %880 = vmatprep.subr.mxu0 0.0
        %881 = vmatpush1.xpose.msra.mxu0 0.0
        %882 = vmatprep.subr.mxu0 0.0
        %883 = vmatpush1.xpose.msra.mxu0 0.0
        %884 = vmatprep.subr.mxu0 0.0
        %885 = vmatpush1.xpose.msra.mxu0 0.0
        %886 = vmatprep.subr.mxu0 0.0
        %887 = vmatpush1.xpose.msra.mxu0 0.0
        %888 = vmatprep.subr.mxu0 0.0
        %889 = vmatpush1.xpose.msra.mxu0 0.0
        %890 = vmatprep.subr.mxu0 0.0
        %891 = vmatpush1.xpose.msra.mxu0 0.0
        %892 = vmatprep.subr.mxu0 0.0
        %893 = vmatpush1.xpose.msra.mxu0 0.0
        %894 = vmatprep.subr.mxu0 0.0
        %895 = vmatpush1.xpose.msra.mxu0 0.0
        %896 = vmatprep.subr.mxu0 0.0
        %897 = vmatpush1.xpose.msra.mxu0 0.0
        %898 = vmatprep.subr.mxu0 0.0
        %899 = vmatpush1.xpose.msra.mxu0 0.0
        %900 = vmatprep.subr.mxu0 0.0
        %901 = vmatpush1.xpose.msra.mxu0 0.0
        %902 = vmatprep.subr.mxu0 0.0
        %903 = vmatpush1.xpose.msra.mxu0 0.0
        %904 = vmatprep.subr.mxu0 0.0
        %905 = vmatpush1.xpose.msra.mxu0 0.0
        %906 = vmatprep.subr.mxu0 0.0
        %907 = vmatpush1.xpose.msra.mxu0 0.0
        %908 = vmatprep.subr.mxu0 0.0
        %909 = vmatpush1.xpose.msra.mxu0 0.0
        %910 = vmatprep.subr.mxu0 0.0
        %911 = vmatpush1.xpose.msra.mxu0 0.0
        %912 = vmatprep.subr.mxu0 0.0
        %913 = vmatpush1.xpose.msra.mxu0 0.0
        %914 = vmatprep.mubr.f32.mxu0 0.0
        %915 = vmatmul.mubr.f32.gmra.mrb[0].mxu0 %v845
        %v916 = vpop.f32.mrb[0].mxu0
        %v917 = vadd.f32 0.0, %v916
        %v918 = vpop.f32.mrb[0].mxu0
        %919 = vdwg.mxu0
        %v920 = vld [vmem:[#allocation3] sm:$0xff]
        %vm921 = vcmask 64512
        %v922 = vsel %vm921, %v917, -inf
        %923 = vmax.xlane.f32.xlu0 %v922
        %v924 = vpop.xlane.xlu0 %923
        %v925 = vmax.f32 %v920, %v924
        %v926 = vsub.f32 %v920, %v925
        %v927 = vmul.f32 %v926, 1.442695
        %v928 = vpow.pop %v927
        %930 = vset.pattern.permute.xlu0 0
        %931 = vperm.xlu0 %930, %v925
        %v932 = vpop.permute.xlu0 %931
        %v934 = vsub.f32 %v917, %v932
        %v935 = vmul.f32 %v934, 1.442695
        %v936 = vpow.pop %v935
        %v937 = vld [vmem:[#allocation4] sm:$0xff]
        %v938 = vmul.f32 %v928, %v937
        %v939 = vsel %vm921, %v936, 0.0
        %940 = vadd.xlane.f32.xlu0 %v939
        %v941 = vpop.xlane.xlu0 %940
        %v942 = vadd.f32 %v938, %v941
        %vm943 = vcmask 7168
        %944 = vst.msk [vmem:[#allocation4] sm:$0xff] %vm943, %v942
        %v945 = vld [vmem:[#allocation5] sm:$0xff]
        %947 = vset.pattern.permute.xlu0 0
        %948 = vperm.xlu0 %947, %v928
        %v949 = vpop.permute.xlu0 %948
        %v951 = vmul.f32 %v949, %v945
        %v952 = vld [vmem:[%s570] sm:$0xff]
        %v954 = vsel %vm921, %v936, 0
        %956 = vmatprep.subr.mxu0 0.0
        %957 = vmatpush1.msra.mxu0 %v952
        %958 = vmatprep.subr.mxu0 0.0
        %959 = vmatpush1.msra.mxu0 0.0
        %960 = vmatprep.subr.mxu0 0.0
        %961 = vmatpush1.msra.mxu0 0.0
        %962 = vmatprep.subr.mxu0 0.0
        %963 = vmatpush1.msra.mxu0 0.0
        %964 = vmatprep.subr.mxu0 0.0
        %965 = vmatpush1.msra.mxu0 0.0
        %966 = vmatprep.subr.mxu0 0.0
        %967 = vmatpush1.msra.mxu0 0.0
        %968 = vmatprep.subr.mxu0 0.0
        %969 = vmatpush1.msra.mxu0 0.0
        %970 = vmatprep.subr.mxu0 0.0
        %971 = vmatpush1.msra.mxu0 0.0
        %972 = vmatprep.subr.mxu0 0.0
        %973 = vmatpush1.msra.mxu0 0.0
        %974 = vmatprep.subr.mxu0 0.0
        %975 = vmatpush1.msra.mxu0 0.0
        %976 = vmatprep.subr.mxu0 0.0
        %977 = vmatpush1.msra.mxu0 0.0
        %978 = vmatprep.subr.mxu0 0.0
        %979 = vmatpush1.msra.mxu0 0.0
        %980 = vmatprep.subr.mxu0 0.0
        %981 = vmatpush1.msra.mxu0 0.0
        %982 = vmatprep.subr.mxu0 0.0
        %983 = vmatpush1.msra.mxu0 0.0
        %984 = vmatprep.subr.mxu0 0.0
        %985 = vmatpush1.msra.mxu0 0.0
        %986 = vmatprep.subr.mxu0 0.0
        %987 = vmatpush1.msra.mxu0 0.0
        %988 = vmatprep.subr.mxu0 0.0
        %989 = vmatpush1.msra.mxu0 0.0
        %990 = vmatprep.subr.mxu0 0.0
        %991 = vmatpush1.msra.mxu0 0.0
        %992 = vmatprep.subr.mxu0 0.0
        %993 = vmatpush1.msra.mxu0 0.0
        %994 = vmatprep.subr.mxu0 0.0
        %995 = vmatpush1.msra.mxu0 0.0
        %996 = vmatprep.subr.mxu0 0.0
        %997 = vmatpush1.msra.mxu0 0.0
        %998 = vmatprep.subr.mxu0 0.0
        %999 = vmatpush1.msra.mxu0 0.0
        %1000 = vmatprep.subr.mxu0 0.0
        %1001 = vmatpush1.msra.mxu0 0.0
        %1002 = vmatprep.subr.mxu0 0.0
        %1003 = vmatpush1.msra.mxu0 0.0
        %1004 = vmatprep.subr.mxu0 0.0
        %1005 = vmatpush1.msra.mxu0 0.0
        %1006 = vmatprep.subr.mxu0 0.0
        %1007 = vmatpush1.msra.mxu0 0.0
        %1008 = vmatprep.subr.mxu0 0.0
        %1009 = vmatpush1.msra.mxu0 0.0
        %1010 = vmatprep.subr.mxu0 0.0
        %1011 = vmatpush1.msra.mxu0 0.0
        %1012 = vmatprep.subr.mxu0 0.0
        %1013 = vmatpush1.msra.mxu0 0.0
        %1014 = vmatprep.subr.mxu0 0.0
        %1015 = vmatpush1.msra.mxu0 0.0
        %1016 = vmatprep.subr.mxu0 0.0
        %1017 = vmatpush1.msra.mxu0 0.0
        %1018 = vmatprep.subr.mxu0 0.0
        %1019 = vmatpush1.msra.mxu0 0.0
        %1020 = vmatprep.mubr.f32.mxu0 0.0
        %1021 = vmatmul.mubr.f32.gmra.mrb[0].mxu0 %v954
        %v1022 = vpop.f32.mrb[0].mxu0
        %v1023 = vadd.f32 0.0, %v1022
        %v1024 = vpop.f32.mrb[0].mxu0
        %1025 = vdwg.mxu0
        %v1026 = vadd.f32 %v951, %v1023
        %1027 = vst.msk [vmem:[#allocation5] sm:$0xff] %vm826, %v1026
        %1028 = vst.msk [vmem:[#allocation3] sm:$0xff] %vm943, %v925
      $region64: #{mmdit_forward.21} parent=51 // pred_fallthru
        _
      %p1029 = scmp.eq.s32.totalorder %s26, 1
      // Predicated region
      $region65: #{mmdit_forward.21} parent=51 // pred_check
        %p1030 = pneg %p1029
      $region66: #{mmdit_forward.21} parent=51 // pred_check_branch
        %1032 = sbr.rel (%p1030) target = $region68
      $region67: #{mmdit_forward.21} parent=51 // pred_region
        %v1033 = vld [vmem:[#allocation5] sm:$0xff]
        %v1034 = vld [vmem:[#allocation4] sm:$0xff]
        %v1035 = vrcp.pop %v1034
        %1037 = vset.pattern.permute.xlu0 0
        %1038 = vperm.xlu0 %1037, %v1035
        %v1039 = vpop.permute.xlu0 %1038
        %v1041 = vmul.f32 %v1033, %v1039
        %vm1042 = vcmask 130048
        %1043 = vst.msk [vmem:[%s581] sm:$0xff] %vm1042, %v1041
      $region68: #{mmdit_forward.21} parent=51 // pred_fallthru
        _
      %p1044 = scmp.lt.s32.totalorder %s24, 1
      %s1045 = scalar_select %p1044, %s24, 1
      %p1046 = scmp.lt.s32.totalorder %s25, 1
      %s1047 = scalar_select %p1046, %s25, 1
      %s1048 = smul.addr %s1045, 2
      %s1049 = sadd.s32 %s1047, %s1048
      %s1050 = smul.addr %s1049, 8
      %s1051 = scalar_lea.vmem %s8, %s1050
      // Predicated region
      $region69: #{mmdit_forward.21} parent=51 // pred_check
        %p1052 = pneg %p289
      $region70: #{mmdit_forward.21} parent=51 // pred_check_branch
        %1054 = sbr.rel (%p1052) target = $region72
      $region71: #{mmdit_forward.21} parent=51 // pred_region
        _
      $region72: #{mmdit_forward.21} parent=51 // pred_fallthru
        _
    $region52: #{mmdit_forward.21} parent=5 // pred_fallthru
      _
    %p1055 = scmp.le.s32.totalorder 2, %s14
    // Predicated region
    $region73: #{mmdit_forward.21} parent=5 // pred_check
      %p1056 = pneg %p1055
    $region74: #{mmdit_forward.21} parent=5 // pred_check_branch
      %1058 = sbr.rel (%p1056) target = $region76
    $region75: #{mmdit_forward.21} parent=5 // pred_region
      %s1059 = ssub.s32 %s14, 2
      // Predicated region
      $region77: #{mmdit_forward.21} parent=75 // pred_check
        %p1060 = pneg %p295
      $region78: #{mmdit_forward.21} parent=75 // pred_check_branch
        %1062 = sbr.rel (%p1060) target = $region80
      $region79: #{mmdit_forward.21} parent=75 // pred_region
        %p1063 = scmp.lt.s32.totalorder %s27, 1
        %s1064 = scalar_select %p1063, %s27, 1
        %p1065 = scmp.lt.s32.totalorder %s28, 1
        %s1066 = scalar_select %p1065, %s28, 1
        %s1067 = smul.addr %s1064, 2
        %s1068 = sadd.s32 %s1066, %s1067
        %s1069 = smul.addr %s1068, 8
        %s1070 = scalar_lea.vmem %s8, %s1069
      $region80: #{mmdit_forward.21} parent=75 // pred_fallthru
        _
    $region76: #{mmdit_forward.21} parent=5 // pred_fallthru
      _
  $region6: #{mmdit_forward.21} parent=0 // loop_footer
    %s18 = sadd.s32 1, %s14
  $region7: #{mmdit_forward.21} parent=0 // loop_footer_branch
    %13 = sbr.rel target = $region3
  $region8: #{mmdit_forward.21} parent=0 // loop_exit
    _

</llo_original>
